<compile_context>
chip_gen: v7x
topology: tpu7x:2x2x1
jax: 0.10.0
libtpu: 0.0.40
codegen_flags: <defaults>
</compile_context>

<pallas_src>
import functools

import jax
import jax.numpy as jnp
from jax.experimental import pallas as pl
from jax.experimental.pallas import tpu as pltpu

NUM_HEADS = 8
LN_EPS = 1e-5


def _layernorm(x, gamma, beta):
    # x: (M, K), gamma/beta: (1, K). Biased variance (matches PyTorch LayerNorm).
    mean = jnp.mean(x, axis=-1, keepdims=True)
    var = jnp.mean((x - mean) ** 2, axis=-1, keepdims=True)
    inv = jax.lax.rsqrt(var + LN_EPS)
    return (x - mean) * inv * gamma + beta


def transformer_block_kernel(
    x_ref, wqkv_ref, wu_ref, bu_ref,
    g1_ref, b1_ref, w1_ref, bm1_ref, w2_ref, bm2_ref, g2_ref, b2_ref,
    o_ref, *, k, num_heads, t, b_block,
):
    hk = num_heads * k
    inv_sqrt_k = 1.0 / (k ** 0.5)

    x2 = x_ref[...]                                   # (B_blk*T, K), batch folded into rows

    # ---- fused QKV projection: single MXU-wide matmul (M, K) @ (K, 3*H*K) ----
    qkv = jnp.dot(x2, wqkv_ref[...], preferred_element_type=jnp.float32)
    q_all = qkv[:, 0 * hk:1 * hk]                     # (M, H*K)
    k_all = qkv[:, 1 * hk:2 * hk]
    v_all = qkv[:, 2 * hk:3 * hk]

    bu = bu_ref[...]                                  # (1, K)

    # ---- per (batch, head) attention; unify projection accumulated per head ----
    per_batch = []
    for b in range(b_block):                          # static unroll (tiny T x T attention)
        r0 = b * t
        q_b = q_all[r0:r0 + t, :]
        k_b = k_all[r0:r0 + t, :]
        v_b = v_all[r0:r0 + t, :]
        acc = jnp.zeros((t, k), jnp.float32)
        for h in range(num_heads):                    # static unroll over heads
            c0 = h * k
            qh = q_b[:, c0:c0 + k]
            kh = k_b[:, c0:c0 + k]
            vh = v_b[:, c0:c0 + k]
            # Single-sided scaling: (q k^T)/sqrt(K) == (q/K^0.25)(k/K^0.25)^T.
            s = jnp.dot(qh, kh.T, preferred_element_type=jnp.float32) * inv_sqrt_k
            s = s - jnp.max(s, axis=-1, keepdims=True)
            e = jnp.exp(s)
            p = e * pl.reciprocal(jnp.sum(e, axis=-1, keepdims=True), approx=True)
            oh = jnp.dot(p, vh, preferred_element_type=jnp.float32)      # (T, K)
            # Head-major Wu: contiguous ref view, accumulate -> no lane-offset concat.
            acc = acc + jnp.dot(oh, wu_ref[h], preferred_element_type=jnp.float32)
        per_batch.append(acc + bu)
    att = jnp.concatenate(per_batch, axis=0) if b_block > 1 else per_batch[0]  # (M, K)

    # ---- residual + LN1, MLP, residual + LN2 over all rows at once ----
    y1 = _layernorm(x2 + att, g1_ref[...], b1_ref[...])                   # (M, K)
    h1 = jnp.dot(y1, w1_ref[...], preferred_element_type=jnp.float32) + bm1_ref[...]
    h1 = jnp.maximum(h1, 0.0)
    mlp = jnp.dot(h1, w2_ref[...], preferred_element_type=jnp.float32) + bm2_ref[...]
    o_ref[...] = _layernorm(y1 + mlp, g2_ref[...], b2_ref[...])


def transformer_block(x, params, *, num_heads=NUM_HEADS, b_block=None):
    B, T, K = x.shape
    HK = num_heads * K
    wq, wk, wv, wu, bu, g1, b1, w1, bm1, w2, bm2, g2, b2 = params

    # One-time weight re-layouts (outside the kernel).
    wqkv = jnp.concatenate([wq, wk, wv], axis=1)      # (K, 3*H*K) fused projection
    wu3 = wu.reshape(num_heads, K, K)                 # (H, K, K) head-major unify weight

    if b_block is None:
        b_block = B
    assert B % b_block == 0, "b_block must divide B"
    m_blk = b_block * T

    x2d = x.reshape(B * T, K)                         # fold batch into the matmul M dim

    kernel = functools.partial(
        transformer_block_kernel, k=K, num_heads=num_heads, t=T, b_block=b_block)

    def const(shape):
        n = len(shape)
        return pl.BlockSpec(shape, lambda i, n=n: (0,) * n)

    # Advisory cost estimate for XLA scheduling around the custom call.
    M = B * T
    flops = (2 * M * K * 3 * HK                       # fused QKV projection
             + B * num_heads * 4 * T * T * K          # scores + attention @ V
             + 2 * M * HK * K                         # unify projection
             + 2 * M * K * (4 * K) * 2)               # MLP (two matmuls)
    transcendentals = B * num_heads * T * T + 2 * M   # softmax exp + LN rsqrt
    bytes_accessed = 4 * (2 * x.size + wqkv.size + wu3.size + bu.size + g1.size
                          + b1.size + w1.size + bm1.size + w2.size + bm2.size
                          + g2.size + b2.size)

    out2d = pl.pallas_call(
        kernel,
        out_shape=jax.ShapeDtypeStruct((B * T, K), jnp.float32),
        grid=(B // b_block,),
        in_specs=[
            pl.BlockSpec((m_blk, K), lambda i: (i, 0)),   # x rows (batch folded)
            const((K, 3 * HK)),                           # fused Wqkv
            const((num_heads, K, K)),                     # head-major Wu
            const((1, K)),                                # bu
            const((1, K)), const((1, K)),                 # ln1 gamma / beta
            const((K, 4 * K)), const((1, 4 * K)),         # mlp W1 / b1
            const((4 * K, K)), const((1, K)),             # mlp W2 / b2
            const((1, K)), const((1, K)),                 # ln2 gamma / beta
        ],
        out_specs=pl.BlockSpec((m_blk, K), lambda i: (i, 0)),
        compiler_params=pltpu.CompilerParams(
            dimension_semantics=("parallel",)),
        cost_estimate=pl.CostEstimate(
            flops=flops, transcendentals=transcendentals,
            bytes_accessed=bytes_accessed),
    )(x2d, wqkv, wu3, bu, g1, b1, w1, bm1, w2, bm2, g2, b2)
    return out2d.reshape(B, T, K)


def make_params(key, k, num_heads):
    ks = jax.random.split(key, 8)
    u = lambda kk, shape, fan_in: jax.random.uniform(
        kk, shape, jnp.float32, -1.0 / jnp.sqrt(fan_in), 1.0 / jnp.sqrt(fan_in))
    wq = u(ks[0], (k, num_heads * k), k)
    wk = u(ks[1], (k, num_heads * k), k)
    wv = u(ks[2], (k, num_heads * k), k)
    wu = u(ks[3], (num_heads * k, k), num_heads * k)
    bu = u(ks[4], (1, k), num_heads * k)
    g1 = jnp.ones((1, k), jnp.float32)
    b1 = jnp.zeros((1, k), jnp.float32)
    w1 = u(ks[5], (k, 4 * k), k)
    bm1 = u(ks[6], (1, 4 * k), k)
    w2 = u(ks[7], (4 * k, k), 4 * k)
    bm2 = jnp.zeros((1, k), jnp.float32)
    g2 = jnp.ones((1, k), jnp.float32)
    b2 = jnp.zeros((1, k), jnp.float32)
    return (wq, wk, wv, wu, bu, g1, b1, w1, bm1, w2, bm2, g2, b2)


def reference(x, params, *, num_heads=NUM_HEADS):
    # Pure-JAX reference mirroring the PyTorch forward.
    wq, wk, wv, wu, bu, g1, b1, w1, bm1, w2, bm2, g2, b2 = params
    B, T, K = x.shape
    scale = K ** 0.25

    def proj(w):
        y = jnp.einsum('btk,kd->btd', x, w).reshape(B, T, num_heads, K)
        return jnp.transpose(y, (0, 2, 1, 3))         # (B, H, T, K)

    q, kk, v = proj(wq) / scale, proj(wk) / scale, proj(wv)
    raw = jnp.einsum('bhtk,bhsk->bhts', q, kk)
    w = jax.nn.softmax(raw, axis=-1)
    out = jnp.einsum('bhts,bhsk->bhtk', w, v)
    out = jnp.transpose(out, (0, 2, 1, 3)).reshape(B, T, num_heads * K)
    att = out @ wu + bu[0]

    def ln(z, g, b):
        m = z.mean(-1, keepdims=True)
        var = ((z - m) ** 2).mean(-1, keepdims=True)
        return (z - m) / jnp.sqrt(var + LN_EPS) * g[0] + b[0]

    x1 = ln(x + att, g1, b1)
    mlp = jnp.maximum(x1 @ w1 + bm1[0], 0.0) @ w2 + bm2[0]
    return ln(x1 + mlp, g2, b2)


if __name__ == "__main__":
    B, T, K = 2, 8, 32
    key = jax.random.PRNGKey(0)
    kx, kp = jax.random.split(key)
    x = jax.random.normal(kx, (B, T, K), jnp.float32)
    params = make_params(kp, K, NUM_HEADS)

    out = jax.block_until_ready(transformer_block(x, params))
    ref = reference(x, params)

    assert out.shape == (B, T, K)
    # Tolerance accounts for the approx=True (EUP vrcp) softmax reciprocal.
    assert jnp.allclose(out, ref, atol=2e-3, rtol=2e-3), "mismatch vs reference"
    print("KERNEL_OK")
</pallas_src>

<mosaic_0001>
module attributes {stable_mosaic.version = 11 : i64} {
  func.func @transformer_block_kernel(%arg0: i32, %arg1: memref<16x32xf32, #tpu.memory_space<vmem>>, %arg2: memref<32x768xf32, #tpu.memory_space<vmem>>, %arg3: memref<8x32x32xf32, #tpu.memory_space<vmem>>, %arg4: memref<1x32xf32, #tpu.memory_space<vmem>>, %arg5: memref<1x32xf32, #tpu.memory_space<vmem>>, %arg6: memref<1x32xf32, #tpu.memory_space<vmem>>, %arg7: memref<32x128xf32, #tpu.memory_space<vmem>>, %arg8: memref<1x128xf32, #tpu.memory_space<vmem>>, %arg9: memref<128x32xf32, #tpu.memory_space<vmem>>, %arg10: memref<1x32xf32, #tpu.memory_space<vmem>>, %arg11: memref<1x32xf32, #tpu.memory_space<vmem>>, %arg12: memref<1x32xf32, #tpu.memory_space<vmem>>, %arg13: memref<16x32xf32, #tpu.memory_space<vmem>>) attributes {dimension_semantics = [#tpu.dimension_semantics<parallel>], iteration_bounds = array<i64: 1>, scalar_prefetch = 0 : i64, scratch_operands = 0 : i64, tpu.core_type = #tpu.core_type<tc>, window_params = [{transform_indices = @transform_0, window_bounds = array<i64: 16, 32>}, {pipeline_mode = #tpu.pipeline_mode<synchronous>, transform_indices = @transform_1, window_bounds = array<i64: 32, 768>}, {pipeline_mode = #tpu.pipeline_mode<synchronous>, transform_indices = @transform_2, window_bounds = array<i64: 8, 32, 32>}, {pipeline_mode = #tpu.pipeline_mode<synchronous>, transform_indices = @transform_3, window_bounds = array<i64: 1, 32>}, {pipeline_mode = #tpu.pipeline_mode<synchronous>, transform_indices = @transform_4, window_bounds = array<i64: 1, 32>}, {pipeline_mode = #tpu.pipeline_mode<synchronous>, transform_indices = @transform_5, window_bounds = array<i64: 1, 32>}, {pipeline_mode = #tpu.pipeline_mode<synchronous>, transform_indices = @transform_6, window_bounds = array<i64: 32, 128>}, {pipeline_mode = #tpu.pipeline_mode<synchronous>, transform_indices = @transform_7, window_bounds = array<i64: 1, 128>}, {pipeline_mode = #tpu.pipeline_mode<synchronous>, transform_indices = @transform_8, window_bounds = array<i64: 128, 32>}, {pipeline_mode = #tpu.pipeline_mode<synchronous>, transform_indices = @transform_9, window_bounds = array<i64: 1, 32>}, {pipeline_mode = #tpu.pipeline_mode<synchronous>, transform_indices = @transform_10, window_bounds = array<i64: 1, 32>}, {pipeline_mode = #tpu.pipeline_mode<synchronous>, transform_indices = @transform_11, window_bounds = array<i64: 1, 32>}, {transform_indices = @transform_12, window_bounds = array<i64: 16, 32>}]} {
    %c0 = arith.constant 0 : index
    %c0_0 = arith.constant 0 : index
    %0 = vector.load %arg1[%c0, %c0_0] : memref<16x32xf32, #tpu.memory_space<vmem>>, vector<16x32xf32>
    %c0_1 = arith.constant 0 : index
    %c0_2 = arith.constant 0 : index
    %1 = vector.load %arg2[%c0_1, %c0_2] : memref<32x768xf32, #tpu.memory_space<vmem>>, vector<32x768xf32>
    %cst = arith.constant dense<0.000000e+00> : vector<16x768xf32>
    %2 = tpu.matmul %0, %1, %cst {dimension_numbers = #tpu.dot_dimension_numbers<[1], [0], [0], [1], [0, 0, 1, 1], [], []>} : vector<16x32xf32>, vector<32x768xf32>, vector<16x768xf32> -> vector<16x768xf32>
    %3 = vector.extract_strided_slice %2 {offsets = [0, 0], sizes = [16, 256], strides = [1, 1]} : vector<16x768xf32> to vector<16x256xf32>
    %4 = vector.extract_strided_slice %2 {offsets = [0, 256], sizes = [16, 256], strides = [1, 1]} : vector<16x768xf32> to vector<16x256xf32>
    %5 = vector.extract_strided_slice %2 {offsets = [0, 512], sizes = [16, 256], strides = [1, 1]} : vector<16x768xf32> to vector<16x256xf32>
    %c0_3 = arith.constant 0 : index
    %c0_4 = arith.constant 0 : index
    %6 = vector.load %arg4[%c0_3, %c0_4] : memref<1x32xf32, #tpu.memory_space<vmem>>, vector<1x32xf32>
    %7 = vector.extract_strided_slice %3 {offsets = [0, 0], sizes = [8, 256], strides = [1, 1]} : vector<16x256xf32> to vector<8x256xf32>
    %8 = vector.extract_strided_slice %4 {offsets = [0, 0], sizes = [8, 256], strides = [1, 1]} : vector<16x256xf32> to vector<8x256xf32>
    %9 = vector.extract_strided_slice %5 {offsets = [0, 0], sizes = [8, 256], strides = [1, 1]} : vector<16x256xf32> to vector<8x256xf32>
    %cst_5 = arith.constant 0.000000e+00 : f32
    %10 = vector.broadcast %cst_5 : f32 to vector<8x32xf32>
    %11 = vector.extract_strided_slice %7 {offsets = [0, 0], sizes = [8, 32], strides = [1, 1]} : vector<8x256xf32> to vector<8x32xf32>
    %12 = vector.extract_strided_slice %8 {offsets = [0, 0], sizes = [8, 32], strides = [1, 1]} : vector<8x256xf32> to vector<8x32xf32>
    %13 = vector.extract_strided_slice %9 {offsets = [0, 0], sizes = [8, 32], strides = [1, 1]} : vector<8x256xf32> to vector<8x32xf32>
    %14 = tpu.transpose %12, [1, 0] : vector<8x32xf32> -> vector<32x8xf32>
    %cst_6 = arith.constant dense<0.000000e+00> : vector<8x8xf32>
    %15 = tpu.matmul %11, %14, %cst_6 {dimension_numbers = #tpu.dot_dimension_numbers<[1], [0], [0], [1], [0, 0, 1, 1], [], []>} : vector<8x32xf32>, vector<32x8xf32>, vector<8x8xf32> -> vector<8x8xf32>
    %cst_7 = arith.constant 0.176776692 : f32
    %16 = vector.broadcast %cst_7 : f32 to vector<8x8xf32>
    %17 = arith.mulf %15, %16 : vector<8x8xf32>
    %cst_8 = arith.constant dense<0xFF800000> : vector<8xf32>
    %18 = vector.multi_reduction <maximumf>, %17, %cst_8 [1] : vector<8x8xf32> to vector<8xf32>
    %19 = vector.shape_cast %18 : vector<8xf32> to vector<8x1xf32>
    %20 = vector.broadcast %19 : vector<8x1xf32> to vector<8x8xf32>
    %21 = arith.subf %17, %20 : vector<8x8xf32>
    %22 = math.exp %21 : vector<8x8xf32>
    %cst_9 = arith.constant dense<0.000000e+00> : vector<8xf32>
    %23 = vector.multi_reduction <add>, %22, %cst_9 [1] : vector<8x8xf32> to vector<8xf32>
    %24 = vector.shape_cast %23 : vector<8xf32> to vector<8x1xf32>
    %25 = tpu.reciprocal %24 {approx = true} : vector<8x1xf32> -> vector<8x1xf32>
    %26 = vector.broadcast %25 : vector<8x1xf32> to vector<8x8xf32>
    %27 = arith.mulf %22, %26 : vector<8x8xf32>
    %cst_10 = arith.constant dense<0.000000e+00> : vector<8x32xf32>
    %28 = tpu.matmul %27, %13, %cst_10 {dimension_numbers = #tpu.dot_dimension_numbers<[1], [0], [0], [1], [0, 0, 1, 1], [], []>} : vector<8x8xf32>, vector<8x32xf32>, vector<8x32xf32> -> vector<8x32xf32>
    %c0_11 = arith.constant 0 : index
    %c0_12 = arith.constant 0 : index
    %c0_13 = arith.constant 0 : index
    %29 = vector.load %arg3[%c0_11, %c0_12, %c0_13] : memref<8x32x32xf32, #tpu.memory_space<vmem>>, vector<1x32x32xf32>
    %30 = vector.shape_cast %29 : vector<1x32x32xf32> to vector<32x32xf32>
    %cst_14 = arith.constant dense<0.000000e+00> : vector<8x32xf32>
    %31 = tpu.matmul %28, %30, %cst_14 {dimension_numbers = #tpu.dot_dimension_numbers<[1], [0], [0], [1], [0, 0, 1, 1], [], []>} : vector<8x32xf32>, vector<32x32xf32>, vector<8x32xf32> -> vector<8x32xf32>
    %32 = arith.addf %10, %31 : vector<8x32xf32>
    %33 = vector.extract_strided_slice %7 {offsets = [0, 32], sizes = [8, 32], strides = [1, 1]} : vector<8x256xf32> to vector<8x32xf32>
    %34 = vector.extract_strided_slice %8 {offsets = [0, 32], sizes = [8, 32], strides = [1, 1]} : vector<8x256xf32> to vector<8x32xf32>
    %35 = vector.extract_strided_slice %9 {offsets = [0, 32], sizes = [8, 32], strides = [1, 1]} : vector<8x256xf32> to vector<8x32xf32>
    %36 = tpu.transpose %34, [1, 0] : vector<8x32xf32> -> vector<32x8xf32>
    %cst_15 = arith.constant dense<0.000000e+00> : vector<8x8xf32>
    %37 = tpu.matmul %33, %36, %cst_15 {dimension_numbers = #tpu.dot_dimension_numbers<[1], [0], [0], [1], [0, 0, 1, 1], [], []>} : vector<8x32xf32>, vector<32x8xf32>, vector<8x8xf32> -> vector<8x8xf32>
    %cst_16 = arith.constant 0.176776692 : f32
    %38 = vector.broadcast %cst_16 : f32 to vector<8x8xf32>
    %39 = arith.mulf %37, %38 : vector<8x8xf32>
    %cst_17 = arith.constant dense<0xFF800000> : vector<8xf32>
    %40 = vector.multi_reduction <maximumf>, %39, %cst_17 [1] : vector<8x8xf32> to vector<8xf32>
    %41 = vector.shape_cast %40 : vector<8xf32> to vector<8x1xf32>
    %42 = vector.broadcast %41 : vector<8x1xf32> to vector<8x8xf32>
    %43 = arith.subf %39, %42 : vector<8x8xf32>
    %44 = math.exp %43 : vector<8x8xf32>
    %cst_18 = arith.constant dense<0.000000e+00> : vector<8xf32>
    %45 = vector.multi_reduction <add>, %44, %cst_18 [1] : vector<8x8xf32> to vector<8xf32>
    %46 = vector.shape_cast %45 : vector<8xf32> to vector<8x1xf32>
    %47 = tpu.reciprocal %46 {approx = true} : vector<8x1xf32> -> vector<8x1xf32>
    %48 = vector.broadcast %47 : vector<8x1xf32> to vector<8x8xf32>
    %49 = arith.mulf %44, %48 : vector<8x8xf32>
    %cst_19 = arith.constant dense<0.000000e+00> : vector<8x32xf32>
    %50 = tpu.matmul %49, %35, %cst_19 {dimension_numbers = #tpu.dot_dimension_numbers<[1], [0], [0], [1], [0, 0, 1, 1], [], []>} : vector<8x8xf32>, vector<8x32xf32>, vector<8x32xf32> -> vector<8x32xf32>
    %c1 = arith.constant 1 : index
    %c0_20 = arith.constant 0 : index
    %c0_21 = arith.constant 0 : index
    %51 = vector.load %arg3[%c1, %c0_20, %c0_21] : memref<8x32x32xf32, #tpu.memory_space<vmem>>, vector<1x32x32xf32>
    %52 = vector.shape_cast %51 : vector<1x32x32xf32> to vector<32x32xf32>
    %cst_22 = arith.constant dense<0.000000e+00> : vector<8x32xf32>
    %53 = tpu.matmul %50, %52, %cst_22 {dimension_numbers = #tpu.dot_dimension_numbers<[1], [0], [0], [1], [0, 0, 1, 1], [], []>} : vector<8x32xf32>, vector<32x32xf32>, vector<8x32xf32> -> vector<8x32xf32>
    %54 = arith.addf %32, %53 : vector<8x32xf32>
    %55 = vector.extract_strided_slice %7 {offsets = [0, 64], sizes = [8, 32], strides = [1, 1]} : vector<8x256xf32> to vector<8x32xf32>
    %56 = vector.extract_strided_slice %8 {offsets = [0, 64], sizes = [8, 32], strides = [1, 1]} : vector<8x256xf32> to vector<8x32xf32>
    %57 = vector.extract_strided_slice %9 {offsets = [0, 64], sizes = [8, 32], strides = [1, 1]} : vector<8x256xf32> to vector<8x32xf32>
    %58 = tpu.transpose %56, [1, 0] : vector<8x32xf32> -> vector<32x8xf32>
    %cst_23 = arith.constant dense<0.000000e+00> : vector<8x8xf32>
    %59 = tpu.matmul %55, %58, %cst_23 {dimension_numbers = #tpu.dot_dimension_numbers<[1], [0], [0], [1], [0, 0, 1, 1], [], []>} : vector<8x32xf32>, vector<32x8xf32>, vector<8x8xf32> -> vector<8x8xf32>
    %cst_24 = arith.constant 0.176776692 : f32
    %60 = vector.broadcast %cst_24 : f32 to vector<8x8xf32>
    %61 = arith.mulf %59, %60 : vector<8x8xf32>
    %cst_25 = arith.constant dense<0xFF800000> : vector<8xf32>
    %62 = vector.multi_reduction <maximumf>, %61, %cst_25 [1] : vector<8x8xf32> to vector<8xf32>
    %63 = vector.shape_cast %62 : vector<8xf32> to vector<8x1xf32>
    %64 = vector.broadcast %63 : vector<8x1xf32> to vector<8x8xf32>
    %65 = arith.subf %61, %64 : vector<8x8xf32>
    %66 = math.exp %65 : vector<8x8xf32>
    %cst_26 = arith.constant dense<0.000000e+00> : vector<8xf32>
    %67 = vector.multi_reduction <add>, %66, %cst_26 [1] : vector<8x8xf32> to vector<8xf32>
    %68 = vector.shape_cast %67 : vector<8xf32> to vector<8x1xf32>
    %69 = tpu.reciprocal %68 {approx = true} : vector<8x1xf32> -> vector<8x1xf32>
    %70 = vector.broadcast %69 : vector<8x1xf32> to vector<8x8xf32>
    %71 = arith.mulf %66, %70 : vector<8x8xf32>
    %cst_27 = arith.constant dense<0.000000e+00> : vector<8x32xf32>
    %72 = tpu.matmul %71, %57, %cst_27 {dimension_numbers = #tpu.dot_dimension_numbers<[1], [0], [0], [1], [0, 0, 1, 1], [], []>} : vector<8x8xf32>, vector<8x32xf32>, vector<8x32xf32> -> vector<8x32xf32>
    %c2 = arith.constant 2 : index
    %c0_28 = arith.constant 0 : index
    %c0_29 = arith.constant 0 : index
    %73 = vector.load %arg3[%c2, %c0_28, %c0_29] : memref<8x32x32xf32, #tpu.memory_space<vmem>>, vector<1x32x32xf32>
    %74 = vector.shape_cast %73 : vector<1x32x32xf32> to vector<32x32xf32>
    %cst_30 = arith.constant dense<0.000000e+00> : vector<8x32xf32>
    %75 = tpu.matmul %72, %74, %cst_30 {dimension_numbers = #tpu.dot_dimension_numbers<[1], [0], [0], [1], [0, 0, 1, 1], [], []>} : vector<8x32xf32>, vector<32x32xf32>, vector<8x32xf32> -> vector<8x32xf32>
    %76 = arith.addf %54, %75 : vector<8x32xf32>
    %77 = vector.extract_strided_slice %7 {offsets = [0, 96], sizes = [8, 32], strides = [1, 1]} : vector<8x256xf32> to vector<8x32xf32>
    %78 = vector.extract_strided_slice %8 {offsets = [0, 96], sizes = [8, 32], strides = [1, 1]} : vector<8x256xf32> to vector<8x32xf32>
    %79 = vector.extract_strided_slice %9 {offsets = [0, 96], sizes = [8, 32], strides = [1, 1]} : vector<8x256xf32> to vector<8x32xf32>
    %80 = tpu.transpose %78, [1, 0] : vector<8x32xf32> -> vector<32x8xf32>
    %cst_31 = arith.constant dense<0.000000e+00> : vector<8x8xf32>
    %81 = tpu.matmul %77, %80, %cst_31 {dimension_numbers = #tpu.dot_dimension_numbers<[1], [0], [0], [1], [0, 0, 1, 1], [], []>} : vector<8x32xf32>, vector<32x8xf32>, vector<8x8xf32> -> vector<8x8xf32>
    %cst_32 = arith.constant 0.176776692 : f32
    %82 = vector.broadcast %cst_32 : f32 to vector<8x8xf32>
    %83 = arith.mulf %81, %82 : vector<8x8xf32>
    %cst_33 = arith.constant dense<0xFF800000> : vector<8xf32>
    %84 = vector.multi_reduction <maximumf>, %83, %cst_33 [1] : vector<8x8xf32> to vector<8xf32>
    %85 = vector.shape_cast %84 : vector<8xf32> to vector<8x1xf32>
    %86 = vector.broadcast %85 : vector<8x1xf32> to vector<8x8xf32>
    %87 = arith.subf %83, %86 : vector<8x8xf32>
    %88 = math.exp %87 : vector<8x8xf32>
    %cst_34 = arith.constant dense<0.000000e+00> : vector<8xf32>
    %89 = vector.multi_reduction <add>, %88, %cst_34 [1] : vector<8x8xf32> to vector<8xf32>
    %90 = vector.shape_cast %89 : vector<8xf32> to vector<8x1xf32>
    %91 = tpu.reciprocal %90 {approx = true} : vector<8x1xf32> -> vector<8x1xf32>
    %92 = vector.broadcast %91 : vector<8x1xf32> to vector<8x8xf32>
    %93 = arith.mulf %88, %92 : vector<8x8xf32>
    %cst_35 = arith.constant dense<0.000000e+00> : vector<8x32xf32>
    %94 = tpu.matmul %93, %79, %cst_35 {dimension_numbers = #tpu.dot_dimension_numbers<[1], [0], [0], [1], [0, 0, 1, 1], [], []>} : vector<8x8xf32>, vector<8x32xf32>, vector<8x32xf32> -> vector<8x32xf32>
    %c3 = arith.constant 3 : index
    %c0_36 = arith.constant 0 : index
    %c0_37 = arith.constant 0 : index
    %95 = vector.load %arg3[%c3, %c0_36, %c0_37] : memref<8x32x32xf32, #tpu.memory_space<vmem>>, vector<1x32x32xf32>
    %96 = vector.shape_cast %95 : vector<1x32x32xf32> to vector<32x32xf32>
    %cst_38 = arith.constant dense<0.000000e+00> : vector<8x32xf32>
    %97 = tpu.matmul %94, %96, %cst_38 {dimension_numbers = #tpu.dot_dimension_numbers<[1], [0], [0], [1], [0, 0, 1, 1], [], []>} : vector<8x32xf32>, vector<32x32xf32>, vector<8x32xf32> -> vector<8x32xf32>
    %98 = arith.addf %76, %97 : vector<8x32xf32>
    %99 = vector.extract_strided_slice %7 {offsets = [0, 128], sizes = [8, 32], strides = [1, 1]} : vector<8x256xf32> to vector<8x32xf32>
    %100 = vector.extract_strided_slice %8 {offsets = [0, 128], sizes = [8, 32], strides = [1, 1]} : vector<8x256xf32> to vector<8x32xf32>
    %101 = vector.extract_strided_slice %9 {offsets = [0, 128], sizes = [8, 32], strides = [1, 1]} : vector<8x256xf32> to vector<8x32xf32>
    %102 = tpu.transpose %100, [1, 0] : vector<8x32xf32> -> vector<32x8xf32>
    %cst_39 = arith.constant dense<0.000000e+00> : vector<8x8xf32>
    %103 = tpu.matmul %99, %102, %cst_39 {dimension_numbers = #tpu.dot_dimension_numbers<[1], [0], [0], [1], [0, 0, 1, 1], [], []>} : vector<8x32xf32>, vector<32x8xf32>, vector<8x8xf32> -> vector<8x8xf32>
    %cst_40 = arith.constant 0.176776692 : f32
    %104 = vector.broadcast %cst_40 : f32 to vector<8x8xf32>
    %105 = arith.mulf %103, %104 : vector<8x8xf32>
    %cst_41 = arith.constant dense<0xFF800000> : vector<8xf32>
    %106 = vector.multi_reduction <maximumf>, %105, %cst_41 [1] : vector<8x8xf32> to vector<8xf32>
    %107 = vector.shape_cast %106 : vector<8xf32> to vector<8x1xf32>
    %108 = vector.broadcast %107 : vector<8x1xf32> to vector<8x8xf32>
    %109 = arith.subf %105, %108 : vector<8x8xf32>
    %110 = math.exp %109 : vector<8x8xf32>
    %cst_42 = arith.constant dense<0.000000e+00> : vector<8xf32>
    %111 = vector.multi_reduction <add>, %110, %cst_42 [1] : vector<8x8xf32> to vector<8xf32>
    %112 = vector.shape_cast %111 : vector<8xf32> to vector<8x1xf32>
    %113 = tpu.reciprocal %112 {approx = true} : vector<8x1xf32> -> vector<8x1xf32>
    %114 = vector.broadcast %113 : vector<8x1xf32> to vector<8x8xf32>
    %115 = arith.mulf %110, %114 : vector<8x8xf32>
    %cst_43 = arith.constant dense<0.000000e+00> : vector<8x32xf32>
    %116 = tpu.matmul %115, %101, %cst_43 {dimension_numbers = #tpu.dot_dimension_numbers<[1], [0], [0], [1], [0, 0, 1, 1], [], []>} : vector<8x8xf32>, vector<8x32xf32>, vector<8x32xf32> -> vector<8x32xf32>
    %c4 = arith.constant 4 : index
    %c0_44 = arith.constant 0 : index
    %c0_45 = arith.constant 0 : index
    %117 = vector.load %arg3[%c4, %c0_44, %c0_45] : memref<8x32x32xf32, #tpu.memory_space<vmem>>, vector<1x32x32xf32>
    %118 = vector.shape_cast %117 : vector<1x32x32xf32> to vector<32x32xf32>
    %cst_46 = arith.constant dense<0.000000e+00> : vector<8x32xf32>
    %119 = tpu.matmul %116, %118, %cst_46 {dimension_numbers = #tpu.dot_dimension_numbers<[1], [0], [0], [1], [0, 0, 1, 1], [], []>} : vector<8x32xf32>, vector<32x32xf32>, vector<8x32xf32> -> vector<8x32xf32>
    %120 = arith.addf %98, %119 : vector<8x32xf32>
    %121 = vector.extract_strided_slice %7 {offsets = [0, 160], sizes = [8, 32], strides = [1, 1]} : vector<8x256xf32> to vector<8x32xf32>
    %122 = vector.extract_strided_slice %8 {offsets = [0, 160], sizes = [8, 32], strides = [1, 1]} : vector<8x256xf32> to vector<8x32xf32>
    %123 = vector.extract_strided_slice %9 {offsets = [0, 160], sizes = [8, 32], strides = [1, 1]} : vector<8x256xf32> to vector<8x32xf32>
    %124 = tpu.transpose %122, [1, 0] : vector<8x32xf32> -> vector<32x8xf32>
    %cst_47 = arith.constant dense<0.000000e+00> : vector<8x8xf32>
    %125 = tpu.matmul %121, %124, %cst_47 {dimension_numbers = #tpu.dot_dimension_numbers<[1], [0], [0], [1], [0, 0, 1, 1], [], []>} : vector<8x32xf32>, vector<32x8xf32>, vector<8x8xf32> -> vector<8x8xf32>
    %cst_48 = arith.constant 0.176776692 : f32
    %126 = vector.broadcast %cst_48 : f32 to vector<8x8xf32>
    %127 = arith.mulf %125, %126 : vector<8x8xf32>
    %cst_49 = arith.constant dense<0xFF800000> : vector<8xf32>
    %128 = vector.multi_reduction <maximumf>, %127, %cst_49 [1] : vector<8x8xf32> to vector<8xf32>
    %129 = vector.shape_cast %128 : vector<8xf32> to vector<8x1xf32>
    %130 = vector.broadcast %129 : vector<8x1xf32> to vector<8x8xf32>
    %131 = arith.subf %127, %130 : vector<8x8xf32>
    %132 = math.exp %131 : vector<8x8xf32>
    %cst_50 = arith.constant dense<0.000000e+00> : vector<8xf32>
    %133 = vector.multi_reduction <add>, %132, %cst_50 [1] : vector<8x8xf32> to vector<8xf32>
    %134 = vector.shape_cast %133 : vector<8xf32> to vector<8x1xf32>
    %135 = tpu.reciprocal %134 {approx = true} : vector<8x1xf32> -> vector<8x1xf32>
    %136 = vector.broadcast %135 : vector<8x1xf32> to vector<8x8xf32>
    %137 = arith.mulf %132, %136 : vector<8x8xf32>
    %cst_51 = arith.constant dense<0.000000e+00> : vector<8x32xf32>
    %138 = tpu.matmul %137, %123, %cst_51 {dimension_numbers = #tpu.dot_dimension_numbers<[1], [0], [0], [1], [0, 0, 1, 1], [], []>} : vector<8x8xf32>, vector<8x32xf32>, vector<8x32xf32> -> vector<8x32xf32>
    %c5 = arith.constant 5 : index
    %c0_52 = arith.constant 0 : index
    %c0_53 = arith.constant 0 : index
    %139 = vector.load %arg3[%c5, %c0_52, %c0_53] : memref<8x32x32xf32, #tpu.memory_space<vmem>>, vector<1x32x32xf32>
    %140 = vector.shape_cast %139 : vector<1x32x32xf32> to vector<32x32xf32>
    %cst_54 = arith.constant dense<0.000000e+00> : vector<8x32xf32>
    %141 = tpu.matmul %138, %140, %cst_54 {dimension_numbers = #tpu.dot_dimension_numbers<[1], [0], [0], [1], [0, 0, 1, 1], [], []>} : vector<8x32xf32>, vector<32x32xf32>, vector<8x32xf32> -> vector<8x32xf32>
    %142 = arith.addf %120, %141 : vector<8x32xf32>
    %143 = vector.extract_strided_slice %7 {offsets = [0, 192], sizes = [8, 32], strides = [1, 1]} : vector<8x256xf32> to vector<8x32xf32>
    %144 = vector.extract_strided_slice %8 {offsets = [0, 192], sizes = [8, 32], strides = [1, 1]} : vector<8x256xf32> to vector<8x32xf32>
    %145 = vector.extract_strided_slice %9 {offsets = [0, 192], sizes = [8, 32], strides = [1, 1]} : vector<8x256xf32> to vector<8x32xf32>
    %146 = tpu.transpose %144, [1, 0] : vector<8x32xf32> -> vector<32x8xf32>
    %cst_55 = arith.constant dense<0.000000e+00> : vector<8x8xf32>
    %147 = tpu.matmul %143, %146, %cst_55 {dimension_numbers = #tpu.dot_dimension_numbers<[1], [0], [0], [1], [0, 0, 1, 1], [], []>} : vector<8x32xf32>, vector<32x8xf32>, vector<8x8xf32> -> vector<8x8xf32>
    %cst_56 = arith.constant 0.176776692 : f32
    %148 = vector.broadcast %cst_56 : f32 to vector<8x8xf32>
    %149 = arith.mulf %147, %148 : vector<8x8xf32>
    %cst_57 = arith.constant dense<0xFF800000> : vector<8xf32>
    %150 = vector.multi_reduction <maximumf>, %149, %cst_57 [1] : vector<8x8xf32> to vector<8xf32>
    %151 = vector.shape_cast %150 : vector<8xf32> to vector<8x1xf32>
    %152 = vector.broadcast %151 : vector<8x1xf32> to vector<8x8xf32>
    %153 = arith.subf %149, %152 : vector<8x8xf32>
    %154 = math.exp %153 : vector<8x8xf32>
    %cst_58 = arith.constant dense<0.000000e+00> : vector<8xf32>
    %155 = vector.multi_reduction <add>, %154, %cst_58 [1] : vector<8x8xf32> to vector<8xf32>
    %156 = vector.shape_cast %155 : vector<8xf32> to vector<8x1xf32>
    %157 = tpu.reciprocal %156 {approx = true} : vector<8x1xf32> -> vector<8x1xf32>
    %158 = vector.broadcast %157 : vector<8x1xf32> to vector<8x8xf32>
    %159 = arith.mulf %154, %158 : vector<8x8xf32>
    %cst_59 = arith.constant dense<0.000000e+00> : vector<8x32xf32>
    %160 = tpu.matmul %159, %145, %cst_59 {dimension_numbers = #tpu.dot_dimension_numbers<[1], [0], [0], [1], [0, 0, 1, 1], [], []>} : vector<8x8xf32>, vector<8x32xf32>, vector<8x32xf32> -> vector<8x32xf32>
    %c6 = arith.constant 6 : index
    %c0_60 = arith.constant 0 : index
    %c0_61 = arith.constant 0 : index
    %161 = vector.load %arg3[%c6, %c0_60, %c0_61] : memref<8x32x32xf32, #tpu.memory_space<vmem>>, vector<1x32x32xf32>
    %162 = vector.shape_cast %161 : vector<1x32x32xf32> to vector<32x32xf32>
    %cst_62 = arith.constant dense<0.000000e+00> : vector<8x32xf32>
    %163 = tpu.matmul %160, %162, %cst_62 {dimension_numbers = #tpu.dot_dimension_numbers<[1], [0], [0], [1], [0, 0, 1, 1], [], []>} : vector<8x32xf32>, vector<32x32xf32>, vector<8x32xf32> -> vector<8x32xf32>
    %164 = arith.addf %142, %163 : vector<8x32xf32>
    %165 = vector.extract_strided_slice %7 {offsets = [0, 224], sizes = [8, 32], strides = [1, 1]} : vector<8x256xf32> to vector<8x32xf32>
    %166 = vector.extract_strided_slice %8 {offsets = [0, 224], sizes = [8, 32], strides = [1, 1]} : vector<8x256xf32> to vector<8x32xf32>
    %167 = vector.extract_strided_slice %9 {offsets = [0, 224], sizes = [8, 32], strides = [1, 1]} : vector<8x256xf32> to vector<8x32xf32>
    %168 = tpu.transpose %166, [1, 0] : vector<8x32xf32> -> vector<32x8xf32>
    %cst_63 = arith.constant dense<0.000000e+00> : vector<8x8xf32>
    %169 = tpu.matmul %165, %168, %cst_63 {dimension_numbers = #tpu.dot_dimension_numbers<[1], [0], [0], [1], [0, 0, 1, 1], [], []>} : vector<8x32xf32>, vector<32x8xf32>, vector<8x8xf32> -> vector<8x8xf32>
    %cst_64 = arith.constant 0.176776692 : f32
    %170 = vector.broadcast %cst_64 : f32 to vector<8x8xf32>
    %171 = arith.mulf %169, %170 : vector<8x8xf32>
    %cst_65 = arith.constant dense<0xFF800000> : vector<8xf32>
    %172 = vector.multi_reduction <maximumf>, %171, %cst_65 [1] : vector<8x8xf32> to vector<8xf32>
    %173 = vector.shape_cast %172 : vector<8xf32> to vector<8x1xf32>
    %174 = vector.broadcast %173 : vector<8x1xf32> to vector<8x8xf32>
    %175 = arith.subf %171, %174 : vector<8x8xf32>
    %176 = math.exp %175 : vector<8x8xf32>
    %cst_66 = arith.constant dense<0.000000e+00> : vector<8xf32>
    %177 = vector.multi_reduction <add>, %176, %cst_66 [1] : vector<8x8xf32> to vector<8xf32>
    %178 = vector.shape_cast %177 : vector<8xf32> to vector<8x1xf32>
    %179 = tpu.reciprocal %178 {approx = true} : vector<8x1xf32> -> vector<8x1xf32>
    %180 = vector.broadcast %179 : vector<8x1xf32> to vector<8x8xf32>
    %181 = arith.mulf %176, %180 : vector<8x8xf32>
    %cst_67 = arith.constant dense<0.000000e+00> : vector<8x32xf32>
    %182 = tpu.matmul %181, %167, %cst_67 {dimension_numbers = #tpu.dot_dimension_numbers<[1], [0], [0], [1], [0, 0, 1, 1], [], []>} : vector<8x8xf32>, vector<8x32xf32>, vector<8x32xf32> -> vector<8x32xf32>
    %c7 = arith.constant 7 : index
    %c0_68 = arith.constant 0 : index
    %c0_69 = arith.constant 0 : index
    %183 = vector.load %arg3[%c7, %c0_68, %c0_69] : memref<8x32x32xf32, #tpu.memory_space<vmem>>, vector<1x32x32xf32>
    %184 = vector.shape_cast %183 : vector<1x32x32xf32> to vector<32x32xf32>
    %cst_70 = arith.constant dense<0.000000e+00> : vector<8x32xf32>
    %185 = tpu.matmul %182, %184, %cst_70 {dimension_numbers = #tpu.dot_dimension_numbers<[1], [0], [0], [1], [0, 0, 1, 1], [], []>} : vector<8x32xf32>, vector<32x32xf32>, vector<8x32xf32> -> vector<8x32xf32>
    %186 = arith.addf %164, %185 : vector<8x32xf32>
    %187 = vector.broadcast %6 : vector<1x32xf32> to vector<8x32xf32>
    %188 = arith.addf %186, %187 : vector<8x32xf32>
    %189 = vector.extract_strided_slice %3 {offsets = [8, 0], sizes = [8, 256], strides = [1, 1]} : vector<16x256xf32> to vector<8x256xf32>
    %190 = vector.extract_strided_slice %4 {offsets = [8, 0], sizes = [8, 256], strides = [1, 1]} : vector<16x256xf32> to vector<8x256xf32>
    %191 = vector.extract_strided_slice %5 {offsets = [8, 0], sizes = [8, 256], strides = [1, 1]} : vector<16x256xf32> to vector<8x256xf32>
    %cst_71 = arith.constant 0.000000e+00 : f32
    %192 = vector.broadcast %cst_71 : f32 to vector<8x32xf32>
    %193 = vector.extract_strided_slice %189 {offsets = [0, 0], sizes = [8, 32], strides = [1, 1]} : vector<8x256xf32> to vector<8x32xf32>
    %194 = vector.extract_strided_slice %190 {offsets = [0, 0], sizes = [8, 32], strides = [1, 1]} : vector<8x256xf32> to vector<8x32xf32>
    %195 = vector.extract_strided_slice %191 {offsets = [0, 0], sizes = [8, 32], strides = [1, 1]} : vector<8x256xf32> to vector<8x32xf32>
    %196 = tpu.transpose %194, [1, 0] : vector<8x32xf32> -> vector<32x8xf32>
    %cst_72 = arith.constant dense<0.000000e+00> : vector<8x8xf32>
    %197 = tpu.matmul %193, %196, %cst_72 {dimension_numbers = #tpu.dot_dimension_numbers<[1], [0], [0], [1], [0, 0, 1, 1], [], []>} : vector<8x32xf32>, vector<32x8xf32>, vector<8x8xf32> -> vector<8x8xf32>
    %cst_73 = arith.constant 0.176776692 : f32
    %198 = vector.broadcast %cst_73 : f32 to vector<8x8xf32>
    %199 = arith.mulf %197, %198 : vector<8x8xf32>
    %cst_74 = arith.constant dense<0xFF800000> : vector<8xf32>
    %200 = vector.multi_reduction <maximumf>, %199, %cst_74 [1] : vector<8x8xf32> to vector<8xf32>
    %201 = vector.shape_cast %200 : vector<8xf32> to vector<8x1xf32>
    %202 = vector.broadcast %201 : vector<8x1xf32> to vector<8x8xf32>
    %203 = arith.subf %199, %202 : vector<8x8xf32>
    %204 = math.exp %203 : vector<8x8xf32>
    %cst_75 = arith.constant dense<0.000000e+00> : vector<8xf32>
    %205 = vector.multi_reduction <add>, %204, %cst_75 [1] : vector<8x8xf32> to vector<8xf32>
    %206 = vector.shape_cast %205 : vector<8xf32> to vector<8x1xf32>
    %207 = tpu.reciprocal %206 {approx = true} : vector<8x1xf32> -> vector<8x1xf32>
    %208 = vector.broadcast %207 : vector<8x1xf32> to vector<8x8xf32>
    %209 = arith.mulf %204, %208 : vector<8x8xf32>
    %cst_76 = arith.constant dense<0.000000e+00> : vector<8x32xf32>
    %210 = tpu.matmul %209, %195, %cst_76 {dimension_numbers = #tpu.dot_dimension_numbers<[1], [0], [0], [1], [0, 0, 1, 1], [], []>} : vector<8x8xf32>, vector<8x32xf32>, vector<8x32xf32> -> vector<8x32xf32>
    %c0_77 = arith.constant 0 : index
    %c0_78 = arith.constant 0 : index
    %c0_79 = arith.constant 0 : index
    %211 = vector.load %arg3[%c0_77, %c0_78, %c0_79] : memref<8x32x32xf32, #tpu.memory_space<vmem>>, vector<1x32x32xf32>
    %212 = vector.shape_cast %211 : vector<1x32x32xf32> to vector<32x32xf32>
    %cst_80 = arith.constant dense<0.000000e+00> : vector<8x32xf32>
    %213 = tpu.matmul %210, %212, %cst_80 {dimension_numbers = #tpu.dot_dimension_numbers<[1], [0], [0], [1], [0, 0, 1, 1], [], []>} : vector<8x32xf32>, vector<32x32xf32>, vector<8x32xf32> -> vector<8x32xf32>
    %214 = arith.addf %192, %213 : vector<8x32xf32>
    %215 = vector.extract_strided_slice %189 {offsets = [0, 32], sizes = [8, 32], strides = [1, 1]} : vector<8x256xf32> to vector<8x32xf32>
    %216 = vector.extract_strided_slice %190 {offsets = [0, 32], sizes = [8, 32], strides = [1, 1]} : vector<8x256xf32> to vector<8x32xf32>
    %217 = vector.extract_strided_slice %191 {offsets = [0, 32], sizes = [8, 32], strides = [1, 1]} : vector<8x256xf32> to vector<8x32xf32>
    %218 = tpu.transpose %216, [1, 0] : vector<8x32xf32> -> vector<32x8xf32>
    %cst_81 = arith.constant dense<0.000000e+00> : vector<8x8xf32>
    %219 = tpu.matmul %215, %218, %cst_81 {dimension_numbers = #tpu.dot_dimension_numbers<[1], [0], [0], [1], [0, 0, 1, 1], [], []>} : vector<8x32xf32>, vector<32x8xf32>, vector<8x8xf32> -> vector<8x8xf32>
    %cst_82 = arith.constant 0.176776692 : f32
    %220 = vector.broadcast %cst_82 : f32 to vector<8x8xf32>
    %221 = arith.mulf %219, %220 : vector<8x8xf32>
    %cst_83 = arith.constant dense<0xFF800000> : vector<8xf32>
    %222 = vector.multi_reduction <maximumf>, %221, %cst_83 [1] : vector<8x8xf32> to vector<8xf32>
    %223 = vector.shape_cast %222 : vector<8xf32> to vector<8x1xf32>
    %224 = vector.broadcast %223 : vector<8x1xf32> to vector<8x8xf32>
    %225 = arith.subf %221, %224 : vector<8x8xf32>
    %226 = math.exp %225 : vector<8x8xf32>
    %cst_84 = arith.constant dense<0.000000e+00> : vector<8xf32>
    %227 = vector.multi_reduction <add>, %226, %cst_84 [1] : vector<8x8xf32> to vector<8xf32>
    %228 = vector.shape_cast %227 : vector<8xf32> to vector<8x1xf32>
    %229 = tpu.reciprocal %228 {approx = true} : vector<8x1xf32> -> vector<8x1xf32>
    %230 = vector.broadcast %229 : vector<8x1xf32> to vector<8x8xf32>
    %231 = arith.mulf %226, %230 : vector<8x8xf32>
    %cst_85 = arith.constant dense<0.000000e+00> : vector<8x32xf32>
    %232 = tpu.matmul %231, %217, %cst_85 {dimension_numbers = #tpu.dot_dimension_numbers<[1], [0], [0], [1], [0, 0, 1, 1], [], []>} : vector<8x8xf32>, vector<8x32xf32>, vector<8x32xf32> -> vector<8x32xf32>
    %c1_86 = arith.constant 1 : index
    %c0_87 = arith.constant 0 : index
    %c0_88 = arith.constant 0 : index
    %233 = vector.load %arg3[%c1_86, %c0_87, %c0_88] : memref<8x32x32xf32, #tpu.memory_space<vmem>>, vector<1x32x32xf32>
    %234 = vector.shape_cast %233 : vector<1x32x32xf32> to vector<32x32xf32>
    %cst_89 = arith.constant dense<0.000000e+00> : vector<8x32xf32>
    %235 = tpu.matmul %232, %234, %cst_89 {dimension_numbers = #tpu.dot_dimension_numbers<[1], [0], [0], [1], [0, 0, 1, 1], [], []>} : vector<8x32xf32>, vector<32x32xf32>, vector<8x32xf32> -> vector<8x32xf32>
    %236 = arith.addf %214, %235 : vector<8x32xf32>
    %237 = vector.extract_strided_slice %189 {offsets = [0, 64], sizes = [8, 32], strides = [1, 1]} : vector<8x256xf32> to vector<8x32xf32>
    %238 = vector.extract_strided_slice %190 {offsets = [0, 64], sizes = [8, 32], strides = [1, 1]} : vector<8x256xf32> to vector<8x32xf32>
    %239 = vector.extract_strided_slice %191 {offsets = [0, 64], sizes = [8, 32], strides = [1, 1]} : vector<8x256xf32> to vector<8x32xf32>
    %240 = tpu.transpose %238, [1, 0] : vector<8x32xf32> -> vector<32x8xf32>
    %cst_90 = arith.constant dense<0.000000e+00> : vector<8x8xf32>
    %241 = tpu.matmul %237, %240, %cst_90 {dimension_numbers = #tpu.dot_dimension_numbers<[1], [0], [0], [1], [0, 0, 1, 1], [], []>} : vector<8x32xf32>, vector<32x8xf32>, vector<8x8xf32> -> vector<8x8xf32>
    %cst_91 = arith.constant 0.176776692 : f32
    %242 = vector.broadcast %cst_91 : f32 to vector<8x8xf32>
    %243 = arith.mulf %241, %242 : vector<8x8xf32>
    %cst_92 = arith.constant dense<0xFF800000> : vector<8xf32>
    %244 = vector.multi_reduction <maximumf>, %243, %cst_92 [1] : vector<8x8xf32> to vector<8xf32>
    %245 = vector.shape_cast %244 : vector<8xf32> to vector<8x1xf32>
    %246 = vector.broadcast %245 : vector<8x1xf32> to vector<8x8xf32>
    %247 = arith.subf %243, %246 : vector<8x8xf32>
    %248 = math.exp %247 : vector<8x8xf32>
    %cst_93 = arith.constant dense<0.000000e+00> : vector<8xf32>
    %249 = vector.multi_reduction <add>, %248, %cst_93 [1] : vector<8x8xf32> to vector<8xf32>
    %250 = vector.shape_cast %249 : vector<8xf32> to vector<8x1xf32>
    %251 = tpu.reciprocal %250 {approx = true} : vector<8x1xf32> -> vector<8x1xf32>
    %252 = vector.broadcast %251 : vector<8x1xf32> to vector<8x8xf32>
    %253 = arith.mulf %248, %252 : vector<8x8xf32>
    %cst_94 = arith.constant dense<0.000000e+00> : vector<8x32xf32>
    %254 = tpu.matmul %253, %239, %cst_94 {dimension_numbers = #tpu.dot_dimension_numbers<[1], [0], [0], [1], [0, 0, 1, 1], [], []>} : vector<8x8xf32>, vector<8x32xf32>, vector<8x32xf32> -> vector<8x32xf32>
    %c2_95 = arith.constant 2 : index
    %c0_96 = arith.constant 0 : index
    %c0_97 = arith.constant 0 : index
    %255 = vector.load %arg3[%c2_95, %c0_96, %c0_97] : memref<8x32x32xf32, #tpu.memory_space<vmem>>, vector<1x32x32xf32>
    %256 = vector.shape_cast %255 : vector<1x32x32xf32> to vector<32x32xf32>
    %cst_98 = arith.constant dense<0.000000e+00> : vector<8x32xf32>
    %257 = tpu.matmul %254, %256, %cst_98 {dimension_numbers = #tpu.dot_dimension_numbers<[1], [0], [0], [1], [0, 0, 1, 1], [], []>} : vector<8x32xf32>, vector<32x32xf32>, vector<8x32xf32> -> vector<8x32xf32>
    %258 = arith.addf %236, %257 : vector<8x32xf32>
    %259 = vector.extract_strided_slice %189 {offsets = [0, 96], sizes = [8, 32], strides = [1, 1]} : vector<8x256xf32> to vector<8x32xf32>
    %260 = vector.extract_strided_slice %190 {offsets = [0, 96], sizes = [8, 32], strides = [1, 1]} : vector<8x256xf32> to vector<8x32xf32>
    %261 = vector.extract_strided_slice %191 {offsets = [0, 96], sizes = [8, 32], strides = [1, 1]} : vector<8x256xf32> to vector<8x32xf32>
    %262 = tpu.transpose %260, [1, 0] : vector<8x32xf32> -> vector<32x8xf32>
    %cst_99 = arith.constant dense<0.000000e+00> : vector<8x8xf32>
    %263 = tpu.matmul %259, %262, %cst_99 {dimension_numbers = #tpu.dot_dimension_numbers<[1], [0], [0], [1], [0, 0, 1, 1], [], []>} : vector<8x32xf32>, vector<32x8xf32>, vector<8x8xf32> -> vector<8x8xf32>
    %cst_100 = arith.constant 0.176776692 : f32
    %264 = vector.broadcast %cst_100 : f32 to vector<8x8xf32>
    %265 = arith.mulf %263, %264 : vector<8x8xf32>
    %cst_101 = arith.constant dense<0xFF800000> : vector<8xf32>
    %266 = vector.multi_reduction <maximumf>, %265, %cst_101 [1] : vector<8x8xf32> to vector<8xf32>
    %267 = vector.shape_cast %266 : vector<8xf32> to vector<8x1xf32>
    %268 = vector.broadcast %267 : vector<8x1xf32> to vector<8x8xf32>
    %269 = arith.subf %265, %268 : vector<8x8xf32>
    %270 = math.exp %269 : vector<8x8xf32>
    %cst_102 = arith.constant dense<0.000000e+00> : vector<8xf32>
    %271 = vector.multi_reduction <add>, %270, %cst_102 [1] : vector<8x8xf32> to vector<8xf32>
    %272 = vector.shape_cast %271 : vector<8xf32> to vector<8x1xf32>
    %273 = tpu.reciprocal %272 {approx = true} : vector<8x1xf32> -> vector<8x1xf32>
    %274 = vector.broadcast %273 : vector<8x1xf32> to vector<8x8xf32>
    %275 = arith.mulf %270, %274 : vector<8x8xf32>
    %cst_103 = arith.constant dense<0.000000e+00> : vector<8x32xf32>
    %276 = tpu.matmul %275, %261, %cst_103 {dimension_numbers = #tpu.dot_dimension_numbers<[1], [0], [0], [1], [0, 0, 1, 1], [], []>} : vector<8x8xf32>, vector<8x32xf32>, vector<8x32xf32> -> vector<8x32xf32>
    %c3_104 = arith.constant 3 : index
    %c0_105 = arith.constant 0 : index
    %c0_106 = arith.constant 0 : index
    %277 = vector.load %arg3[%c3_104, %c0_105, %c0_106] : memref<8x32x32xf32, #tpu.memory_space<vmem>>, vector<1x32x32xf32>
    %278 = vector.shape_cast %277 : vector<1x32x32xf32> to vector<32x32xf32>
    %cst_107 = arith.constant dense<0.000000e+00> : vector<8x32xf32>
    %279 = tpu.matmul %276, %278, %cst_107 {dimension_numbers = #tpu.dot_dimension_numbers<[1], [0], [0], [1], [0, 0, 1, 1], [], []>} : vector<8x32xf32>, vector<32x32xf32>, vector<8x32xf32> -> vector<8x32xf32>
    %280 = arith.addf %258, %279 : vector<8x32xf32>
    %281 = vector.extract_strided_slice %189 {offsets = [0, 128], sizes = [8, 32], strides = [1, 1]} : vector<8x256xf32> to vector<8x32xf32>
    %282 = vector.extract_strided_slice %190 {offsets = [0, 128], sizes = [8, 32], strides = [1, 1]} : vector<8x256xf32> to vector<8x32xf32>
    %283 = vector.extract_strided_slice %191 {offsets = [0, 128], sizes = [8, 32], strides = [1, 1]} : vector<8x256xf32> to vector<8x32xf32>
    %284 = tpu.transpose %282, [1, 0] : vector<8x32xf32> -> vector<32x8xf32>
    %cst_108 = arith.constant dense<0.000000e+00> : vector<8x8xf32>
    %285 = tpu.matmul %281, %284, %cst_108 {dimension_numbers = #tpu.dot_dimension_numbers<[1], [0], [0], [1], [0, 0, 1, 1], [], []>} : vector<8x32xf32>, vector<32x8xf32>, vector<8x8xf32> -> vector<8x8xf32>
    %cst_109 = arith.constant 0.176776692 : f32
    %286 = vector.broadcast %cst_109 : f32 to vector<8x8xf32>
    %287 = arith.mulf %285, %286 : vector<8x8xf32>
    %cst_110 = arith.constant dense<0xFF800000> : vector<8xf32>
    %288 = vector.multi_reduction <maximumf>, %287, %cst_110 [1] : vector<8x8xf32> to vector<8xf32>
    %289 = vector.shape_cast %288 : vector<8xf32> to vector<8x1xf32>
    %290 = vector.broadcast %289 : vector<8x1xf32> to vector<8x8xf32>
    %291 = arith.subf %287, %290 : vector<8x8xf32>
    %292 = math.exp %291 : vector<8x8xf32>
    %cst_111 = arith.constant dense<0.000000e+00> : vector<8xf32>
    %293 = vector.multi_reduction <add>, %292, %cst_111 [1] : vector<8x8xf32> to vector<8xf32>
    %294 = vector.shape_cast %293 : vector<8xf32> to vector<8x1xf32>
    %295 = tpu.reciprocal %294 {approx = true} : vector<8x1xf32> -> vector<8x1xf32>
    %296 = vector.broadcast %295 : vector<8x1xf32> to vector<8x8xf32>
    %297 = arith.mulf %292, %296 : vector<8x8xf32>
    %cst_112 = arith.constant dense<0.000000e+00> : vector<8x32xf32>
    %298 = tpu.matmul %297, %283, %cst_112 {dimension_numbers = #tpu.dot_dimension_numbers<[1], [0], [0], [1], [0, 0, 1, 1], [], []>} : vector<8x8xf32>, vector<8x32xf32>, vector<8x32xf32> -> vector<8x32xf32>
    %c4_113 = arith.constant 4 : index
    %c0_114 = arith.constant 0 : index
    %c0_115 = arith.constant 0 : index
    %299 = vector.load %arg3[%c4_113, %c0_114, %c0_115] : memref<8x32x32xf32, #tpu.memory_space<vmem>>, vector<1x32x32xf32>
    %300 = vector.shape_cast %299 : vector<1x32x32xf32> to vector<32x32xf32>
    %cst_116 = arith.constant dense<0.000000e+00> : vector<8x32xf32>
    %301 = tpu.matmul %298, %300, %cst_116 {dimension_numbers = #tpu.dot_dimension_numbers<[1], [0], [0], [1], [0, 0, 1, 1], [], []>} : vector<8x32xf32>, vector<32x32xf32>, vector<8x32xf32> -> vector<8x32xf32>
    %302 = arith.addf %280, %301 : vector<8x32xf32>
    %303 = vector.extract_strided_slice %189 {offsets = [0, 160], sizes = [8, 32], strides = [1, 1]} : vector<8x256xf32> to vector<8x32xf32>
    %304 = vector.extract_strided_slice %190 {offsets = [0, 160], sizes = [8, 32], strides = [1, 1]} : vector<8x256xf32> to vector<8x32xf32>
    %305 = vector.extract_strided_slice %191 {offsets = [0, 160], sizes = [8, 32], strides = [1, 1]} : vector<8x256xf32> to vector<8x32xf32>
    %306 = tpu.transpose %304, [1, 0] : vector<8x32xf32> -> vector<32x8xf32>
    %cst_117 = arith.constant dense<0.000000e+00> : vector<8x8xf32>
    %307 = tpu.matmul %303, %306, %cst_117 {dimension_numbers = #tpu.dot_dimension_numbers<[1], [0], [0], [1], [0, 0, 1, 1], [], []>} : vector<8x32xf32>, vector<32x8xf32>, vector<8x8xf32> -> vector<8x8xf32>
    %cst_118 = arith.constant 0.176776692 : f32
    %308 = vector.broadcast %cst_118 : f32 to vector<8x8xf32>
    %309 = arith.mulf %307, %308 : vector<8x8xf32>
    %cst_119 = arith.constant dense<0xFF800000> : vector<8xf32>
    %310 = vector.multi_reduction <maximumf>, %309, %cst_119 [1] : vector<8x8xf32> to vector<8xf32>
    %311 = vector.shape_cast %310 : vector<8xf32> to vector<8x1xf32>
    %312 = vector.broadcast %311 : vector<8x1xf32> to vector<8x8xf32>
    %313 = arith.subf %309, %312 : vector<8x8xf32>
    %314 = math.exp %313 : vector<8x8xf32>
    %cst_120 = arith.constant dense<0.000000e+00> : vector<8xf32>
    %315 = vector.multi_reduction <add>, %314, %cst_120 [1] : vector<8x8xf32> to vector<8xf32>
    %316 = vector.shape_cast %315 : vector<8xf32> to vector<8x1xf32>
    %317 = tpu.reciprocal %316 {approx = true} : vector<8x1xf32> -> vector<8x1xf32>
    %318 = vector.broadcast %317 : vector<8x1xf32> to vector<8x8xf32>
    %319 = arith.mulf %314, %318 : vector<8x8xf32>
    %cst_121 = arith.constant dense<0.000000e+00> : vector<8x32xf32>
    %320 = tpu.matmul %319, %305, %cst_121 {dimension_numbers = #tpu.dot_dimension_numbers<[1], [0], [0], [1], [0, 0, 1, 1], [], []>} : vector<8x8xf32>, vector<8x32xf32>, vector<8x32xf32> -> vector<8x32xf32>
    %c5_122 = arith.constant 5 : index
    %c0_123 = arith.constant 0 : index
    %c0_124 = arith.constant 0 : index
    %321 = vector.load %arg3[%c5_122, %c0_123, %c0_124] : memref<8x32x32xf32, #tpu.memory_space<vmem>>, vector<1x32x32xf32>
    %322 = vector.shape_cast %321 : vector<1x32x32xf32> to vector<32x32xf32>
    %cst_125 = arith.constant dense<0.000000e+00> : vector<8x32xf32>
    %323 = tpu.matmul %320, %322, %cst_125 {dimension_numbers = #tpu.dot_dimension_numbers<[1], [0], [0], [1], [0, 0, 1, 1], [], []>} : vector<8x32xf32>, vector<32x32xf32>, vector<8x32xf32> -> vector<8x32xf32>
    %324 = arith.addf %302, %323 : vector<8x32xf32>
    %325 = vector.extract_strided_slice %189 {offsets = [0, 192], sizes = [8, 32], strides = [1, 1]} : vector<8x256xf32> to vector<8x32xf32>
    %326 = vector.extract_strided_slice %190 {offsets = [0, 192], sizes = [8, 32], strides = [1, 1]} : vector<8x256xf32> to vector<8x32xf32>
    %327 = vector.extract_strided_slice %191 {offsets = [0, 192], sizes = [8, 32], strides = [1, 1]} : vector<8x256xf32> to vector<8x32xf32>
    %328 = tpu.transpose %326, [1, 0] : vector<8x32xf32> -> vector<32x8xf32>
    %cst_126 = arith.constant dense<0.000000e+00> : vector<8x8xf32>
    %329 = tpu.matmul %325, %328, %cst_126 {dimension_numbers = #tpu.dot_dimension_numbers<[1], [0], [0], [1], [0, 0, 1, 1], [], []>} : vector<8x32xf32>, vector<32x8xf32>, vector<8x8xf32> -> vector<8x8xf32>
    %cst_127 = arith.constant 0.176776692 : f32
    %330 = vector.broadcast %cst_127 : f32 to vector<8x8xf32>
    %331 = arith.mulf %329, %330 : vector<8x8xf32>
    %cst_128 = arith.constant dense<0xFF800000> : vector<8xf32>
    %332 = vector.multi_reduction <maximumf>, %331, %cst_128 [1] : vector<8x8xf32> to vector<8xf32>
    %333 = vector.shape_cast %332 : vector<8xf32> to vector<8x1xf32>
    %334 = vector.broadcast %333 : vector<8x1xf32> to vector<8x8xf32>
    %335 = arith.subf %331, %334 : vector<8x8xf32>
    %336 = math.exp %335 : vector<8x8xf32>
    %cst_129 = arith.constant dense<0.000000e+00> : vector<8xf32>
    %337 = vector.multi_reduction <add>, %336, %cst_129 [1] : vector<8x8xf32> to vector<8xf32>
    %338 = vector.shape_cast %337 : vector<8xf32> to vector<8x1xf32>
    %339 = tpu.reciprocal %338 {approx = true} : vector<8x1xf32> -> vector<8x1xf32>
    %340 = vector.broadcast %339 : vector<8x1xf32> to vector<8x8xf32>
    %341 = arith.mulf %336, %340 : vector<8x8xf32>
    %cst_130 = arith.constant dense<0.000000e+00> : vector<8x32xf32>
    %342 = tpu.matmul %341, %327, %cst_130 {dimension_numbers = #tpu.dot_dimension_numbers<[1], [0], [0], [1], [0, 0, 1, 1], [], []>} : vector<8x8xf32>, vector<8x32xf32>, vector<8x32xf32> -> vector<8x32xf32>
    %c6_131 = arith.constant 6 : index
    %c0_132 = arith.constant 0 : index
    %c0_133 = arith.constant 0 : index
    %343 = vector.load %arg3[%c6_131, %c0_132, %c0_133] : memref<8x32x32xf32, #tpu.memory_space<vmem>>, vector<1x32x32xf32>
    %344 = vector.shape_cast %343 : vector<1x32x32xf32> to vector<32x32xf32>
    %cst_134 = arith.constant dense<0.000000e+00> : vector<8x32xf32>
    %345 = tpu.matmul %342, %344, %cst_134 {dimension_numbers = #tpu.dot_dimension_numbers<[1], [0], [0], [1], [0, 0, 1, 1], [], []>} : vector<8x32xf32>, vector<32x32xf32>, vector<8x32xf32> -> vector<8x32xf32>
    %346 = arith.addf %324, %345 : vector<8x32xf32>
    %347 = vector.extract_strided_slice %189 {offsets = [0, 224], sizes = [8, 32], strides = [1, 1]} : vector<8x256xf32> to vector<8x32xf32>
    %348 = vector.extract_strided_slice %190 {offsets = [0, 224], sizes = [8, 32], strides = [1, 1]} : vector<8x256xf32> to vector<8x32xf32>
    %349 = vector.extract_strided_slice %191 {offsets = [0, 224], sizes = [8, 32], strides = [1, 1]} : vector<8x256xf32> to vector<8x32xf32>
    %350 = tpu.transpose %348, [1, 0] : vector<8x32xf32> -> vector<32x8xf32>
    %cst_135 = arith.constant dense<0.000000e+00> : vector<8x8xf32>
    %351 = tpu.matmul %347, %350, %cst_135 {dimension_numbers = #tpu.dot_dimension_numbers<[1], [0], [0], [1], [0, 0, 1, 1], [], []>} : vector<8x32xf32>, vector<32x8xf32>, vector<8x8xf32> -> vector<8x8xf32>
    %cst_136 = arith.constant 0.176776692 : f32
    %352 = vector.broadcast %cst_136 : f32 to vector<8x8xf32>
    %353 = arith.mulf %351, %352 : vector<8x8xf32>
    %cst_137 = arith.constant dense<0xFF800000> : vector<8xf32>
    %354 = vector.multi_reduction <maximumf>, %353, %cst_137 [1] : vector<8x8xf32> to vector<8xf32>
    %355 = vector.shape_cast %354 : vector<8xf32> to vector<8x1xf32>
    %356 = vector.broadcast %355 : vector<8x1xf32> to vector<8x8xf32>
    %357 = arith.subf %353, %356 : vector<8x8xf32>
    %358 = math.exp %357 : vector<8x8xf32>
    %cst_138 = arith.constant dense<0.000000e+00> : vector<8xf32>
    %359 = vector.multi_reduction <add>, %358, %cst_138 [1] : vector<8x8xf32> to vector<8xf32>
    %360 = vector.shape_cast %359 : vector<8xf32> to vector<8x1xf32>
    %361 = tpu.reciprocal %360 {approx = true} : vector<8x1xf32> -> vector<8x1xf32>
    %362 = vector.broadcast %361 : vector<8x1xf32> to vector<8x8xf32>
    %363 = arith.mulf %358, %362 : vector<8x8xf32>
    %cst_139 = arith.constant dense<0.000000e+00> : vector<8x32xf32>
    %364 = tpu.matmul %363, %349, %cst_139 {dimension_numbers = #tpu.dot_dimension_numbers<[1], [0], [0], [1], [0, 0, 1, 1], [], []>} : vector<8x8xf32>, vector<8x32xf32>, vector<8x32xf32> -> vector<8x32xf32>
    %c7_140 = arith.constant 7 : index
    %c0_141 = arith.constant 0 : index
    %c0_142 = arith.constant 0 : index
    %365 = vector.load %arg3[%c7_140, %c0_141, %c0_142] : memref<8x32x32xf32, #tpu.memory_space<vmem>>, vector<1x32x32xf32>
    %366 = vector.shape_cast %365 : vector<1x32x32xf32> to vector<32x32xf32>
    %cst_143 = arith.constant dense<0.000000e+00> : vector<8x32xf32>
    %367 = tpu.matmul %364, %366, %cst_143 {dimension_numbers = #tpu.dot_dimension_numbers<[1], [0], [0], [1], [0, 0, 1, 1], [], []>} : vector<8x32xf32>, vector<32x32xf32>, vector<8x32xf32> -> vector<8x32xf32>
    %368 = arith.addf %346, %367 : vector<8x32xf32>
    %369 = vector.broadcast %6 : vector<1x32xf32> to vector<8x32xf32>
    %370 = arith.addf %368, %369 : vector<8x32xf32>
    %371 = tpu.concatenate %188, %370 in 0 : vector<8x32xf32>, vector<8x32xf32> -> vector<16x32xf32>
    %372 = arith.addf %0, %371 : vector<16x32xf32>
    %c0_144 = arith.constant 0 : index
    %c0_145 = arith.constant 0 : index
    %373 = vector.load %arg5[%c0_144, %c0_145] : memref<1x32xf32, #tpu.memory_space<vmem>>, vector<1x32xf32>
    %c0_146 = arith.constant 0 : index
    %c0_147 = arith.constant 0 : index
    %374 = vector.load %arg6[%c0_146, %c0_147] : memref<1x32xf32, #tpu.memory_space<vmem>>, vector<1x32xf32>
    %cst_148 = arith.constant dense<0.000000e+00> : vector<16xf32>
    %375 = vector.multi_reduction <add>, %372, %cst_148 [1] : vector<16x32xf32> to vector<16xf32>
    %376 = vector.shape_cast %375 : vector<16xf32> to vector<16x1xf32>
    %cst_149 = arith.constant 3.200000e+01 : f32
    %377 = vector.broadcast %cst_149 : f32 to vector<16x1xf32>
    %378 = arith.divf %376, %377 : vector<16x1xf32>
    %379 = vector.broadcast %378 : vector<16x1xf32> to vector<16x32xf32>
    %380 = arith.subf %372, %379 : vector<16x32xf32>
    %381 = arith.mulf %380, %380 : vector<16x32xf32>
    %cst_150 = arith.constant dense<0.000000e+00> : vector<16xf32>
    %382 = vector.multi_reduction <add>, %381, %cst_150 [1] : vector<16x32xf32> to vector<16xf32>
    %383 = vector.shape_cast %382 : vector<16xf32> to vector<16x1xf32>
    %cst_151 = arith.constant 3.200000e+01 : f32
    %384 = vector.broadcast %cst_151 : f32 to vector<16x1xf32>
    %385 = arith.divf %383, %384 : vector<16x1xf32>
    %cst_152 = arith.constant 9.99999974E-6 : f32
    %386 = vector.broadcast %cst_152 : f32 to vector<16x1xf32>
    %387 = arith.addf %385, %386 : vector<16x1xf32>
    %388 = math.rsqrt %387 : vector<16x1xf32>
    %389 = vector.broadcast %378 : vector<16x1xf32> to vector<16x32xf32>
    %390 = arith.subf %372, %389 : vector<16x32xf32>
    %391 = vector.broadcast %388 : vector<16x1xf32> to vector<16x32xf32>
    %392 = arith.mulf %390, %391 : vector<16x32xf32>
    %393 = vector.broadcast %373 : vector<1x32xf32> to vector<16x32xf32>
    %394 = arith.mulf %392, %393 : vector<16x32xf32>
    %395 = vector.broadcast %374 : vector<1x32xf32> to vector<16x32xf32>
    %396 = arith.addf %394, %395 : vector<16x32xf32>
    %c0_153 = arith.constant 0 : index
    %c0_154 = arith.constant 0 : index
    %397 = vector.load %arg7[%c0_153, %c0_154] : memref<32x128xf32, #tpu.memory_space<vmem>>, vector<32x128xf32>
    %cst_155 = arith.constant dense<0.000000e+00> : vector<16x128xf32>
    %398 = tpu.matmul %396, %397, %cst_155 {dimension_numbers = #tpu.dot_dimension_numbers<[1], [0], [0], [1], [0, 0, 1, 1], [], []>} : vector<16x32xf32>, vector<32x128xf32>, vector<16x128xf32> -> vector<16x128xf32>
    %c0_156 = arith.constant 0 : index
    %c0_157 = arith.constant 0 : index
    %399 = vector.load %arg8[%c0_156, %c0_157] : memref<1x128xf32, #tpu.memory_space<vmem>>, vector<1x128xf32>
    %400 = vector.broadcast %399 : vector<1x128xf32> to vector<16x128xf32>
    %401 = arith.addf %398, %400 : vector<16x128xf32>
    %cst_158 = arith.constant 0.000000e+00 : f32
    %402 = vector.broadcast %cst_158 : f32 to vector<16x128xf32>
    %403 = arith.maximumf %401, %402 : vector<16x128xf32>
    %c0_159 = arith.constant 0 : index
    %c0_160 = arith.constant 0 : index
    %404 = vector.load %arg9[%c0_159, %c0_160] : memref<128x32xf32, #tpu.memory_space<vmem>>, vector<128x32xf32>
    %cst_161 = arith.constant dense<0.000000e+00> : vector<16x32xf32>
    %405 = tpu.matmul %403, %404, %cst_161 {dimension_numbers = #tpu.dot_dimension_numbers<[1], [0], [0], [1], [0, 0, 1, 1], [], []>} : vector<16x128xf32>, vector<128x32xf32>, vector<16x32xf32> -> vector<16x32xf32>
    %c0_162 = arith.constant 0 : index
    %c0_163 = arith.constant 0 : index
    %406 = vector.load %arg10[%c0_162, %c0_163] : memref<1x32xf32, #tpu.memory_space<vmem>>, vector<1x32xf32>
    %407 = vector.broadcast %406 : vector<1x32xf32> to vector<16x32xf32>
    %408 = arith.addf %405, %407 : vector<16x32xf32>
    %409 = arith.addf %396, %408 : vector<16x32xf32>
    %c0_164 = arith.constant 0 : index
    %c0_165 = arith.constant 0 : index
    %410 = vector.load %arg11[%c0_164, %c0_165] : memref<1x32xf32, #tpu.memory_space<vmem>>, vector<1x32xf32>
    %c0_166 = arith.constant 0 : index
    %c0_167 = arith.constant 0 : index
    %411 = vector.load %arg12[%c0_166, %c0_167] : memref<1x32xf32, #tpu.memory_space<vmem>>, vector<1x32xf32>
    %cst_168 = arith.constant dense<0.000000e+00> : vector<16xf32>
    %412 = vector.multi_reduction <add>, %409, %cst_168 [1] : vector<16x32xf32> to vector<16xf32>
    %413 = vector.shape_cast %412 : vector<16xf32> to vector<16x1xf32>
    %cst_169 = arith.constant 3.200000e+01 : f32
    %414 = vector.broadcast %cst_169 : f32 to vector<16x1xf32>
    %415 = arith.divf %413, %414 : vector<16x1xf32>
    %416 = vector.broadcast %415 : vector<16x1xf32> to vector<16x32xf32>
    %417 = arith.subf %409, %416 : vector<16x32xf32>
    %418 = arith.mulf %417, %417 : vector<16x32xf32>
    %cst_170 = arith.constant dense<0.000000e+00> : vector<16xf32>
    %419 = vector.multi_reduction <add>, %418, %cst_170 [1] : vector<16x32xf32> to vector<16xf32>
    %420 = vector.shape_cast %419 : vector<16xf32> to vector<16x1xf32>
    %cst_171 = arith.constant 3.200000e+01 : f32
    %421 = vector.broadcast %cst_171 : f32 to vector<16x1xf32>
    %422 = arith.divf %420, %421 : vector<16x1xf32>
    %cst_172 = arith.constant 9.99999974E-6 : f32
    %423 = vector.broadcast %cst_172 : f32 to vector<16x1xf32>
    %424 = arith.addf %422, %423 : vector<16x1xf32>
    %425 = math.rsqrt %424 : vector<16x1xf32>
    %426 = vector.broadcast %415 : vector<16x1xf32> to vector<16x32xf32>
    %427 = arith.subf %409, %426 : vector<16x32xf32>
    %428 = vector.broadcast %425 : vector<16x1xf32> to vector<16x32xf32>
    %429 = arith.mulf %427, %428 : vector<16x32xf32>
    %430 = vector.broadcast %410 : vector<1x32xf32> to vector<16x32xf32>
    %431 = arith.mulf %429, %430 : vector<16x32xf32>
    %432 = vector.broadcast %411 : vector<1x32xf32> to vector<16x32xf32>
    %433 = arith.addf %431, %432 : vector<16x32xf32>
    %c0_173 = arith.constant 0 : index
    %c0_174 = arith.constant 0 : index
    %434 = vector.load %arg13[%c0_173, %c0_174] : memref<16x32xf32, #tpu.memory_space<vmem>>, vector<16x32xf32>
    tpu.vector_store %arg13[%c0_173, %c0_174], %433 {strides = array<i32>} : memref<16x32xf32, #tpu.memory_space<vmem>>, vector<16x32xf32>,
    return
  }
  func.func @transform_0(%arg0: i32) -> (i32, i32) {
    %c0_i32 = arith.constant 0 : i32
    %c0_i32_0 = arith.constant 0 : i32
    return %arg0, %c0_i32 : i32, i32
  }
  func.func @transform_1(%arg0: i32) -> (i32, i32) {
    %c0_i32 = arith.constant 0 : i32
    %c0_i32_0 = arith.constant 0 : i32
    %c0_i32_1 = arith.constant 0 : i32
    return %c0_i32, %c0_i32_0 : i32, i32
  }
  func.func @transform_2(%arg0: i32) -> (i32, i32, i32) {
    %c0_i32 = arith.constant 0 : i32
    %c0_i32_0 = arith.constant 0 : i32
    %c0_i32_1 = arith.constant 0 : i32
    %c0_i32_2 = arith.constant 0 : i32
    return %c0_i32, %c0_i32_0, %c0_i32_1 : i32, i32, i32
  }
  func.func @transform_3(%arg0: i32) -> (i32, i32) {
    %c0_i32 = arith.constant 0 : i32
    %c0_i32_0 = arith.constant 0 : i32
    %c0_i32_1 = arith.constant 0 : i32
    return %c0_i32, %c0_i32_0 : i32, i32
  }
  func.func @transform_4(%arg0: i32) -> (i32, i32) {
    %c0_i32 = arith.constant 0 : i32
    %c0_i32_0 = arith.constant 0 : i32
    %c0_i32_1 = arith.constant 0 : i32
    return %c0_i32, %c0_i32_0 : i32, i32
  }
  func.func @transform_5(%arg0: i32) -> (i32, i32) {
    %c0_i32 = arith.constant 0 : i32
    %c0_i32_0 = arith.constant 0 : i32
    %c0_i32_1 = arith.constant 0 : i32
    return %c0_i32, %c0_i32_0 : i32, i32
  }
  func.func @transform_6(%arg0: i32) -> (i32, i32) {
    %c0_i32 = arith.constant 0 : i32
    %c0_i32_0 = arith.constant 0 : i32
    %c0_i32_1 = arith.constant 0 : i32
    return %c0_i32, %c0_i32_0 : i32, i32
  }
  func.func @transform_7(%arg0: i32) -> (i32, i32) {
    %c0_i32 = arith.constant 0 : i32
    %c0_i32_0 = arith.constant 0 : i32
    %c0_i32_1 = arith.constant 0 : i32
    return %c0_i32, %c0_i32_0 : i32, i32
  }
  func.func @transform_8(%arg0: i32) -> (i32, i32) {
    %c0_i32 = arith.constant 0 : i32
    %c0_i32_0 = arith.constant 0 : i32
    %c0_i32_1 = arith.constant 0 : i32
    return %c0_i32, %c0_i32_0 : i32, i32
  }
  func.func @transform_9(%arg0: i32) -> (i32, i32) {
    %c0_i32 = arith.constant 0 : i32
    %c0_i32_0 = arith.constant 0 : i32
    %c0_i32_1 = arith.constant 0 : i32
    return %c0_i32, %c0_i32_0 : i32, i32
  }
  func.func @transform_10(%arg0: i32) -> (i32, i32) {
    %c0_i32 = arith.constant 0 : i32
    %c0_i32_0 = arith.constant 0 : i32
    %c0_i32_1 = arith.constant 0 : i32
    return %c0_i32, %c0_i32_0 : i32, i32
  }
  func.func @transform_11(%arg0: i32) -> (i32, i32) {
    %c0_i32 = arith.constant 0 : i32
    %c0_i32_0 = arith.constant 0 : i32
    %c0_i32_1 = arith.constant 0 : i32
    return %c0_i32, %c0_i32_0 : i32, i32
  }
  func.func @transform_12(%arg0: i32) -> (i32, i32) {
    %c0_i32 = arith.constant 0 : i32
    %c0_i32_0 = arith.constant 0 : i32
    return %arg0, %c0_i32 : i32, i32
  }
}

</mosaic_0001>

<llo_original>
// kernel: tpu_custom_call.1
$region0: #{tpu_custom_call.1}
  #allocation0 [shape = 'u32[]', space=smem, size = 0x4, offset = 0x4, fixed_abs, tag = 'smem constant byte address 0x4 - core index']
  #allocation1 [shape = 'u32[144,128]{1,0:T(1,128)}', space=vmem, size = 0x12000, scoped, tag = 'internal scratch']
  %s0 = inlined_call_operand.vmem [shape: f32[16,32], index: 0, kind: input, shape index: {}]
  %s1 = inlined_call_operand.hbm [shape: f32[32,768], index: 1, kind: input, shape index: {}]
  %s2 = inlined_call_operand.hbm [shape: f32[8,32,32], index: 2, kind: input, shape index: {}]
  %s3 = inlined_call_operand.vmem [shape: f32[1,32], index: 3, kind: input, shape index: {}]
  %s4 = inlined_call_operand.vmem [shape: f32[1,32], index: 4, kind: input, shape index: {}]
  %s5 = inlined_call_operand.vmem [shape: f32[1,32], index: 5, kind: input, shape index: {}]
  %s6 = inlined_call_operand.vmem [shape: f32[32,128], index: 6, kind: input, shape index: {}]
  %s7 = inlined_call_operand.vmem [shape: f32[1,128], index: 7, kind: input, shape index: {}]
  %s8 = inlined_call_operand.vmem [shape: f32[128,32], index: 8, kind: input, shape index: {}]
  %s9 = inlined_call_operand.vmem [shape: f32[1,32], index: 9, kind: input, shape index: {}]
  %s10 = inlined_call_operand.vmem [shape: f32[1,32], index: 10, kind: input, shape index: {}]
  %s11 = inlined_call_operand.vmem [shape: f32[1,32], index: 11, kind: input, shape index: {}]
  %s12 = inlined_call_operand.hbm [shape: f32[16,32], index: 12, kind: output, shape index: {}]
  %s13 = sld [smem:[#allocation0]]
  $region66: #{tpu_custom_call.1} parent=0
    _
  %s15 = ssub.s32 1, %s13
  %s16 = scalar_select 0, %s15, %s13
  $region1: #{tpu_custom_call.1} parent=0
    #allocation2 [shape = 'u8[98304]{0}', space=vmem, size = 0x18000, scoped, tag = 'input window, operand 1, single buffered']
    #allocation3 [shape = 's32[1]{0}', space=sflag, size = 0x4, scoped, tag = 'scoped memory for tpu_custom_call.1']
    #allocation4 [shape = 's32[1]{0}', space=sflag, size = 0x4, scoped, tag = 'scoped memory for tpu_custom_call.1']
    #allocation5 [shape = 'u8[131072]{0}', space=vmem, size = 0x20000, scoped, tag = 'input window, operand 2, single buffered']
    #allocation6 [shape = 's32[1]{0}', space=sflag, size = 0x4, scoped, tag = 'scoped memory for tpu_custom_call.1']
    #allocation7 [shape = 'u8[8192]{0}', space=vmem, size = 0x2000, scoped, tag = 'output window, operand 0, single buffered']
    %17 = vsyncpa [#allocation3], 0
    %18 = vsyncpa [#allocation6], 0
    %19 = vsyncpa [#allocation4], 0
    // Predicated region
    $region2: #{tpu_custom_call.1} parent=1 // pred_check
      _
    $region3: #{tpu_custom_call.1} parent=1 // pred_check_branch
      %21 = sbr.rel (0) target = $region5
    $region4: #{tpu_custom_call.1} parent=1 // pred_region
      _
    $region5: #{tpu_custom_call.1} parent=1 // pred_fallthru
      _
    // Predicated region
    $region6: #{tpu_custom_call.1} parent=1 // pred_check
      _
    $region7: #{tpu_custom_call.1} parent=1 // pred_check_branch
      %23 = sbr.rel (0) target = $region9
    $region8: #{tpu_custom_call.1} parent=1 // pred_region
      %s25 = ssub.s32 3072, 3072
      %26 = vsyncadd [#allocation3], %s25
      %s27 = sshll.u32 [#allocation2], 4
      %s28 = int_to_ptr.vmem [resolvable:$true] %s27
      %33 = dma.hbm_to_vmem [thread:$0]  %s1, 3072, %s28, [#allocation3], 768, 768, 48
    $region9: #{tpu_custom_call.1} parent=1 // pred_fallthru
      _
    // Predicated region
    $region10: #{tpu_custom_call.1} parent=1 // pred_check
      _
    $region11: #{tpu_custom_call.1} parent=1 // pred_check_branch
      %35 = sbr.rel (0) target = $region13
    $region12: #{tpu_custom_call.1} parent=1 // pred_region
      %s37 = ssub.s32 4096, 4096
      %38 = vsyncadd [#allocation6], %s37
      %s39 = sshll.u32 [#allocation5], 4
      %s40 = int_to_ptr.vmem [resolvable:$true] %s39
      %45 = dma.hbm_to_vmem [thread:$0]  %s2, 4096, %s40, [#allocation6], 128, 128, 8
    $region13: #{tpu_custom_call.1} parent=1 // pred_fallthru
      _
    // Predicated region
    $region14: #{tpu_custom_call.1} parent=1 // pred_check
      _
    $region15: #{tpu_custom_call.1} parent=1 // pred_check_branch
      %47 = sbr.rel (0) target = $region17
    $region16: #{tpu_custom_call.1} parent=1 // pred_region
      _
    $region17: #{tpu_custom_call.1} parent=1 // pred_fallthru
      _
    // Predicated region
    $region18: #{tpu_custom_call.1} parent=1 // pred_check
      _
    $region19: #{tpu_custom_call.1} parent=1 // pred_check_branch
      %49 = sbr.rel (0) target = $region21
    $region20: #{tpu_custom_call.1} parent=1 // pred_region
      _
    $region21: #{tpu_custom_call.1} parent=1 // pred_fallthru
      _
    // Predicated region
    $region22: #{tpu_custom_call.1} parent=1 // pred_check
      _
    $region23: #{tpu_custom_call.1} parent=1 // pred_check_branch
      %51 = sbr.rel (0) target = $region25
    $region24: #{tpu_custom_call.1} parent=1 // pred_region
      _
    $region25: #{tpu_custom_call.1} parent=1 // pred_fallthru
      _
    // Predicated region
    $region26: #{tpu_custom_call.1} parent=1 // pred_check
      _
    $region27: #{tpu_custom_call.1} parent=1 // pred_check_branch
      %53 = sbr.rel (0) target = $region29
    $region28: #{tpu_custom_call.1} parent=1 // pred_region
      _
    $region29: #{tpu_custom_call.1} parent=1 // pred_fallthru
      _
    // Predicated region
    $region30: #{tpu_custom_call.1} parent=1 // pred_check
      _
    $region31: #{tpu_custom_call.1} parent=1 // pred_check_branch
      %55 = sbr.rel (0) target = $region33
    $region32: #{tpu_custom_call.1} parent=1 // pred_region
      _
    $region33: #{tpu_custom_call.1} parent=1 // pred_fallthru
      _
    // Predicated region
    $region34: #{tpu_custom_call.1} parent=1 // pred_check
      _
    $region35: #{tpu_custom_call.1} parent=1 // pred_check_branch
      %57 = sbr.rel (0) target = $region37
    $region36: #{tpu_custom_call.1} parent=1 // pred_region
      _
    $region37: #{tpu_custom_call.1} parent=1 // pred_fallthru
      _
    // Predicated region
    $region38: #{tpu_custom_call.1} parent=1 // pred_check
      _
    $region39: #{tpu_custom_call.1} parent=1 // pred_check_branch
      %59 = sbr.rel (0) target = $region41
    $region40: #{tpu_custom_call.1} parent=1 // pred_region
      _
    $region41: #{tpu_custom_call.1} parent=1 // pred_fallthru
      _
    // Predicated region
    $region42: #{tpu_custom_call.1} parent=1 // pred_check
      _
    $region43: #{tpu_custom_call.1} parent=1 // pred_check_branch
      %61 = sbr.rel (0) target = $region45
    $region44: #{tpu_custom_call.1} parent=1 // pred_region
      _
    $region45: #{tpu_custom_call.1} parent=1 // pred_fallthru
      _
    // Predicated region
    $region46: #{tpu_custom_call.1} parent=1 // pred_check
      _
    $region47: #{tpu_custom_call.1} parent=1 // pred_check_branch
      %63 = sbr.rel (0) target = $region49
    $region48: #{tpu_custom_call.1} parent=1 // pred_region
      _
    $region49: #{tpu_custom_call.1} parent=1 // pred_fallthru
      _
    // Predicated region
    $region50: #{tpu_custom_call.1} parent=1 // pred_check
      _
    $region51: #{tpu_custom_call.1} parent=1 // pred_check_branch
      %65 = sbr.rel (0) target = $region53
    $region52: #{tpu_custom_call.1} parent=1 // pred_region
      %66 = dma.done [#allocation3], 3072
    $region53: #{tpu_custom_call.1} parent=1 // pred_fallthru
      _
    // Predicated region
    $region54: #{tpu_custom_call.1} parent=1 // pred_check
      _
    $region55: #{tpu_custom_call.1} parent=1 // pred_check_branch
      %68 = sbr.rel (0) target = $region57
    $region56: #{tpu_custom_call.1} parent=1 // pred_region
      %69 = dma.done [#allocation6], 4096
    $region57: #{tpu_custom_call.1} parent=1 // pred_fallthru
      _
    %v70 = vld [vmem:[%s0] sm:$0xff]
    %v71 = vld [vmem:[%s0 + $0x8] sm:$0xff]
    %v72 = vld [vmem:[#allocation2] sm:$0xff]
    %v73 = vld [vmem:[#allocation2 + $0x8] sm:$0xff]
    %v74 = vld [vmem:[#allocation2 + $0x10] sm:$0xff]
    %v75 = vld [vmem:[#allocation2 + $0x18] sm:$0xff]
    %v76 = vld [vmem:[#allocation2 + $0x20] sm:$0xff]
    %v77 = vld [vmem:[#allocation2 + $0x28] sm:$0xff]
    %v78 = vld [vmem:[#allocation2 + $0x30] sm:$0xff]
    %v79 = vld [vmem:[#allocation2 + $0x38] sm:$0xff]
    %v80 = vld [vmem:[#allocation2 + $0x40] sm:$0xff]
    %v81 = vld [vmem:[#allocation2 + $0x48] sm:$0xff]
    %v82 = vld [vmem:[#allocation2 + $0x50] sm:$0xff]
    %v83 = vld [vmem:[#allocation2 + $0x58] sm:$0xff]
    %v84 = vld [vmem:[#allocation2 + $0x60] sm:$0xff]
    %v85 = vld [vmem:[#allocation2 + $0x68] sm:$0xff]
    %v86 = vld [vmem:[#allocation2 + $0x70] sm:$0xff]
    %v87 = vld [vmem:[#allocation2 + $0x78] sm:$0xff]
    %v88 = vld [vmem:[#allocation2 + $0x80] sm:$0xff]
    %v89 = vld [vmem:[#allocation2 + $0x88] sm:$0xff]
    %v90 = vld [vmem:[#allocation2 + $0x90] sm:$0xff]
    %v91 = vld [vmem:[#allocation2 + $0x98] sm:$0xff]
    %v92 = vld [vmem:[#allocation2 + $0xa0] sm:$0xff]
    %v93 = vld [vmem:[#allocation2 + $0xa8] sm:$0xff]
    %v94 = vld [vmem:[#allocation2 + $0xb0] sm:$0xff]
    %v95 = vld [vmem:[#allocation2 + $0xb8] sm:$0xff]
    %vm96 = vcmask 261120
    %v98 = vsel %vm96, %v70, 0
    %v101 = vsel %vm96, %v71, 0
    %103 = vmatprep.subr.mxu0 %v73
    %104 = vmatpush1.msra.mxu0 %v72
    %105 = vmatprep.subr.mxu0 %v79
    %106 = vmatpush1.msra.mxu0 %v78
    %107 = vmatprep.subr.mxu0 %v85
    %108 = vmatpush1.msra.mxu0 %v84
    %109 = vmatprep.subr.mxu0 %v91
    %110 = vmatpush1.msra.mxu0 %v90
    %111 = vmatprep.subr.mxu0 0.0
    %112 = vmatpush1.msra.mxu0 0.0
    %113 = vmatprep.subr.mxu0 0.0
    %114 = vmatpush1.msra.mxu0 0.0
    %115 = vmatprep.subr.mxu0 0.0
    %116 = vmatpush1.msra.mxu0 0.0
    %117 = vmatprep.subr.mxu0 0.0
    %118 = vmatpush1.msra.mxu0 0.0
    %119 = vmatprep.subr.mxu0 0.0
    %120 = vmatpush1.msra.mxu0 0.0
    %121 = vmatprep.subr.mxu0 0.0
    %122 = vmatpush1.msra.mxu0 0.0
    %123 = vmatprep.subr.mxu0 0.0
    %124 = vmatpush1.msra.mxu0 0.0
    %125 = vmatprep.subr.mxu0 0.0
    %126 = vmatpush1.msra.mxu0 0.0
    %127 = vmatprep.subr.mxu0 0.0
    %128 = vmatpush1.msra.mxu0 0.0
    %129 = vmatprep.subr.mxu0 0.0
    %130 = vmatpush1.msra.mxu0 0.0
    %131 = vmatprep.subr.mxu0 0.0
    %132 = vmatpush1.msra.mxu0 0.0
    %133 = vmatprep.subr.mxu0 0.0
    %134 = vmatpush1.msra.mxu0 0.0
    %135 = vmatprep.subr.mxu0 0.0
    %136 = vmatpush1.msra.mxu0 0.0
    %137 = vmatprep.subr.mxu0 0.0
    %138 = vmatpush1.msra.mxu0 0.0
    %139 = vmatprep.subr.mxu0 0.0
    %140 = vmatpush1.msra.mxu0 0.0
    %141 = vmatprep.subr.mxu0 0.0
    %142 = vmatpush1.msra.mxu0 0.0
    %143 = vmatprep.subr.mxu0 0.0
    %144 = vmatpush1.msra.mxu0 0.0
    %145 = vmatprep.subr.mxu0 0.0
    %146 = vmatpush1.msra.mxu0 0.0
    %147 = vmatprep.subr.mxu0 0.0
    %148 = vmatpush1.msra.mxu0 0.0
    %149 = vmatprep.subr.mxu0 0.0
    %150 = vmatpush1.msra.mxu0 0.0
    %151 = vmatprep.subr.mxu0 0.0
    %152 = vmatpush1.msra.mxu0 0.0
    %153 = vmatprep.subr.mxu0 0.0
    %154 = vmatpush1.msra.mxu0 0.0
    %155 = vmatprep.subr.mxu0 0.0
    %156 = vmatpush1.msra.mxu0 0.0
    %157 = vmatprep.subr.mxu0 0.0
    %158 = vmatpush1.msra.mxu0 0.0
    %159 = vmatprep.subr.mxu0 0.0
    %160 = vmatpush1.msra.mxu0 0.0
    %161 = vmatprep.subr.mxu0 0.0
    %162 = vmatpush1.msra.mxu0 0.0
    %163 = vmatprep.subr.mxu0 0.0
    %164 = vmatpush1.msra.mxu0 0.0
    %165 = vmatprep.subr.mxu0 0.0
    %166 = vmatpush1.msra.mxu0 0.0
    %167 = vmatprep.mubr.f32.mxu0 0.0
    %168 = vmatmul.mubr.f32.gmra.mrb[0].mxu0 %v98
    %v169 = vpop.f32.mrb[0].mxu0
    %v170 = vadd.f32 0.0, %v169
    %v171 = vpop.f32.mrb[0].mxu0
    %v172 = vadd.f32 0.0, %v171
    %173 = vmatprep.mubr.f32.mxu0 0.0
    %174 = vmatmul.mubr.f32.gmra.mrb[0].mxu0 %v101
    %v175 = vpop.f32.mrb[0].mxu0
    %v176 = vadd.f32 0.0, %v175
    %v177 = vpop.f32.mrb[0].mxu0
    %v178 = vadd.f32 0.0, %v177
    %179 = vdwg.mxu0
    %180 = vmatprep.subr.mxu0 %v75
    %181 = vmatpush1.msra.mxu0 %v74
    %182 = vmatprep.subr.mxu0 %v81
    %183 = vmatpush1.msra.mxu0 %v80
    %184 = vmatprep.subr.mxu0 %v87
    %185 = vmatpush1.msra.mxu0 %v86
    %186 = vmatprep.subr.mxu0 %v93
    %187 = vmatpush1.msra.mxu0 %v92
    %188 = vmatprep.subr.mxu0 0.0
    %189 = vmatpush1.msra.mxu0 0.0
    %190 = vmatprep.subr.mxu0 0.0
    %191 = vmatpush1.msra.mxu0 0.0
    %192 = vmatprep.subr.mxu0 0.0
    %193 = vmatpush1.msra.mxu0 0.0
    %194 = vmatprep.subr.mxu0 0.0
    %195 = vmatpush1.msra.mxu0 0.0
    %196 = vmatprep.subr.mxu0 0.0
    %197 = vmatpush1.msra.mxu0 0.0
    %198 = vmatprep.subr.mxu0 0.0
    %199 = vmatpush1.msra.mxu0 0.0
    %200 = vmatprep.subr.mxu0 0.0
    %201 = vmatpush1.msra.mxu0 0.0
    %202 = vmatprep.subr.mxu0 0.0
    %203 = vmatpush1.msra.mxu0 0.0
    %204 = vmatprep.subr.mxu0 0.0
    %205 = vmatpush1.msra.mxu0 0.0
    %206 = vmatprep.subr.mxu0 0.0
    %207 = vmatpush1.msra.mxu0 0.0
    %208 = vmatprep.subr.mxu0 0.0
    %209 = vmatpush1.msra.mxu0 0.0
    %210 = vmatprep.subr.mxu0 0.0
    %211 = vmatpush1.msra.mxu0 0.0
    %212 = vmatprep.subr.mxu0 0.0
    %213 = vmatpush1.msra.mxu0 0.0
    %214 = vmatprep.subr.mxu0 0.0
    %215 = vmatpush1.msra.mxu0 0.0
    %216 = vmatprep.subr.mxu0 0.0
    %217 = vmatpush1.msra.mxu0 0.0
    %218 = vmatprep.subr.mxu0 0.0
    %219 = vmatpush1.msra.mxu0 0.0
    %220 = vmatprep.subr.mxu0 0.0
    %221 = vmatpush1.msra.mxu0 0.0
    %222 = vmatprep.subr.mxu0 0.0
    %223 = vmatpush1.msra.mxu0 0.0
    %224 = vmatprep.subr.mxu0 0.0
    %225 = vmatpush1.msra.mxu0 0.0
    %226 = vmatprep.subr.mxu0 0.0
    %227 = vmatpush1.msra.mxu0 0.0
    %228 = vmatprep.subr.mxu0 0.0
    %229 = vmatpush1.msra.mxu0 0.0
    %230 = vmatprep.subr.mxu0 0.0
    %231 = vmatpush1.msra.mxu0 0.0
    %232 = vmatprep.subr.mxu0 0.0
    %233 = vmatpush1.msra.mxu0 0.0
    %234 = vmatprep.subr.mxu0 0.0
    %235 = vmatpush1.msra.mxu0 0.0
    %236 = vmatprep.subr.mxu0 0.0
    %237 = vmatpush1.msra.mxu0 0.0
    %238 = vmatprep.subr.mxu0 0.0
    %239 = vmatpush1.msra.mxu0 0.0
    %240 = vmatprep.subr.mxu0 0.0
    %241 = vmatpush1.msra.mxu0 0.0
    %242 = vmatprep.subr.mxu0 0.0
    %243 = vmatpush1.msra.mxu0 0.0
    %244 = vmatprep.mubr.f32.mxu0 0.0
    %245 = vmatmul.mubr.f32.gmra.mrb[0].mxu0 %v98
    %v246 = vpop.f32.mrb[0].mxu0
    %v247 = vadd.f32 0.0, %v246
    %v248 = vpop.f32.mrb[0].mxu0
    %v249 = vadd.f32 0.0, %v248
    %250 = vmatprep.mubr.f32.mxu0 0.0
    %251 = vmatmul.mubr.f32.gmra.mrb[0].mxu0 %v101
    %v252 = vpop.f32.mrb[0].mxu0
    %v253 = vadd.f32 0.0, %v252
    %v254 = vpop.f32.mrb[0].mxu0
    %v255 = vadd.f32 0.0, %v254
    %256 = vdwg.mxu0
    %257 = vmatprep.subr.mxu0 %v77
    %258 = vmatpush1.msra.mxu0 %v76
    %259 = vmatprep.subr.mxu0 %v83
    %260 = vmatpush1.msra.mxu0 %v82
    %261 = vmatprep.subr.mxu0 %v89
    %262 = vmatpush1.msra.mxu0 %v88
    %263 = vmatprep.subr.mxu0 %v95
    %264 = vmatpush1.msra.mxu0 %v94
    %265 = vmatprep.subr.mxu0 0.0
    %266 = vmatpush1.msra.mxu0 0.0
    %267 = vmatprep.subr.mxu0 0.0
    %268 = vmatpush1.msra.mxu0 0.0
    %269 = vmatprep.subr.mxu0 0.0
    %270 = vmatpush1.msra.mxu0 0.0
    %271 = vmatprep.subr.mxu0 0.0
    %272 = vmatpush1.msra.mxu0 0.0
    %273 = vmatprep.subr.mxu0 0.0
    %274 = vmatpush1.msra.mxu0 0.0
    %275 = vmatprep.subr.mxu0 0.0
    %276 = vmatpush1.msra.mxu0 0.0
    %277 = vmatprep.subr.mxu0 0.0
    %278 = vmatpush1.msra.mxu0 0.0
    %279 = vmatprep.subr.mxu0 0.0
    %280 = vmatpush1.msra.mxu0 0.0
    %281 = vmatprep.subr.mxu0 0.0
    %282 = vmatpush1.msra.mxu0 0.0
    %283 = vmatprep.subr.mxu0 0.0
    %284 = vmatpush1.msra.mxu0 0.0
    %285 = vmatprep.subr.mxu0 0.0
    %286 = vmatpush1.msra.mxu0 0.0
    %287 = vmatprep.subr.mxu0 0.0
    %288 = vmatpush1.msra.mxu0 0.0
    %289 = vmatprep.subr.mxu0 0.0
    %290 = vmatpush1.msra.mxu0 0.0
    %291 = vmatprep.subr.mxu0 0.0
    %292 = vmatpush1.msra.mxu0 0.0
    %293 = vmatprep.subr.mxu0 0.0
    %294 = vmatpush1.msra.mxu0 0.0
    %295 = vmatprep.subr.mxu0 0.0
    %296 = vmatpush1.msra.mxu0 0.0
    %297 = vmatprep.subr.mxu0 0.0
    %298 = vmatpush1.msra.mxu0 0.0
    %299 = vmatprep.subr.mxu0 0.0
    %300 = vmatpush1.msra.mxu0 0.0
    %301 = vmatprep.subr.mxu0 0.0
    %302 = vmatpush1.msra.mxu0 0.0
    %303 = vmatprep.subr.mxu0 0.0
    %304 = vmatpush1.msra.mxu0 0.0
    %305 = vmatprep.subr.mxu0 0.0
    %306 = vmatpush1.msra.mxu0 0.0
    %307 = vmatprep.subr.mxu0 0.0
    %308 = vmatpush1.msra.mxu0 0.0
    %309 = vmatprep.subr.mxu0 0.0
    %310 = vmatpush1.msra.mxu0 0.0
    %311 = vmatprep.subr.mxu0 0.0
    %312 = vmatpush1.msra.mxu0 0.0
    %313 = vmatprep.subr.mxu0 0.0
    %314 = vmatpush1.msra.mxu0 0.0
    %315 = vmatprep.subr.mxu0 0.0
    %316 = vmatpush1.msra.mxu0 0.0
    %317 = vmatprep.subr.mxu0 0.0
    %318 = vmatpush1.msra.mxu0 0.0
    %319 = vmatprep.subr.mxu0 0.0
    %320 = vmatpush1.msra.mxu0 0.0
    %321 = vmatprep.mubr.f32.mxu0 0.0
    %322 = vmatmul.mubr.f32.gmra.mrb[0].mxu0 %v98
    %v323 = vpop.f32.mrb[0].mxu0
    %v324 = vadd.f32 0.0, %v323
    %v325 = vpop.f32.mrb[0].mxu0
    %v326 = vadd.f32 0.0, %v325
    %327 = vmatprep.mubr.f32.mxu0 0.0
    %328 = vmatmul.mubr.f32.gmra.mrb[0].mxu0 %v101
    %v329 = vpop.f32.mrb[0].mxu0
    %v330 = vadd.f32 0.0, %v329
    %v331 = vpop.f32.mrb[0].mxu0
    %v332 = vadd.f32 0.0, %v331
    %333 = vdwg.mxu0
    %v334 = vld [vmem:[%s3] sm:$0x1]
    %v336 = vsel %vm96, %v170, 0
    %v339 = vsel %vm96, %v247, 0
    %341 = vmatprep.subr.mxu0 0.0
    %342 = vmatpush1.xpose.msra.mxu0 %v339
    %343 = vmatprep.subr.mxu0 0.0
    %344 = vmatpush1.xpose.msra.mxu0 0.0
    %345 = vmatprep.subr.mxu0 0.0
    %346 = vmatpush1.xpose.msra.mxu0 0.0
    %347 = vmatprep.subr.mxu0 0.0
    %348 = vmatpush1.xpose.msra.mxu0 0.0
    %349 = vmatprep.subr.mxu0 0.0
    %350 = vmatpush1.xpose.msra.mxu0 0.0
    %351 = vmatprep.subr.mxu0 0.0
    %352 = vmatpush1.xpose.msra.mxu0 0.0
    %353 = vmatprep.subr.mxu0 0.0
    %354 = vmatpush1.xpose.msra.mxu0 0.0
    %355 = vmatprep.subr.mxu0 0.0
    %356 = vmatpush1.xpose.msra.mxu0 0.0
    %357 = vmatprep.subr.mxu0 0.0
    %358 = vmatpush1.xpose.msra.mxu0 0.0
    %359 = vmatprep.subr.mxu0 0.0
    %360 = vmatpush1.xpose.msra.mxu0 0.0
    %361 = vmatprep.subr.mxu0 0.0
    %362 = vmatpush1.xpose.msra.mxu0 0.0
    %363 = vmatprep.subr.mxu0 0.0
    %364 = vmatpush1.xpose.msra.mxu0 0.0
    %365 = vmatprep.subr.mxu0 0.0
    %366 = vmatpush1.xpose.msra.mxu0 0.0
    %367 = vmatprep.subr.mxu0 0.0
    %368 = vmatpush1.xpose.msra.mxu0 0.0
    %369 = vmatprep.subr.mxu0 0.0
    %370 = vmatpush1.xpose.msra.mxu0 0.0
    %371 = vmatprep.subr.mxu0 0.0
    %372 = vmatpush1.xpose.msra.mxu0 0.0
    %373 = vmatprep.subr.mxu0 0.0
    %374 = vmatpush1.xpose.msra.mxu0 0.0
    %375 = vmatprep.subr.mxu0 0.0
    %376 = vmatpush1.xpose.msra.mxu0 0.0
    %377 = vmatprep.subr.mxu0 0.0
    %378 = vmatpush1.xpose.msra.mxu0 0.0
    %379 = vmatprep.subr.mxu0 0.0
    %380 = vmatpush1.xpose.msra.mxu0 0.0
    %381 = vmatprep.subr.mxu0 0.0
    %382 = vmatpush1.xpose.msra.mxu0 0.0
    %383 = vmatprep.subr.mxu0 0.0
    %384 = vmatpush1.xpose.msra.mxu0 0.0
    %385 = vmatprep.subr.mxu0 0.0
    %386 = vmatpush1.xpose.msra.mxu0 0.0
    %387 = vmatprep.subr.mxu0 0.0
    %388 = vmatpush1.xpose.msra.mxu0 0.0
    %389 = vmatprep.subr.mxu0 0.0
    %390 = vmatpush1.xpose.msra.mxu0 0.0
    %391 = vmatprep.subr.mxu0 0.0
    %392 = vmatpush1.xpose.msra.mxu0 0.0
    %393 = vmatprep.subr.mxu0 0.0
    %394 = vmatpush1.xpose.msra.mxu0 0.0
    %395 = vmatprep.subr.mxu0 0.0
    %396 = vmatpush1.xpose.msra.mxu0 0.0
    %397 = vmatprep.subr.mxu0 0.0
    %398 = vmatpush1.xpose.msra.mxu0 0.0
    %399 = vmatprep.subr.mxu0 0.0
    %400 = vmatpush1.xpose.msra.mxu0 0.0
    %401 = vmatprep.subr.mxu0 0.0
    %402 = vmatpush1.xpose.msra.mxu0 0.0
    %403 = vmatprep.subr.mxu0 0.0
    %404 = vmatpush1.xpose.msra.mxu0 0.0
    %405 = vmatprep.mubr.f32.mxu0 0.0
    %406 = vmatmul.mubr.f32.gmra.mrb[0].mxu0 %v336
    %v407 = vpop.f32.mrb[0].mxu0
    %v408 = vadd.f32 0.0, %v407
    %v409 = vpop.f32.mrb[0].mxu0
    %410 = vdwg.mxu0
    %v411 = vmul.f32 %v408, 0.17677669
    %vm412 = vcmask 64512
    %v413 = vsel %vm412, %v411, -inf
    %414 = vmax.xlane.f32.xlu0 %v413
    %v415 = vpop.xlane.xlu0 %414
    %v416 = vsub.f32 %v411, %v415
    %v417 = vmul.f32 %v416, 1.442695
    %v418 = vpow.pop %v417
    %v419 = vsel %vm412, %v418, 0.0
    %420 = vadd.xlane.f32.xlu0 %v419
    %v421 = vpop.xlane.xlu0 %420
    %v422 = vrcp.pop %v421
    %v423 = vmul.f32 %v418, %v422
    %v425 = vsel %vm412, %v423, 0
    %427 = vmatprep.subr.mxu0 0.0
    %428 = vmatpush1.msra.mxu0 %v324
    %429 = vmatprep.subr.mxu0 0.0
    %430 = vmatpush1.msra.mxu0 0.0
    %431 = vmatprep.subr.mxu0 0.0
    %432 = vmatpush1.msra.mxu0 0.0
    %433 = vmatprep.subr.mxu0 0.0
    %434 = vmatpush1.msra.mxu0 0.0
    %435 = vmatprep.subr.mxu0 0.0
    %436 = vmatpush1.msra.mxu0 0.0
    %437 = vmatprep.subr.mxu0 0.0
    %438 = vmatpush1.msra.mxu0 0.0
    %439 = vmatprep.subr.mxu0 0.0
    %440 = vmatpush1.msra.mxu0 0.0
    %441 = vmatprep.subr.mxu0 0.0
    %442 = vmatpush1.msra.mxu0 0.0
    %443 = vmatprep.subr.mxu0 0.0
    %444 = vmatpush1.msra.mxu0 0.0
    %445 = vmatprep.subr.mxu0 0.0
    %446 = vmatpush1.msra.mxu0 0.0
    %447 = vmatprep.subr.mxu0 0.0
    %448 = vmatpush1.msra.mxu0 0.0
    %449 = vmatprep.subr.mxu0 0.0
    %450 = vmatpush1.msra.mxu0 0.0
    %451 = vmatprep.subr.mxu0 0.0
    %452 = vmatpush1.msra.mxu0 0.0
    %453 = vmatprep.subr.mxu0 0.0
    %454 = vmatpush1.msra.mxu0 0.0
    %455 = vmatprep.subr.mxu0 0.0
    %456 = vmatpush1.msra.mxu0 0.0
    %457 = vmatprep.subr.mxu0 0.0
    %458 = vmatpush1.msra.mxu0 0.0
    %459 = vmatprep.subr.mxu0 0.0
    %460 = vmatpush1.msra.mxu0 0.0
    %461 = vmatprep.subr.mxu0 0.0
    %462 = vmatpush1.msra.mxu0 0.0
    %463 = vmatprep.subr.mxu0 0.0
    %464 = vmatpush1.msra.mxu0 0.0
    %465 = vmatprep.subr.mxu0 0.0
    %466 = vmatpush1.msra.mxu0 0.0
    %467 = vmatprep.subr.mxu0 0.0
    %468 = vmatpush1.msra.mxu0 0.0
    %469 = vmatprep.subr.mxu0 0.0
    %470 = vmatpush1.msra.mxu0 0.0
    %471 = vmatprep.subr.mxu0 0.0
    %472 = vmatpush1.msra.mxu0 0.0
    %473 = vmatprep.subr.mxu0 0.0
    %474 = vmatpush1.msra.mxu0 0.0
    %475 = vmatprep.subr.mxu0 0.0
    %476 = vmatpush1.msra.mxu0 0.0
    %477 = vmatprep.subr.mxu0 0.0
    %478 = vmatpush1.msra.mxu0 0.0
    %479 = vmatprep.subr.mxu0 0.0
    %480 = vmatpush1.msra.mxu0 0.0
    %481 = vmatprep.subr.mxu0 0.0
    %482 = vmatpush1.msra.mxu0 0.0
    %483 = vmatprep.subr.mxu0 0.0
    %484 = vmatpush1.msra.mxu0 0.0
    %485 = vmatprep.subr.mxu0 0.0
    %486 = vmatpush1.msra.mxu0 0.0
    %487 = vmatprep.subr.mxu0 0.0
    %488 = vmatpush1.msra.mxu0 0.0
    %489 = vmatprep.subr.mxu0 0.0
    %490 = vmatpush1.msra.mxu0 0.0
    %491 = vmatprep.mubr.f32.mxu0 0.0
    %492 = vmatmul.mubr.f32.gmra.mrb[0].mxu0 %v425
    %v493 = vpop.f32.mrb[0].mxu0
    %v494 = vadd.f32 0.0, %v493
    %v495 = vpop.f32.mrb[0].mxu0
    %496 = vdwg.mxu0
    %v497 = vld [vmem:[#allocation5] sm:$0xff]
    %v498 = vld [vmem:[#allocation5 + $0x8] sm:$0xff]
    %v499 = vld [vmem:[#allocation5 + $0x10] sm:$0xff]
    %v500 = vld [vmem:[#allocation5 + $0x18] sm:$0xff]
    %501 = vrot.lane.b32.xlu0 %v170, 96
    %v502 = vpop.permute.xlu0 %501
    %503 = vrot.lane.b32.xlu0 %v247, 96
    %v504 = vpop.permute.xlu0 %503
    %v505 = vsel %vm96, %v502, 0
    %v507 = vsel %vm96, %v504, 0
    %509 = vmatprep.subr.mxu0 0.0
    %510 = vmatpush1.xpose.msra.mxu0 %v507
    %511 = vmatprep.subr.mxu0 0.0
    %512 = vmatpush1.xpose.msra.mxu0 0.0
    %513 = vmatprep.subr.mxu0 0.0
    %514 = vmatpush1.xpose.msra.mxu0 0.0
    %515 = vmatprep.subr.mxu0 0.0
    %516 = vmatpush1.xpose.msra.mxu0 0.0
    %517 = vmatprep.subr.mxu0 0.0
    %518 = vmatpush1.xpose.msra.mxu0 0.0
    %519 = vmatprep.subr.mxu0 0.0
    %520 = vmatpush1.xpose.msra.mxu0 0.0
    %521 = vmatprep.subr.mxu0 0.0
    %522 = vmatpush1.xpose.msra.mxu0 0.0
    %523 = vmatprep.subr.mxu0 0.0
    %524 = vmatpush1.xpose.msra.mxu0 0.0
    %525 = vmatprep.subr.mxu0 0.0
    %526 = vmatpush1.xpose.msra.mxu0 0.0
    %527 = vmatprep.subr.mxu0 0.0
    %528 = vmatpush1.xpose.msra.mxu0 0.0
    %529 = vmatprep.subr.mxu0 0.0
    %530 = vmatpush1.xpose.msra.mxu0 0.0
    %531 = vmatprep.subr.mxu0 0.0
    %532 = vmatpush1.xpose.msra.mxu0 0.0
    %533 = vmatprep.subr.mxu0 0.0
    %534 = vmatpush1.xpose.msra.mxu0 0.0
    %535 = vmatprep.subr.mxu0 0.0
    %536 = vmatpush1.xpose.msra.mxu0 0.0
    %537 = vmatprep.subr.mxu0 0.0
    %538 = vmatpush1.xpose.msra.mxu0 0.0
    %539 = vmatprep.subr.mxu0 0.0
    %540 = vmatpush1.xpose.msra.mxu0 0.0
    %541 = vmatprep.subr.mxu0 0.0
    %542 = vmatpush1.xpose.msra.mxu0 0.0
    %543 = vmatprep.subr.mxu0 0.0
    %544 = vmatpush1.xpose.msra.mxu0 0.0
    %545 = vmatprep.subr.mxu0 0.0
    %546 = vmatpush1.xpose.msra.mxu0 0.0
    %547 = vmatprep.subr.mxu0 0.0
    %548 = vmatpush1.xpose.msra.mxu0 0.0
    %549 = vmatprep.subr.mxu0 0.0
    %550 = vmatpush1.xpose.msra.mxu0 0.0
    %551 = vmatprep.subr.mxu0 0.0
    %552 = vmatpush1.xpose.msra.mxu0 0.0
    %553 = vmatprep.subr.mxu0 0.0
    %554 = vmatpush1.xpose.msra.mxu0 0.0
    %555 = vmatprep.subr.mxu0 0.0
    %556 = vmatpush1.xpose.msra.mxu0 0.0
    %557 = vmatprep.subr.mxu0 0.0
    %558 = vmatpush1.xpose.msra.mxu0 0.0
    %559 = vmatprep.subr.mxu0 0.0
    %560 = vmatpush1.xpose.msra.mxu0 0.0
    %561 = vmatprep.subr.mxu0 0.0
    %562 = vmatpush1.xpose.msra.mxu0 0.0
    %563 = vmatprep.subr.mxu0 0.0
    %564 = vmatpush1.xpose.msra.mxu0 0.0
    %565 = vmatprep.subr.mxu0 0.0
    %566 = vmatpush1.xpose.msra.mxu0 0.0
    %567 = vmatprep.subr.mxu0 0.0
    %568 = vmatpush1.xpose.msra.mxu0 0.0
    %569 = vmatprep.subr.mxu0 0.0
    %570 = vmatpush1.xpose.msra.mxu0 0.0
    %571 = vmatprep.subr.mxu0 0.0
    %572 = vmatpush1.xpose.msra.mxu0 0.0
    %573 = vmatprep.mubr.f32.mxu0 0.0
    %574 = vmatmul.mubr.f32.gmra.mrb[0].mxu0 %v505
    %v575 = vpop.f32.mrb[0].mxu0
    %v576 = vadd.f32 0.0, %v575
    %v577 = vpop.f32.mrb[0].mxu0
    %578 = vdwg.mxu0
    %v579 = vmul.f32 %v576, 0.17677669
    %v580 = vsel %vm412, %v579, -inf
    %581 = vmax.xlane.f32.xlu0 %v580
    %v582 = vpop.xlane.xlu0 %581
    %v583 = vsub.f32 %v579, %v582
    %v584 = vmul.f32 %v583, 1.442695
    %v585 = vpow.pop %v584
    %v586 = vsel %vm412, %v585, 0.0
    %587 = vadd.xlane.f32.xlu0 %v586
    %v588 = vpop.xlane.xlu0 %587
    %v589 = vrcp.pop %v588
    %v590 = vmul.f32 %v585, %v589
    %592 = vrot.lane.b32.xlu0 %v324, 96
    %v593 = vpop.permute.xlu0 %592
    %v596 = vsel %vm412, %v590, 0
    %598 = vmatprep.subr.mxu0 0.0
    %599 = vmatpush1.msra.mxu0 %v593
    %600 = vmatprep.subr.mxu0 0.0
    %601 = vmatpush1.msra.mxu0 0.0
    %602 = vmatprep.subr.mxu0 0.0
    %603 = vmatpush1.msra.mxu0 0.0
    %604 = vmatprep.subr.mxu0 0.0
    %605 = vmatpush1.msra.mxu0 0.0
    %606 = vmatprep.subr.mxu0 0.0
    %607 = vmatpush1.msra.mxu0 0.0
    %608 = vmatprep.subr.mxu0 0.0
    %609 = vmatpush1.msra.mxu0 0.0
    %610 = vmatprep.subr.mxu0 0.0
    %611 = vmatpush1.msra.mxu0 0.0
    %612 = vmatprep.subr.mxu0 0.0
    %613 = vmatpush1.msra.mxu0 0.0
    %614 = vmatprep.subr.mxu0 0.0
    %615 = vmatpush1.msra.mxu0 0.0
    %616 = vmatprep.subr.mxu0 0.0
    %617 = vmatpush1.msra.mxu0 0.0
    %618 = vmatprep.subr.mxu0 0.0
    %619 = vmatpush1.msra.mxu0 0.0
    %620 = vmatprep.subr.mxu0 0.0
    %621 = vmatpush1.msra.mxu0 0.0
    %622 = vmatprep.subr.mxu0 0.0
    %623 = vmatpush1.msra.mxu0 0.0
    %624 = vmatprep.subr.mxu0 0.0
    %625 = vmatpush1.msra.mxu0 0.0
    %626 = vmatprep.subr.mxu0 0.0
    %627 = vmatpush1.msra.mxu0 0.0
    %628 = vmatprep.subr.mxu0 0.0
    %629 = vmatpush1.msra.mxu0 0.0
    %630 = vmatprep.subr.mxu0 0.0
    %631 = vmatpush1.msra.mxu0 0.0
    %632 = vmatprep.subr.mxu0 0.0
    %633 = vmatpush1.msra.mxu0 0.0
    %634 = vmatprep.subr.mxu0 0.0
    %635 = vmatpush1.msra.mxu0 0.0
    %636 = vmatprep.subr.mxu0 0.0
    %637 = vmatpush1.msra.mxu0 0.0
    %638 = vmatprep.subr.mxu0 0.0
    %639 = vmatpush1.msra.mxu0 0.0
    %640 = vmatprep.subr.mxu0 0.0
    %641 = vmatpush1.msra.mxu0 0.0
    %642 = vmatprep.subr.mxu0 0.0
    %643 = vmatpush1.msra.mxu0 0.0
    %644 = vmatprep.subr.mxu0 0.0
    %645 = vmatpush1.msra.mxu0 0.0
    %646 = vmatprep.subr.mxu0 0.0
    %647 = vmatpush1.msra.mxu0 0.0
    %648 = vmatprep.subr.mxu0 0.0
    %649 = vmatpush1.msra.mxu0 0.0
    %650 = vmatprep.subr.mxu0 0.0
    %651 = vmatpush1.msra.mxu0 0.0
    %652 = vmatprep.subr.mxu0 0.0
    %653 = vmatpush1.msra.mxu0 0.0
    %654 = vmatprep.subr.mxu0 0.0
    %655 = vmatpush1.msra.mxu0 0.0
    %656 = vmatprep.subr.mxu0 0.0
    %657 = vmatpush1.msra.mxu0 0.0
    %658 = vmatprep.subr.mxu0 0.0
    %659 = vmatpush1.msra.mxu0 0.0
    %660 = vmatprep.subr.mxu0 0.0
    %661 = vmatpush1.msra.mxu0 0.0
    %662 = vmatprep.mubr.f32.mxu0 0.0
    %663 = vmatmul.mubr.f32.gmra.mrb[0].mxu0 %v596
    %v664 = vpop.f32.mrb[0].mxu0
    %v665 = vadd.f32 0.0, %v664
    %v666 = vpop.f32.mrb[0].mxu0
    %667 = vdwg.mxu0
    %s668 = scalar_lea.vmem [#allocation5], 32
    %v669 = vld [vmem:[%s668] sm:$0xff]
    %v670 = vld [vmem:[%s668 + $0x8] sm:$0xff]
    %v671 = vld [vmem:[%s668 + $0x10] sm:$0xff]
    %v672 = vld [vmem:[%s668 + $0x18] sm:$0xff]
    %v674 = vsel %vm96, %v665, 0
    %676 = vmatprep.subr.mxu0 0.0
    %677 = vmatpush1.msra.mxu0 %v669
    %678 = vmatprep.subr.mxu0 0.0
    %679 = vmatpush1.msra.mxu0 %v670
    %680 = vmatprep.subr.mxu0 0.0
    %681 = vmatpush1.msra.mxu0 %v671
    %682 = vmatprep.subr.mxu0 0.0
    %683 = vmatpush1.msra.mxu0 %v672
    %684 = vmatprep.subr.mxu0 0.0
    %685 = vmatpush1.msra.mxu0 0.0
    %686 = vmatprep.subr.mxu0 0.0
    %687 = vmatpush1.msra.mxu0 0.0
    %688 = vmatprep.subr.mxu0 0.0
    %689 = vmatpush1.msra.mxu0 0.0
    %690 = vmatprep.subr.mxu0 0.0
    %691 = vmatpush1.msra.mxu0 0.0
    %692 = vmatprep.subr.mxu0 0.0
    %693 = vmatpush1.msra.mxu0 0.0
    %694 = vmatprep.subr.mxu0 0.0
    %695 = vmatpush1.msra.mxu0 0.0
    %696 = vmatprep.subr.mxu0 0.0
    %697 = vmatpush1.msra.mxu0 0.0
    %698 = vmatprep.subr.mxu0 0.0
    %699 = vmatpush1.msra.mxu0 0.0
    %700 = vmatprep.subr.mxu0 0.0
    %701 = vmatpush1.msra.mxu0 0.0
    %702 = vmatprep.subr.mxu0 0.0
    %703 = vmatpush1.msra.mxu0 0.0
    %704 = vmatprep.subr.mxu0 0.0
    %705 = vmatpush1.msra.mxu0 0.0
    %706 = vmatprep.subr.mxu0 0.0
    %707 = vmatpush1.msra.mxu0 0.0
    %708 = vmatprep.subr.mxu0 0.0
    %709 = vmatpush1.msra.mxu0 0.0
    %710 = vmatprep.subr.mxu0 0.0
    %711 = vmatpush1.msra.mxu0 0.0
    %712 = vmatprep.subr.mxu0 0.0
    %713 = vmatpush1.msra.mxu0 0.0
    %714 = vmatprep.subr.mxu0 0.0
    %715 = vmatpush1.msra.mxu0 0.0
    %716 = vmatprep.subr.mxu0 0.0
    %717 = vmatpush1.msra.mxu0 0.0
    %718 = vmatprep.subr.mxu0 0.0
    %719 = vmatpush1.msra.mxu0 0.0
    %720 = vmatprep.subr.mxu0 0.0
    %721 = vmatpush1.msra.mxu0 0.0
    %722 = vmatprep.subr.mxu0 0.0
    %723 = vmatpush1.msra.mxu0 0.0
    %724 = vmatprep.subr.mxu0 0.0
    %725 = vmatpush1.msra.mxu0 0.0
    %726 = vmatprep.subr.mxu0 0.0
    %727 = vmatpush1.msra.mxu0 0.0
    %728 = vmatprep.subr.mxu0 0.0
    %729 = vmatpush1.msra.mxu0 0.0
    %730 = vmatprep.subr.mxu0 0.0
    %731 = vmatpush1.msra.mxu0 0.0
    %732 = vmatprep.subr.mxu0 0.0
    %733 = vmatpush1.msra.mxu0 0.0
    %734 = vmatprep.subr.mxu0 0.0
    %735 = vmatpush1.msra.mxu0 0.0
    %736 = vmatprep.subr.mxu0 0.0
    %737 = vmatpush1.msra.mxu0 0.0
    %738 = vmatprep.subr.mxu0 0.0
    %739 = vmatpush1.msra.mxu0 0.0
    %740 = vmatprep.mubr.f32.mxu0 0.0
    %741 = vmatmul.mubr.f32.gmra.mrb[0].mxu0 %v674
    %v742 = vpop.f32.mrb[0].mxu0
    %v743 = vadd.f32 0.0, %v742
    %v744 = vpop.f32.mrb[0].mxu0
    %745 = vdwg.mxu0
    %v747 = vsel %vm96, %v494, 0
    %749 = vmatprep.subr.mxu0 0.0
    %750 = vmatpush1.msra.mxu0 %v497
    %751 = vmatprep.subr.mxu0 0.0
    %752 = vmatpush1.msra.mxu0 %v498
    %753 = vmatprep.subr.mxu0 0.0
    %754 = vmatpush1.msra.mxu0 %v499
    %755 = vmatprep.subr.mxu0 0.0
    %756 = vmatpush1.msra.mxu0 %v500
    %757 = vmatprep.subr.mxu0 0.0
    %758 = vmatpush1.msra.mxu0 0.0
    %759 = vmatprep.subr.mxu0 0.0
    %760 = vmatpush1.msra.mxu0 0.0
    %761 = vmatprep.subr.mxu0 0.0
    %762 = vmatpush1.msra.mxu0 0.0
    %763 = vmatprep.subr.mxu0 0.0
    %764 = vmatpush1.msra.mxu0 0.0
    %765 = vmatprep.subr.mxu0 0.0
    %766 = vmatpush1.msra.mxu0 0.0
    %767 = vmatprep.subr.mxu0 0.0
    %768 = vmatpush1.msra.mxu0 0.0
    %769 = vmatprep.subr.mxu0 0.0
    %770 = vmatpush1.msra.mxu0 0.0
    %771 = vmatprep.subr.mxu0 0.0
    %772 = vmatpush1.msra.mxu0 0.0
    %773 = vmatprep.subr.mxu0 0.0
    %774 = vmatpush1.msra.mxu0 0.0
    %775 = vmatprep.subr.mxu0 0.0
    %776 = vmatpush1.msra.mxu0 0.0
    %777 = vmatprep.subr.mxu0 0.0
    %778 = vmatpush1.msra.mxu0 0.0
    %779 = vmatprep.subr.mxu0 0.0
    %780 = vmatpush1.msra.mxu0 0.0
    %781 = vmatprep.subr.mxu0 0.0
    %782 = vmatpush1.msra.mxu0 0.0
    %783 = vmatprep.subr.mxu0 0.0
    %784 = vmatpush1.msra.mxu0 0.0
    %785 = vmatprep.subr.mxu0 0.0
    %786 = vmatpush1.msra.mxu0 0.0
    %787 = vmatprep.subr.mxu0 0.0
    %788 = vmatpush1.msra.mxu0 0.0
    %789 = vmatprep.subr.mxu0 0.0
    %790 = vmatpush1.msra.mxu0 0.0
    %791 = vmatprep.subr.mxu0 0.0
    %792 = vmatpush1.msra.mxu0 0.0
    %793 = vmatprep.subr.mxu0 0.0
    %794 = vmatpush1.msra.mxu0 0.0
    %795 = vmatprep.subr.mxu0 0.0
    %796 = vmatpush1.msra.mxu0 0.0
    %797 = vmatprep.subr.mxu0 0.0
    %798 = vmatpush1.msra.mxu0 0.0
    %799 = vmatprep.subr.mxu0 0.0
    %800 = vmatpush1.msra.mxu0 0.0
    %801 = vmatprep.subr.mxu0 0.0
    %802 = vmatpush1.msra.mxu0 0.0
    %803 = vmatprep.subr.mxu0 0.0
    %804 = vmatpush1.msra.mxu0 0.0
    %805 = vmatprep.subr.mxu0 0.0
    %806 = vmatpush1.msra.mxu0 0.0
    %807 = vmatprep.subr.mxu0 0.0
    %808 = vmatpush1.msra.mxu0 0.0
    %809 = vmatprep.subr.mxu0 0.0
    %810 = vmatpush1.msra.mxu0 0.0
    %811 = vmatprep.subr.mxu0 0.0
    %812 = vmatpush1.msra.mxu0 0.0
    %813 = vmatprep.mubr.f32.mxu0 0.0
    %814 = vmatmul.mubr.f32.gmra.mrb[0].mxu0 %v747
    %v815 = vpop.f32.mrb[0].mxu0
    %v816 = vadd.f32 %v743, %v815
    %v817 = vpop.f32.mrb[0].mxu0
    %818 = vdwg.mxu0
    %819 = vrot.lane.b32.xlu0 %v170, 64
    %v820 = vpop.permute.xlu0 %819
    %821 = vrot.lane.b32.xlu0 %v247, 64
    %v822 = vpop.permute.xlu0 %821
    %v823 = vsel %vm96, %v820, 0
    %v825 = vsel %vm96, %v822, 0
    %827 = vmatprep.subr.mxu0 0.0
    %828 = vmatpush1.xpose.msra.mxu0 %v825
    %829 = vmatprep.subr.mxu0 0.0
    %830 = vmatpush1.xpose.msra.mxu0 0.0
    %831 = vmatprep.subr.mxu0 0.0
    %832 = vmatpush1.xpose.msra.mxu0 0.0
    %833 = vmatprep.subr.mxu0 0.0
    %834 = vmatpush1.xpose.msra.mxu0 0.0
    %835 = vmatprep.subr.mxu0 0.0
    %836 = vmatpush1.xpose.msra.mxu0 0.0
    %837 = vmatprep.subr.mxu0 0.0
    %838 = vmatpush1.xpose.msra.mxu0 0.0
    %839 = vmatprep.subr.mxu0 0.0
    %840 = vmatpush1.xpose.msra.mxu0 0.0
    %841 = vmatprep.subr.mxu0 0.0
    %842 = vmatpush1.xpose.msra.mxu0 0.0
    %843 = vmatprep.subr.mxu0 0.0
    %844 = vmatpush1.xpose.msra.mxu0 0.0
    %845 = vmatprep.subr.mxu0 0.0
    %846 = vmatpush1.xpose.msra.mxu0 0.0
    %847 = vmatprep.subr.mxu0 0.0
    %848 = vmatpush1.xpose.msra.mxu0 0.0
    %849 = vmatprep.subr.mxu0 0.0
    %850 = vmatpush1.xpose.msra.mxu0 0.0
    %851 = vmatprep.subr.mxu0 0.0
    %852 = vmatpush1.xpose.msra.mxu0 0.0
    %853 = vmatprep.subr.mxu0 0.0
    %854 = vmatpush1.xpose.msra.mxu0 0.0
    %855 = vmatprep.subr.mxu0 0.0
    %856 = vmatpush1.xpose.msra.mxu0 0.0
    %857 = vmatprep.subr.mxu0 0.0
    %858 = vmatpush1.xpose.msra.mxu0 0.0
    %859 = vmatprep.subr.mxu0 0.0
    %860 = vmatpush1.xpose.msra.mxu0 0.0
    %861 = vmatprep.subr.mxu0 0.0
    %862 = vmatpush1.xpose.msra.mxu0 0.0
    %863 = vmatprep.subr.mxu0 0.0
    %864 = vmatpush1.xpose.msra.mxu0 0.0
    %865 = vmatprep.subr.mxu0 0.0
    %866 = vmatpush1.xpose.msra.mxu0 0.0
    %867 = vmatprep.subr.mxu0 0.0
    %868 = vmatpush1.xpose.msra.mxu0 0.0
    %869 = vmatprep.subr.mxu0 0.0
    %870 = vmatpush1.xpose.msra.mxu0 0.0
    %871 = vmatprep.subr.mxu0 0.0
    %872 = vmatpush1.xpose.msra.mxu0 0.0
    %873 = vmatprep.subr.mxu0 0.0
    %874 = vmatpush1.xpose.msra.mxu0 0.0
    %875 = vmatprep.subr.mxu0 0.0
    %876 = vmatpush1.xpose.msra.mxu0 0.0
    %877 = vmatprep.subr.mxu0 0.0
    %878 = vmatpush1.xpose.msra.mxu0 0.0
    %879 = vmatprep.subr.mxu0 0.0
    %880 = vmatpush1.xpose.msra.mxu0 0.0
    %881 = vmatprep.subr.mxu0 0.0
    %882 = vmatpush1.xpose.msra.mxu0 0.0
    %883 = vmatprep.subr.mxu0 0.0
    %884 = vmatpush1.xpose.msra.mxu0 0.0
    %885 = vmatprep.subr.mxu0 0.0
    %886 = vmatpush1.xpose.msra.mxu0 0.0
    %887 = vmatprep.subr.mxu0 0.0
    %888 = vmatpush1.xpose.msra.mxu0 0.0
    %889 = vmatprep.subr.mxu0 0.0
    %890 = vmatpush1.xpose.msra.mxu0 0.0
    %891 = vmatprep.mubr.f32.mxu0 0.0
    %892 = vmatmul.mubr.f32.gmra.mrb[0].mxu0 %v823
    %v893 = vpop.f32.mrb[0].mxu0
    %v894 = vadd.f32 0.0, %v893
    %v895 = vpop.f32.mrb[0].mxu0
    %896 = vdwg.mxu0
    %v897 = vmul.f32 %v894, 0.17677669
    %v898 = vsel %vm412, %v897, -inf
    %899 = vmax.xlane.f32.xlu0 %v898
    %v900 = vpop.xlane.xlu0 %899
    %v901 = vsub.f32 %v897, %v900
    %v902 = vmul.f32 %v901, 1.442695
    %v903 = vpow.pop %v902
    %v904 = vsel %vm412, %v903, 0.0
    %905 = vadd.xlane.f32.xlu0 %v904
    %v906 = vpop.xlane.xlu0 %905
    %v907 = vrcp.pop %v906
    %v908 = vmul.f32 %v903, %v907
    %909 = vrot.lane.b32.xlu0 %v324, 64
    %v910 = vpop.permute.xlu0 %909
    %v913 = vsel %vm412, %v908, 0
    %915 = vmatprep.subr.mxu0 0.0
    %916 = vmatpush1.msra.mxu0 %v910
    %917 = vmatprep.subr.mxu0 0.0
    %918 = vmatpush1.msra.mxu0 0.0
    %919 = vmatprep.subr.mxu0 0.0
    %920 = vmatpush1.msra.mxu0 0.0
    %921 = vmatprep.subr.mxu0 0.0
    %922 = vmatpush1.msra.mxu0 0.0
    %923 = vmatprep.subr.mxu0 0.0
    %924 = vmatpush1.msra.mxu0 0.0
    %925 = vmatprep.subr.mxu0 0.0
    %926 = vmatpush1.msra.mxu0 0.0
    %927 = vmatprep.subr.mxu0 0.0
    %928 = vmatpush1.msra.mxu0 0.0
    %929 = vmatprep.subr.mxu0 0.0
    %930 = vmatpush1.msra.mxu0 0.0
    %931 = vmatprep.subr.mxu0 0.0
    %932 = vmatpush1.msra.mxu0 0.0
    %933 = vmatprep.subr.mxu0 0.0
    %934 = vmatpush1.msra.mxu0 0.0
    %935 = vmatprep.subr.mxu0 0.0
    %936 = vmatpush1.msra.mxu0 0.0
    %937 = vmatprep.subr.mxu0 0.0
    %938 = vmatpush1.msra.mxu0 0.0
    %939 = vmatprep.subr.mxu0 0.0
    %940 = vmatpush1.msra.mxu0 0.0
    %941 = vmatprep.subr.mxu0 0.0
    %942 = vmatpush1.msra.mxu0 0.0
    %943 = vmatprep.subr.mxu0 0.0
    %944 = vmatpush1.msra.mxu0 0.0
    %945 = vmatprep.subr.mxu0 0.0
    %946 = vmatpush1.msra.mxu0 0.0
    %947 = vmatprep.subr.mxu0 0.0
    %948 = vmatpush1.msra.mxu0 0.0
    %949 = vmatprep.subr.mxu0 0.0
    %950 = vmatpush1.msra.mxu0 0.0
    %951 = vmatprep.subr.mxu0 0.0
    %952 = vmatpush1.msra.mxu0 0.0
    %953 = vmatprep.subr.mxu0 0.0
    %954 = vmatpush1.msra.mxu0 0.0
    %955 = vmatprep.subr.mxu0 0.0
    %956 = vmatpush1.msra.mxu0 0.0
    %957 = vmatprep.subr.mxu0 0.0
    %958 = vmatpush1.msra.mxu0 0.0
    %959 = vmatprep.subr.mxu0 0.0
    %960 = vmatpush1.msra.mxu0 0.0
    %961 = vmatprep.subr.mxu0 0.0
    %962 = vmatpush1.msra.mxu0 0.0
    %963 = vmatprep.subr.mxu0 0.0
    %964 = vmatpush1.msra.mxu0 0.0
    %965 = vmatprep.subr.mxu0 0.0
    %966 = vmatpush1.msra.mxu0 0.0
    %967 = vmatprep.subr.mxu0 0.0
    %968 = vmatpush1.msra.mxu0 0.0
    %969 = vmatprep.subr.mxu0 0.0
    %970 = vmatpush1.msra.mxu0 0.0
    %971 = vmatprep.subr.mxu0 0.0
    %972 = vmatpush1.msra.mxu0 0.0
    %973 = vmatprep.subr.mxu0 0.0
    %974 = vmatpush1.msra.mxu0 0.0
    %975 = vmatprep.subr.mxu0 0.0
    %976 = vmatpush1.msra.mxu0 0.0
    %977 = vmatprep.subr.mxu0 0.0
    %978 = vmatpush1.msra.mxu0 0.0
    %979 = vmatprep.mubr.f32.mxu0 0.0
    %980 = vmatmul.mubr.f32.gmra.mrb[0].mxu0 %v913
    %v981 = vpop.f32.mrb[0].mxu0
    %v982 = vadd.f32 0.0, %v981
    %v983 = vpop.f32.mrb[0].mxu0
    %984 = vdwg.mxu0
    %s985 = scalar_lea.vmem [#allocation5], 64
    %v986 = vld [vmem:[%s985] sm:$0xff]
    %v987 = vld [vmem:[%s985 + $0x8] sm:$0xff]
    %v988 = vld [vmem:[%s985 + $0x10] sm:$0xff]
    %v989 = vld [vmem:[%s985 + $0x18] sm:$0xff]
    %v991 = vsel %vm96, %v982, 0
    %993 = vmatprep.subr.mxu0 0.0
    %994 = vmatpush1.msra.mxu0 %v986
    %995 = vmatprep.subr.mxu0 0.0
    %996 = vmatpush1.msra.mxu0 %v987
    %997 = vmatprep.subr.mxu0 0.0
    %998 = vmatpush1.msra.mxu0 %v988
    %999 = vmatprep.subr.mxu0 0.0
    %1000 = vmatpush1.msra.mxu0 %v989
    %1001 = vmatprep.subr.mxu0 0.0
    %1002 = vmatpush1.msra.mxu0 0.0
    %1003 = vmatprep.subr.mxu0 0.0
    %1004 = vmatpush1.msra.mxu0 0.0
    %1005 = vmatprep.subr.mxu0 0.0
    %1006 = vmatpush1.msra.mxu0 0.0
    %1007 = vmatprep.subr.mxu0 0.0
    %1008 = vmatpush1.msra.mxu0 0.0
    %1009 = vmatprep.subr.mxu0 0.0
    %1010 = vmatpush1.msra.mxu0 0.0
    %1011 = vmatprep.subr.mxu0 0.0
    %1012 = vmatpush1.msra.mxu0 0.0
    %1013 = vmatprep.subr.mxu0 0.0
    %1014 = vmatpush1.msra.mxu0 0.0
    %1015 = vmatprep.subr.mxu0 0.0
    %1016 = vmatpush1.msra.mxu0 0.0
    %1017 = vmatprep.subr.mxu0 0.0
    %1018 = vmatpush1.msra.mxu0 0.0
    %1019 = vmatprep.subr.mxu0 0.0
    %1020 = vmatpush1.msra.mxu0 0.0
    %1021 = vmatprep.subr.mxu0 0.0
    %1022 = vmatpush1.msra.mxu0 0.0
    %1023 = vmatprep.subr.mxu0 0.0
    %1024 = vmatpush1.msra.mxu0 0.0
    %1025 = vmatprep.subr.mxu0 0.0
    %1026 = vmatpush1.msra.mxu0 0.0
    %1027 = vmatprep.subr.mxu0 0.0
    %1028 = vmatpush1.msra.mxu0 0.0
    %1029 = vmatprep.subr.mxu0 0.0
    %1030 = vmatpush1.msra.mxu0 0.0
    %1031 = vmatprep.subr.mxu0 0.0
    %1032 = vmatpush1.msra.mxu0 0.0
    %1033 = vmatprep.subr.mxu0 0.0
    %1034 = vmatpush1.msra.mxu0 0.0
    %1035 = vmatprep.subr.mxu0 0.0
    %1036 = vmatpush1.msra.mxu0 0.0
    %1037 = vmatprep.subr.mxu0 0.0
    %1038 = vmatpush1.msra.mxu0 0.0
    %1039 = vmatprep.subr.mxu0 0.0
    %1040 = vmatpush1.msra.mxu0 0.0
    %1041 = vmatprep.subr.mxu0 0.0
    %1042 = vmatpush1.msra.mxu0 0.0
    %1043 = vmatprep.subr.mxu0 0.0
    %1044 = vmatpush1.msra.mxu0 0.0
    %1045 = vmatprep.subr.mxu0 0.0
    %1046 = vmatpush1.msra.mxu0 0.0
    %1047 = vmatprep.subr.mxu0 0.0
    %1048 = vmatpush1.msra.mxu0 0.0
    %1049 = vmatprep.subr.mxu0 0.0
    %1050 = vmatpush1.msra.mxu0 0.0
    %1051 = vmatprep.subr.mxu0 0.0
    %1052 = vmatpush1.msra.mxu0 0.0
    %1053 = vmatprep.subr.mxu0 0.0
    %1054 = vmatpush1.msra.mxu0 0.0
    %1055 = vmatprep.subr.mxu0 0.0
    %1056 = vmatpush1.msra.mxu0 0.0
    %1057 = vmatprep.mubr.f32.mxu0 0.0
    %1058 = vmatmul.mubr.f32.gmra.mrb[0].mxu0 %v991
    %v1059 = vpop.f32.mrb[0].mxu0
    %v1060 = vadd.f32 0.0, %v1059
    %v1061 = vpop.f32.mrb[0].mxu0
    %1062 = vdwg.mxu0
    %v1063 = vadd.f32 %v816, %v1060
    %1064 = vrot.lane.b32.xlu0 %v170, 32
    %v1065 = vpop.permute.xlu0 %1064
    %1066 = vrot.lane.b32.xlu0 %v247, 32
    %v1067 = vpop.permute.xlu0 %1066
    %v1068 = vsel %vm96, %v1065, 0
    %v1070 = vsel %vm96, %v1067, 0
    %1072 = vmatprep.subr.mxu0 0.0
    %1073 = vmatpush1.xpose.msra.mxu0 %v1070
    %1074 = vmatprep.subr.mxu0 0.0
    %1075 = vmatpush1.xpose.msra.mxu0 0.0
    %1076 = vmatprep.subr.mxu0 0.0
    %1077 = vmatpush1.xpose.msra.mxu0 0.0
    %1078 = vmatprep.subr.mxu0 0.0
    %1079 = vmatpush1.xpose.msra.mxu0 0.0
    %1080 = vmatprep.subr.mxu0 0.0
    %1081 = vmatpush1.xpose.msra.mxu0 0.0
    %1082 = vmatprep.subr.mxu0 0.0
    %1083 = vmatpush1.xpose.msra.mxu0 0.0
    %1084 = vmatprep.subr.mxu0 0.0
    %1085 = vmatpush1.xpose.msra.mxu0 0.0
    %1086 = vmatprep.subr.mxu0 0.0
    %1087 = vmatpush1.xpose.msra.mxu0 0.0
    %1088 = vmatprep.subr.mxu0 0.0
    %1089 = vmatpush1.xpose.msra.mxu0 0.0
    %1090 = vmatprep.subr.mxu0 0.0
    %1091 = vmatpush1.xpose.msra.mxu0 0.0
    %1092 = vmatprep.subr.mxu0 0.0
    %1093 = vmatpush1.xpose.msra.mxu0 0.0
    %1094 = vmatprep.subr.mxu0 0.0
    %1095 = vmatpush1.xpose.msra.mxu0 0.0
    %1096 = vmatprep.subr.mxu0 0.0
    %1097 = vmatpush1.xpose.msra.mxu0 0.0
    %1098 = vmatprep.subr.mxu0 0.0
    %1099 = vmatpush1.xpose.msra.mxu0 0.0
    %1100 = vmatprep.subr.mxu0 0.0
    %1101 = vmatpush1.xpose.msra.mxu0 0.0
    %1102 = vmatprep.subr.mxu0 0.0
    %1103 = vmatpush1.xpose.msra.mxu0 0.0
    %1104 = vmatprep.subr.mxu0 0.0
    %1105 = vmatpush1.xpose.msra.mxu0 0.0
    %1106 = vmatprep.subr.mxu0 0.0
    %1107 = vmatpush1.xpose.msra.mxu0 0.0
    %1108 = vmatprep.subr.mxu0 0.0
    %1109 = vmatpush1.xpose.msra.mxu0 0.0
    %1110 = vmatprep.subr.mxu0 0.0
    %1111 = vmatpush1.xpose.msra.mxu0 0.0
    %1112 = vmatprep.subr.mxu0 0.0
    %1113 = vmatpush1.xpose.msra.mxu0 0.0
    %1114 = vmatprep.subr.mxu0 0.0
    %1115 = vmatpush1.xpose.msra.mxu0 0.0
    %1116 = vmatprep.subr.mxu0 0.0
    %1117 = vmatpush1.xpose.msra.mxu0 0.0
    %1118 = vmatprep.subr.mxu0 0.0
    %1119 = vmatpush1.xpose.msra.mxu0 0.0
    %1120 = vmatprep.subr.mxu0 0.0
    %1121 = vmatpush1.xpose.msra.mxu0 0.0
    %1122 = vmatprep.subr.mxu0 0.0
    %1123 = vmatpush1.xpose.msra.mxu0 0.0
    %1124 = vmatprep.subr.mxu0 0.0
    %1125 = vmatpush1.xpose.msra.mxu0 0.0
    %1126 = vmatprep.subr.mxu0 0.0
    %1127 = vmatpush1.xpose.msra.mxu0 0.0
    %1128 = vmatprep.subr.mxu0 0.0
    %1129 = vmatpush1.xpose.msra.mxu0 0.0
    %1130 = vmatprep.subr.mxu0 0.0
    %1131 = vmatpush1.xpose.msra.mxu0 0.0
    %1132 = vmatprep.subr.mxu0 0.0
    %1133 = vmatpush1.xpose.msra.mxu0 0.0
    %1134 = vmatprep.subr.mxu0 0.0
    %1135 = vmatpush1.xpose.msra.mxu0 0.0
    %1136 = vmatprep.mubr.f32.mxu0 0.0
    %1137 = vmatmul.mubr.f32.gmra.mrb[0].mxu0 %v1068
    %v1138 = vpop.f32.mrb[0].mxu0
    %v1139 = vadd.f32 0.0, %v1138
    %v1140 = vpop.f32.mrb[0].mxu0
    %1141 = vdwg.mxu0
    %v1142 = vmul.f32 %v1139, 0.17677669
    %v1143 = vsel %vm412, %v1142, -inf
    %1144 = vmax.xlane.f32.xlu0 %v1143
    %v1145 = vpop.xlane.xlu0 %1144
    %v1146 = vsub.f32 %v1142, %v1145
    %v1147 = vmul.f32 %v1146, 1.442695
    %v1148 = vpow.pop %v1147
    %v1149 = vsel %vm412, %v1148, 0.0
    %1150 = vadd.xlane.f32.xlu0 %v1149
    %v1151 = vpop.xlane.xlu0 %1150
    %v1152 = vrcp.pop %v1151
    %v1153 = vmul.f32 %v1148, %v1152
    %1154 = vrot.lane.b32.xlu0 %v324, 32
    %v1155 = vpop.permute.xlu0 %1154
    %v1158 = vsel %vm412, %v1153, 0
    %1160 = vmatprep.subr.mxu0 0.0
    %1161 = vmatpush1.msra.mxu0 %v1155
    %1162 = vmatprep.subr.mxu0 0.0
    %1163 = vmatpush1.msra.mxu0 0.0
    %1164 = vmatprep.subr.mxu0 0.0
    %1165 = vmatpush1.msra.mxu0 0.0
    %1166 = vmatprep.subr.mxu0 0.0
    %1167 = vmatpush1.msra.mxu0 0.0
    %1168 = vmatprep.subr.mxu0 0.0
    %1169 = vmatpush1.msra.mxu0 0.0
    %1170 = vmatprep.subr.mxu0 0.0
    %1171 = vmatpush1.msra.mxu0 0.0
    %1172 = vmatprep.subr.mxu0 0.0
    %1173 = vmatpush1.msra.mxu0 0.0
    %1174 = vmatprep.subr.mxu0 0.0
    %1175 = vmatpush1.msra.mxu0 0.0
    %1176 = vmatprep.subr.mxu0 0.0
    %1177 = vmatpush1.msra.mxu0 0.0
    %1178 = vmatprep.subr.mxu0 0.0
    %1179 = vmatpush1.msra.mxu0 0.0
    %1180 = vmatprep.subr.mxu0 0.0
    %1181 = vmatpush1.msra.mxu0 0.0
    %1182 = vmatprep.subr.mxu0 0.0
    %1183 = vmatpush1.msra.mxu0 0.0
    %1184 = vmatprep.subr.mxu0 0.0
    %1185 = vmatpush1.msra.mxu0 0.0
    %1186 = vmatprep.subr.mxu0 0.0
    %1187 = vmatpush1.msra.mxu0 0.0
    %1188 = vmatprep.subr.mxu0 0.0
    %1189 = vmatpush1.msra.mxu0 0.0
    %1190 = vmatprep.subr.mxu0 0.0
    %1191 = vmatpush1.msra.mxu0 0.0
    %1192 = vmatprep.subr.mxu0 0.0
    %1193 = vmatpush1.msra.mxu0 0.0
    %1194 = vmatprep.subr.mxu0 0.0
    %1195 = vmatpush1.msra.mxu0 0.0
    %1196 = vmatprep.subr.mxu0 0.0
    %1197 = vmatpush1.msra.mxu0 0.0
    %1198 = vmatprep.subr.mxu0 0.0
    %1199 = vmatpush1.msra.mxu0 0.0
    %1200 = vmatprep.subr.mxu0 0.0
    %1201 = vmatpush1.msra.mxu0 0.0
    %1202 = vmatprep.subr.mxu0 0.0
    %1203 = vmatpush1.msra.mxu0 0.0
    %1204 = vmatprep.subr.mxu0 0.0
    %1205 = vmatpush1.msra.mxu0 0.0
    %1206 = vmatprep.subr.mxu0 0.0
    %1207 = vmatpush1.msra.mxu0 0.0
    %1208 = vmatprep.subr.mxu0 0.0
    %1209 = vmatpush1.msra.mxu0 0.0
    %1210 = vmatprep.subr.mxu0 0.0
    %1211 = vmatpush1.msra.mxu0 0.0
    %1212 = vmatprep.subr.mxu0 0.0
    %1213 = vmatpush1.msra.mxu0 0.0
    %1214 = vmatprep.subr.mxu0 0.0
    %1215 = vmatpush1.msra.mxu0 0.0
    %1216 = vmatprep.subr.mxu0 0.0
    %1217 = vmatpush1.msra.mxu0 0.0
    %1218 = vmatprep.subr.mxu0 0.0
    %1219 = vmatpush1.msra.mxu0 0.0
    %1220 = vmatprep.subr.mxu0 0.0
    %1221 = vmatpush1.msra.mxu0 0.0
    %1222 = vmatprep.subr.mxu0 0.0
    %1223 = vmatpush1.msra.mxu0 0.0
    %1224 = vmatprep.mubr.f32.mxu0 0.0
    %1225 = vmatmul.mubr.f32.gmra.mrb[0].mxu0 %v1158
    %v1226 = vpop.f32.mrb[0].mxu0
    %v1227 = vadd.f32 0.0, %v1226
    %v1228 = vpop.f32.mrb[0].mxu0
    %1229 = vdwg.mxu0
    %s1230 = scalar_lea.vmem [#allocation5], 96
    %v1231 = vld [vmem:[%s1230] sm:$0xff]
    %v1232 = vld [vmem:[%s1230 + $0x8] sm:$0xff]
    %v1233 = vld [vmem:[%s1230 + $0x10] sm:$0xff]
    %v1234 = vld [vmem:[%s1230 + $0x18] sm:$0xff]
    %v1236 = vsel %vm96, %v1227, 0
    %1238 = vmatprep.subr.mxu0 0.0
    %1239 = vmatpush1.msra.mxu0 %v1231
    %1240 = vmatprep.subr.mxu0 0.0
    %1241 = vmatpush1.msra.mxu0 %v1232
    %1242 = vmatprep.subr.mxu0 0.0
    %1243 = vmatpush1.msra.mxu0 %v1233
    %1244 = vmatprep.subr.mxu0 0.0
    %1245 = vmatpush1.msra.mxu0 %v1234
    %1246 = vmatprep.subr.mxu0 0.0
    %1247 = vmatpush1.msra.mxu0 0.0
    %1248 = vmatprep.subr.mxu0 0.0
    %1249 = vmatpush1.msra.mxu0 0.0
    %1250 = vmatprep.subr.mxu0 0.0
    %1251 = vmatpush1.msra.mxu0 0.0
    %1252 = vmatprep.subr.mxu0 0.0
    %1253 = vmatpush1.msra.mxu0 0.0
    %1254 = vmatprep.subr.mxu0 0.0
    %1255 = vmatpush1.msra.mxu0 0.0
    %1256 = vmatprep.subr.mxu0 0.0
    %1257 = vmatpush1.msra.mxu0 0.0
    %1258 = vmatprep.subr.mxu0 0.0
    %1259 = vmatpush1.msra.mxu0 0.0
    %1260 = vmatprep.subr.mxu0 0.0
    %1261 = vmatpush1.msra.mxu0 0.0
    %1262 = vmatprep.subr.mxu0 0.0
    %1263 = vmatpush1.msra.mxu0 0.0
    %1264 = vmatprep.subr.mxu0 0.0
    %1265 = vmatpush1.msra.mxu0 0.0
    %1266 = vmatprep.subr.mxu0 0.0
    %1267 = vmatpush1.msra.mxu0 0.0
    %1268 = vmatprep.subr.mxu0 0.0
    %1269 = vmatpush1.msra.mxu0 0.0
    %1270 = vmatprep.subr.mxu0 0.0
    %1271 = vmatpush1.msra.mxu0 0.0
    %1272 = vmatprep.subr.mxu0 0.0
    %1273 = vmatpush1.msra.mxu0 0.0
    %1274 = vmatprep.subr.mxu0 0.0
    %1275 = vmatpush1.msra.mxu0 0.0
    %1276 = vmatprep.subr.mxu0 0.0
    %1277 = vmatpush1.msra.mxu0 0.0
    %1278 = vmatprep.subr.mxu0 0.0
    %1279 = vmatpush1.msra.mxu0 0.0
    %1280 = vmatprep.subr.mxu0 0.0
    %1281 = vmatpush1.msra.mxu0 0.0
    %1282 = vmatprep.subr.mxu0 0.0
    %1283 = vmatpush1.msra.mxu0 0.0
    %1284 = vmatprep.subr.mxu0 0.0
    %1285 = vmatpush1.msra.mxu0 0.0
    %1286 = vmatprep.subr.mxu0 0.0
    %1287 = vmatpush1.msra.mxu0 0.0
    %1288 = vmatprep.subr.mxu0 0.0
    %1289 = vmatpush1.msra.mxu0 0.0
    %1290 = vmatprep.subr.mxu0 0.0
    %1291 = vmatpush1.msra.mxu0 0.0
    %1292 = vmatprep.subr.mxu0 0.0
    %1293 = vmatpush1.msra.mxu0 0.0
    %1294 = vmatprep.subr.mxu0 0.0
    %1295 = vmatpush1.msra.mxu0 0.0
    %1296 = vmatprep.subr.mxu0 0.0
    %1297 = vmatpush1.msra.mxu0 0.0
    %1298 = vmatprep.subr.mxu0 0.0
    %1299 = vmatpush1.msra.mxu0 0.0
    %1300 = vmatprep.subr.mxu0 0.0
    %1301 = vmatpush1.msra.mxu0 0.0
    %1302 = vmatprep.mubr.f32.mxu0 0.0
    %1303 = vmatmul.mubr.f32.gmra.mrb[0].mxu0 %v1236
    %v1304 = vpop.f32.mrb[0].mxu0
    %v1305 = vadd.f32 0.0, %v1304
    %v1306 = vpop.f32.mrb[0].mxu0
    %1307 = vdwg.mxu0
    %v1308 = vadd.f32 %v1063, %v1305
    %v1310 = vsel %vm96, %v172, 0
    %v1313 = vsel %vm96, %v249, 0
    %1315 = vmatprep.subr.mxu0 0.0
    %1316 = vmatpush1.xpose.msra.mxu0 %v1313
    %1317 = vmatprep.subr.mxu0 0.0
    %1318 = vmatpush1.xpose.msra.mxu0 0.0
    %1319 = vmatprep.subr.mxu0 0.0
    %1320 = vmatpush1.xpose.msra.mxu0 0.0
    %1321 = vmatprep.subr.mxu0 0.0
    %1322 = vmatpush1.xpose.msra.mxu0 0.0
    %1323 = vmatprep.subr.mxu0 0.0
    %1324 = vmatpush1.xpose.msra.mxu0 0.0
    %1325 = vmatprep.subr.mxu0 0.0
    %1326 = vmatpush1.xpose.msra.mxu0 0.0
    %1327 = vmatprep.subr.mxu0 0.0
    %1328 = vmatpush1.xpose.msra.mxu0 0.0
    %1329 = vmatprep.subr.mxu0 0.0
    %1330 = vmatpush1.xpose.msra.mxu0 0.0
    %1331 = vmatprep.subr.mxu0 0.0
    %1332 = vmatpush1.xpose.msra.mxu0 0.0
    %1333 = vmatprep.subr.mxu0 0.0
    %1334 = vmatpush1.xpose.msra.mxu0 0.0
    %1335 = vmatprep.subr.mxu0 0.0
    %1336 = vmatpush1.xpose.msra.mxu0 0.0
    %1337 = vmatprep.subr.mxu0 0.0
    %1338 = vmatpush1.xpose.msra.mxu0 0.0
    %1339 = vmatprep.subr.mxu0 0.0
    %1340 = vmatpush1.xpose.msra.mxu0 0.0
    %1341 = vmatprep.subr.mxu0 0.0
    %1342 = vmatpush1.xpose.msra.mxu0 0.0
    %1343 = vmatprep.subr.mxu0 0.0
    %1344 = vmatpush1.xpose.msra.mxu0 0.0
    %1345 = vmatprep.subr.mxu0 0.0
    %1346 = vmatpush1.xpose.msra.mxu0 0.0
    %1347 = vmatprep.subr.mxu0 0.0
    %1348 = vmatpush1.xpose.msra.mxu0 0.0
    %1349 = vmatprep.subr.mxu0 0.0
    %1350 = vmatpush1.xpose.msra.mxu0 0.0
    %1351 = vmatprep.subr.mxu0 0.0
    %1352 = vmatpush1.xpose.msra.mxu0 0.0
    %1353 = vmatprep.subr.mxu0 0.0
    %1354 = vmatpush1.xpose.msra.mxu0 0.0
    %1355 = vmatprep.subr.mxu0 0.0
    %1356 = vmatpush1.xpose.msra.mxu0 0.0
    %1357 = vmatprep.subr.mxu0 0.0
    %1358 = vmatpush1.xpose.msra.mxu0 0.0
    %1359 = vmatprep.subr.mxu0 0.0
    %1360 = vmatpush1.xpose.msra.mxu0 0.0
    %1361 = vmatprep.subr.mxu0 0.0
    %1362 = vmatpush1.xpose.msra.mxu0 0.0
    %1363 = vmatprep.subr.mxu0 0.0
    %1364 = vmatpush1.xpose.msra.mxu0 0.0
    %1365 = vmatprep.subr.mxu0 0.0
    %1366 = vmatpush1.xpose.msra.mxu0 0.0
    %1367 = vmatprep.subr.mxu0 0.0
    %1368 = vmatpush1.xpose.msra.mxu0 0.0
    %1369 = vmatprep.subr.mxu0 0.0
    %1370 = vmatpush1.xpose.msra.mxu0 0.0
    %1371 = vmatprep.subr.mxu0 0.0
    %1372 = vmatpush1.xpose.msra.mxu0 0.0
    %1373 = vmatprep.subr.mxu0 0.0
    %1374 = vmatpush1.xpose.msra.mxu0 0.0
    %1375 = vmatprep.subr.mxu0 0.0
    %1376 = vmatpush1.xpose.msra.mxu0 0.0
    %1377 = vmatprep.subr.mxu0 0.0
    %1378 = vmatpush1.xpose.msra.mxu0 0.0
    %1379 = vmatprep.mubr.f32.mxu0 0.0
    %1380 = vmatmul.mubr.f32.gmra.mrb[0].mxu0 %v1310
    %v1381 = vpop.f32.mrb[0].mxu0
    %v1382 = vadd.f32 0.0, %v1381
    %v1383 = vpop.f32.mrb[0].mxu0
    %1384 = vdwg.mxu0
    %v1385 = vmul.f32 %v1382, 0.17677669
    %v1386 = vsel %vm412, %v1385, -inf
    %1387 = vmax.xlane.f32.xlu0 %v1386
    %v1388 = vpop.xlane.xlu0 %1387
    %v1389 = vsub.f32 %v1385, %v1388
    %v1390 = vmul.f32 %v1389, 1.442695
    %v1391 = vpow.pop %v1390
    %v1392 = vsel %vm412, %v1391, 0.0
    %1393 = vadd.xlane.f32.xlu0 %v1392
    %v1394 = vpop.xlane.xlu0 %1393
    %v1395 = vrcp.pop %v1394
    %v1396 = vmul.f32 %v1391, %v1395
    %v1398 = vsel %vm412, %v1396, 0
    %1400 = vmatprep.subr.mxu0 0.0
    %1401 = vmatpush1.msra.mxu0 %v326
    %1402 = vmatprep.subr.mxu0 0.0
    %1403 = vmatpush1.msra.mxu0 0.0
    %1404 = vmatprep.subr.mxu0 0.0
    %1405 = vmatpush1.msra.mxu0 0.0
    %1406 = vmatprep.subr.mxu0 0.0
    %1407 = vmatpush1.msra.mxu0 0.0
    %1408 = vmatprep.subr.mxu0 0.0
    %1409 = vmatpush1.msra.mxu0 0.0
    %1410 = vmatprep.subr.mxu0 0.0
    %1411 = vmatpush1.msra.mxu0 0.0
    %1412 = vmatprep.subr.mxu0 0.0
    %1413 = vmatpush1.msra.mxu0 0.0
    %1414 = vmatprep.subr.mxu0 0.0
    %1415 = vmatpush1.msra.mxu0 0.0
    %1416 = vmatprep.subr.mxu0 0.0
    %1417 = vmatpush1.msra.mxu0 0.0
    %1418 = vmatprep.subr.mxu0 0.0
    %1419 = vmatpush1.msra.mxu0 0.0
    %1420 = vmatprep.subr.mxu0 0.0
    %1421 = vmatpush1.msra.mxu0 0.0
    %1422 = vmatprep.subr.mxu0 0.0
    %1423 = vmatpush1.msra.mxu0 0.0
    %1424 = vmatprep.subr.mxu0 0.0
    %1425 = vmatpush1.msra.mxu0 0.0
    %1426 = vmatprep.subr.mxu0 0.0
    %1427 = vmatpush1.msra.mxu0 0.0
    %1428 = vmatprep.subr.mxu0 0.0
    %1429 = vmatpush1.msra.mxu0 0.0
    %1430 = vmatprep.subr.mxu0 0.0
    %1431 = vmatpush1.msra.mxu0 0.0
    %1432 = vmatprep.subr.mxu0 0.0
    %1433 = vmatpush1.msra.mxu0 0.0
    %1434 = vmatprep.subr.mxu0 0.0
    %1435 = vmatpush1.msra.mxu0 0.0
    %1436 = vmatprep.subr.mxu0 0.0
    %1437 = vmatpush1.msra.mxu0 0.0
    %1438 = vmatprep.subr.mxu0 0.0
    %1439 = vmatpush1.msra.mxu0 0.0
    %1440 = vmatprep.subr.mxu0 0.0
    %1441 = vmatpush1.msra.mxu0 0.0
    %1442 = vmatprep.subr.mxu0 0.0
    %1443 = vmatpush1.msra.mxu0 0.0
    %1444 = vmatprep.subr.mxu0 0.0
    %1445 = vmatpush1.msra.mxu0 0.0
    %1446 = vmatprep.subr.mxu0 0.0
    %1447 = vmatpush1.msra.mxu0 0.0
    %1448 = vmatprep.subr.mxu0 0.0
    %1449 = vmatpush1.msra.mxu0 0.0
    %1450 = vmatprep.subr.mxu0 0.0
    %1451 = vmatpush1.msra.mxu0 0.0
    %1452 = vmatprep.subr.mxu0 0.0
    %1453 = vmatpush1.msra.mxu0 0.0
    %1454 = vmatprep.subr.mxu0 0.0
    %1455 = vmatpush1.msra.mxu0 0.0
    %1456 = vmatprep.subr.mxu0 0.0
    %1457 = vmatpush1.msra.mxu0 0.0
    %1458 = vmatprep.subr.mxu0 0.0
    %1459 = vmatpush1.msra.mxu0 0.0
    %1460 = vmatprep.subr.mxu0 0.0
    %1461 = vmatpush1.msra.mxu0 0.0
    %1462 = vmatprep.subr.mxu0 0.0
    %1463 = vmatpush1.msra.mxu0 0.0
    %1464 = vmatprep.mubr.f32.mxu0 0.0
    %1465 = vmatmul.mubr.f32.gmra.mrb[0].mxu0 %v1398
    %v1466 = vpop.f32.mrb[0].mxu0
    %v1467 = vadd.f32 0.0, %v1466
    %v1468 = vpop.f32.mrb[0].mxu0
    %1469 = vdwg.mxu0
    %s1470 = scalar_lea.vmem [#allocation5], 128
    %v1471 = vld [vmem:[%s1470] sm:$0xff]
    %v1472 = vld [vmem:[%s1470 + $0x8] sm:$0xff]
    %v1473 = vld [vmem:[%s1470 + $0x10] sm:$0xff]
    %v1474 = vld [vmem:[%s1470 + $0x18] sm:$0xff]
    %v1476 = vsel %vm96, %v1467, 0
    %1478 = vmatprep.subr.mxu0 0.0
    %1479 = vmatpush1.msra.mxu0 %v1471
    %1480 = vmatprep.subr.mxu0 0.0
    %1481 = vmatpush1.msra.mxu0 %v1472
    %1482 = vmatprep.subr.mxu0 0.0
    %1483 = vmatpush1.msra.mxu0 %v1473
    %1484 = vmatprep.subr.mxu0 0.0
    %1485 = vmatpush1.msra.mxu0 %v1474
    %1486 = vmatprep.subr.mxu0 0.0
    %1487 = vmatpush1.msra.mxu0 0.0
    %1488 = vmatprep.subr.mxu0 0.0
    %1489 = vmatpush1.msra.mxu0 0.0
    %1490 = vmatprep.subr.mxu0 0.0
    %1491 = vmatpush1.msra.mxu0 0.0
    %1492 = vmatprep.subr.mxu0 0.0
    %1493 = vmatpush1.msra.mxu0 0.0
    %1494 = vmatprep.subr.mxu0 0.0
    %1495 = vmatpush1.msra.mxu0 0.0
    %1496 = vmatprep.subr.mxu0 0.0
    %1497 = vmatpush1.msra.mxu0 0.0
    %1498 = vmatprep.subr.mxu0 0.0
    %1499 = vmatpush1.msra.mxu0 0.0
    %1500 = vmatprep.subr.mxu0 0.0
    %1501 = vmatpush1.msra.mxu0 0.0
    %1502 = vmatprep.subr.mxu0 0.0
    %1503 = vmatpush1.msra.mxu0 0.0
    %1504 = vmatprep.subr.mxu0 0.0
    %1505 = vmatpush1.msra.mxu0 0.0
    %1506 = vmatprep.subr.mxu0 0.0
    %1507 = vmatpush1.msra.mxu0 0.0
    %1508 = vmatprep.subr.mxu0 0.0
    %1509 = vmatpush1.msra.mxu0 0.0
    %1510 = vmatprep.subr.mxu0 0.0
    %1511 = vmatpush1.msra.mxu0 0.0
    %1512 = vmatprep.subr.mxu0 0.0
    %1513 = vmatpush1.msra.mxu0 0.0
    %1514 = vmatprep.subr.mxu0 0.0
    %1515 = vmatpush1.msra.mxu0 0.0
    %1516 = vmatprep.subr.mxu0 0.0
    %1517 = vmatpush1.msra.mxu0 0.0
    %1518 = vmatprep.subr.mxu0 0.0
    %1519 = vmatpush1.msra.mxu0 0.0
    %1520 = vmatprep.subr.mxu0 0.0
    %1521 = vmatpush1.msra.mxu0 0.0
    %1522 = vmatprep.subr.mxu0 0.0
    %1523 = vmatpush1.msra.mxu0 0.0
    %1524 = vmatprep.subr.mxu0 0.0
    %1525 = vmatpush1.msra.mxu0 0.0
    %1526 = vmatprep.subr.mxu0 0.0
    %1527 = vmatpush1.msra.mxu0 0.0
    %1528 = vmatprep.subr.mxu0 0.0
    %1529 = vmatpush1.msra.mxu0 0.0
    %1530 = vmatprep.subr.mxu0 0.0
    %1531 = vmatpush1.msra.mxu0 0.0
    %1532 = vmatprep.subr.mxu0 0.0
    %1533 = vmatpush1.msra.mxu0 0.0
    %1534 = vmatprep.subr.mxu0 0.0
    %1535 = vmatpush1.msra.mxu0 0.0
    %1536 = vmatprep.subr.mxu0 0.0
    %1537 = vmatpush1.msra.mxu0 0.0
    %1538 = vmatprep.subr.mxu0 0.0
    %1539 = vmatpush1.msra.mxu0 0.0
    %1540 = vmatprep.subr.mxu0 0.0
    %1541 = vmatpush1.msra.mxu0 0.0
    %1542 = vmatprep.mubr.f32.mxu0 0.0
    %1543 = vmatmul.mubr.f32.gmra.mrb[0].mxu0 %v1476
    %v1544 = vpop.f32.mrb[0].mxu0
    %v1545 = vadd.f32 0.0, %v1544
    %v1546 = vpop.f32.mrb[0].mxu0
    %1547 = vdwg.mxu0
    %v1548 = vadd.f32 %v1308, %v1545
    %1549 = vrot.lane.b32.xlu0 %v172, 96
    %v1550 = vpop.permute.xlu0 %1549
    %1551 = vrot.lane.b32.xlu0 %v249, 96
    %v1552 = vpop.permute.xlu0 %1551
    %v1553 = vsel %vm96, %v1550, 0
    %v1555 = vsel %vm96, %v1552, 0
    %1557 = vmatprep.subr.mxu0 0.0
    %1558 = vmatpush1.xpose.msra.mxu0 %v1555
    %1559 = vmatprep.subr.mxu0 0.0
    %1560 = vmatpush1.xpose.msra.mxu0 0.0
    %1561 = vmatprep.subr.mxu0 0.0
    %1562 = vmatpush1.xpose.msra.mxu0 0.0
    %1563 = vmatprep.subr.mxu0 0.0
    %1564 = vmatpush1.xpose.msra.mxu0 0.0
    %1565 = vmatprep.subr.mxu0 0.0
    %1566 = vmatpush1.xpose.msra.mxu0 0.0
    %1567 = vmatprep.subr.mxu0 0.0
    %1568 = vmatpush1.xpose.msra.mxu0 0.0
    %1569 = vmatprep.subr.mxu0 0.0
    %1570 = vmatpush1.xpose.msra.mxu0 0.0
    %1571 = vmatprep.subr.mxu0 0.0
    %1572 = vmatpush1.xpose.msra.mxu0 0.0
    %1573 = vmatprep.subr.mxu0 0.0
    %1574 = vmatpush1.xpose.msra.mxu0 0.0
    %1575 = vmatprep.subr.mxu0 0.0
    %1576 = vmatpush1.xpose.msra.mxu0 0.0
    %1577 = vmatprep.subr.mxu0 0.0
    %1578 = vmatpush1.xpose.msra.mxu0 0.0
    %1579 = vmatprep.subr.mxu0 0.0
    %1580 = vmatpush1.xpose.msra.mxu0 0.0
    %1581 = vmatprep.subr.mxu0 0.0
    %1582 = vmatpush1.xpose.msra.mxu0 0.0
    %1583 = vmatprep.subr.mxu0 0.0
    %1584 = vmatpush1.xpose.msra.mxu0 0.0
    %1585 = vmatprep.subr.mxu0 0.0
    %1586 = vmatpush1.xpose.msra.mxu0 0.0
    %1587 = vmatprep.subr.mxu0 0.0
    %1588 = vmatpush1.xpose.msra.mxu0 0.0
    %1589 = vmatprep.subr.mxu0 0.0
    %1590 = vmatpush1.xpose.msra.mxu0 0.0
    %1591 = vmatprep.subr.mxu0 0.0
    %1592 = vmatpush1.xpose.msra.mxu0 0.0
    %1593 = vmatprep.subr.mxu0 0.0
    %1594 = vmatpush1.xpose.msra.mxu0 0.0
    %1595 = vmatprep.subr.mxu0 0.0
    %1596 = vmatpush1.xpose.msra.mxu0 0.0
    %1597 = vmatprep.subr.mxu0 0.0
    %1598 = vmatpush1.xpose.msra.mxu0 0.0
    %1599 = vmatprep.subr.mxu0 0.0
    %1600 = vmatpush1.xpose.msra.mxu0 0.0
    %1601 = vmatprep.subr.mxu0 0.0
    %1602 = vmatpush1.xpose.msra.mxu0 0.0
    %1603 = vmatprep.subr.mxu0 0.0
    %1604 = vmatpush1.xpose.msra.mxu0 0.0
    %1605 = vmatprep.subr.mxu0 0.0
    %1606 = vmatpush1.xpose.msra.mxu0 0.0
    %1607 = vmatprep.subr.mxu0 0.0
    %1608 = vmatpush1.xpose.msra.mxu0 0.0
    %1609 = vmatprep.subr.mxu0 0.0
    %1610 = vmatpush1.xpose.msra.mxu0 0.0
    %1611 = vmatprep.subr.mxu0 0.0
    %1612 = vmatpush1.xpose.msra.mxu0 0.0
    %1613 = vmatprep.subr.mxu0 0.0
    %1614 = vmatpush1.xpose.msra.mxu0 0.0
    %1615 = vmatprep.subr.mxu0 0.0
    %1616 = vmatpush1.xpose.msra.mxu0 0.0
    %1617 = vmatprep.subr.mxu0 0.0
    %1618 = vmatpush1.xpose.msra.mxu0 0.0
    %1619 = vmatprep.subr.mxu0 0.0
    %1620 = vmatpush1.xpose.msra.mxu0 0.0
    %1621 = vmatprep.mubr.f32.mxu0 0.0
    %1622 = vmatmul.mubr.f32.gmra.mrb[0].mxu0 %v1553
    %v1623 = vpop.f32.mrb[0].mxu0
    %v1624 = vadd.f32 0.0, %v1623
    %v1625 = vpop.f32.mrb[0].mxu0
    %1626 = vdwg.mxu0
    %v1627 = vmul.f32 %v1624, 0.17677669
    %v1628 = vsel %vm412, %v1627, -inf
    %1629 = vmax.xlane.f32.xlu0 %v1628
    %v1630 = vpop.xlane.xlu0 %1629
    %v1631 = vsub.f32 %v1627, %v1630
    %v1632 = vmul.f32 %v1631, 1.442695
    %v1633 = vpow.pop %v1632
    %v1634 = vsel %vm412, %v1633, 0.0
    %1635 = vadd.xlane.f32.xlu0 %v1634
    %v1636 = vpop.xlane.xlu0 %1635
    %v1637 = vrcp.pop %v1636
    %v1638 = vmul.f32 %v1633, %v1637
    %1640 = vrot.lane.b32.xlu0 %v326, 96
    %v1641 = vpop.permute.xlu0 %1640
    %v1644 = vsel %vm412, %v1638, 0
    %1646 = vmatprep.subr.mxu0 0.0
    %1647 = vmatpush1.msra.mxu0 %v1641
    %1648 = vmatprep.subr.mxu0 0.0
    %1649 = vmatpush1.msra.mxu0 0.0
    %1650 = vmatprep.subr.mxu0 0.0
    %1651 = vmatpush1.msra.mxu0 0.0
    %1652 = vmatprep.subr.mxu0 0.0
    %1653 = vmatpush1.msra.mxu0 0.0
    %1654 = vmatprep.subr.mxu0 0.0
    %1655 = vmatpush1.msra.mxu0 0.0
    %1656 = vmatprep.subr.mxu0 0.0
    %1657 = vmatpush1.msra.mxu0 0.0
    %1658 = vmatprep.subr.mxu0 0.0
    %1659 = vmatpush1.msra.mxu0 0.0
    %1660 = vmatprep.subr.mxu0 0.0
    %1661 = vmatpush1.msra.mxu0 0.0
    %1662 = vmatprep.subr.mxu0 0.0
    %1663 = vmatpush1.msra.mxu0 0.0
    %1664 = vmatprep.subr.mxu0 0.0
    %1665 = vmatpush1.msra.mxu0 0.0
    %1666 = vmatprep.subr.mxu0 0.0
    %1667 = vmatpush1.msra.mxu0 0.0
    %1668 = vmatprep.subr.mxu0 0.0
    %1669 = vmatpush1.msra.mxu0 0.0
    %1670 = vmatprep.subr.mxu0 0.0
    %1671 = vmatpush1.msra.mxu0 0.0
    %1672 = vmatprep.subr.mxu0 0.0
    %1673 = vmatpush1.msra.mxu0 0.0
    %1674 = vmatprep.subr.mxu0 0.0
    %1675 = vmatpush1.msra.mxu0 0.0
    %1676 = vmatprep.subr.mxu0 0.0
    %1677 = vmatpush1.msra.mxu0 0.0
    %1678 = vmatprep.subr.mxu0 0.0
    %1679 = vmatpush1.msra.mxu0 0.0
    %1680 = vmatprep.subr.mxu0 0.0
    %1681 = vmatpush1.msra.mxu0 0.0
    %1682 = vmatprep.subr.mxu0 0.0
    %1683 = vmatpush1.msra.mxu0 0.0
    %1684 = vmatprep.subr.mxu0 0.0
    %1685 = vmatpush1.msra.mxu0 0.0
    %1686 = vmatprep.subr.mxu0 0.0
    %1687 = vmatpush1.msra.mxu0 0.0
    %1688 = vmatprep.subr.mxu0 0.0
    %1689 = vmatpush1.msra.mxu0 0.0
    %1690 = vmatprep.subr.mxu0 0.0
    %1691 = vmatpush1.msra.mxu0 0.0
    %1692 = vmatprep.subr.mxu0 0.0
    %1693 = vmatpush1.msra.mxu0 0.0
    %1694 = vmatprep.subr.mxu0 0.0
    %1695 = vmatpush1.msra.mxu0 0.0
    %1696 = vmatprep.subr.mxu0 0.0
    %1697 = vmatpush1.msra.mxu0 0.0
    %1698 = vmatprep.subr.mxu0 0.0
    %1699 = vmatpush1.msra.mxu0 0.0
    %1700 = vmatprep.subr.mxu0 0.0
    %1701 = vmatpush1.msra.mxu0 0.0
    %1702 = vmatprep.subr.mxu0 0.0
    %1703 = vmatpush1.msra.mxu0 0.0
    %1704 = vmatprep.subr.mxu0 0.0
    %1705 = vmatpush1.msra.mxu0 0.0
    %1706 = vmatprep.subr.mxu0 0.0
    %1707 = vmatpush1.msra.mxu0 0.0
    %1708 = vmatprep.subr.mxu0 0.0
    %1709 = vmatpush1.msra.mxu0 0.0
    %1710 = vmatprep.mubr.f32.mxu0 0.0
    %1711 = vmatmul.mubr.f32.gmra.mrb[0].mxu0 %v1644
    %v1712 = vpop.f32.mrb[0].mxu0
    %v1713 = vadd.f32 0.0, %v1712
    %v1714 = vpop.f32.mrb[0].mxu0
    %1715 = vdwg.mxu0
    %s1716 = scalar_lea.vmem [#allocation5], 160
    %v1717 = vld [vmem:[%s1716] sm:$0xff]
    %v1718 = vld [vmem:[%s1716 + $0x8] sm:$0xff]
    %v1719 = vld [vmem:[%s1716 + $0x10] sm:$0xff]
    %v1720 = vld [vmem:[%s1716 + $0x18] sm:$0xff]
    %v1722 = vsel %vm96, %v1713, 0
    %1724 = vmatprep.subr.mxu0 0.0
    %1725 = vmatpush1.msra.mxu0 %v1717
    %1726 = vmatprep.subr.mxu0 0.0
    %1727 = vmatpush1.msra.mxu0 %v1718
    %1728 = vmatprep.subr.mxu0 0.0
    %1729 = vmatpush1.msra.mxu0 %v1719
    %1730 = vmatprep.subr.mxu0 0.0
    %1731 = vmatpush1.msra.mxu0 %v1720
    %1732 = vmatprep.subr.mxu0 0.0
    %1733 = vmatpush1.msra.mxu0 0.0
    %1734 = vmatprep.subr.mxu0 0.0
    %1735 = vmatpush1.msra.mxu0 0.0
    %1736 = vmatprep.subr.mxu0 0.0
    %1737 = vmatpush1.msra.mxu0 0.0
    %1738 = vmatprep.subr.mxu0 0.0
    %1739 = vmatpush1.msra.mxu0 0.0
    %1740 = vmatprep.subr.mxu0 0.0
    %1741 = vmatpush1.msra.mxu0 0.0
    %1742 = vmatprep.subr.mxu0 0.0
    %1743 = vmatpush1.msra.mxu0 0.0
    %1744 = vmatprep.subr.mxu0 0.0
    %1745 = vmatpush1.msra.mxu0 0.0
    %1746 = vmatprep.subr.mxu0 0.0
    %1747 = vmatpush1.msra.mxu0 0.0
    %1748 = vmatprep.subr.mxu0 0.0
    %1749 = vmatpush1.msra.mxu0 0.0
    %1750 = vmatprep.subr.mxu0 0.0
    %1751 = vmatpush1.msra.mxu0 0.0
    %1752 = vmatprep.subr.mxu0 0.0
    %1753 = vmatpush1.msra.mxu0 0.0
    %1754 = vmatprep.subr.mxu0 0.0
    %1755 = vmatpush1.msra.mxu0 0.0
    %1756 = vmatprep.subr.mxu0 0.0
    %1757 = vmatpush1.msra.mxu0 0.0
    %1758 = vmatprep.subr.mxu0 0.0
    %1759 = vmatpush1.msra.mxu0 0.0
    %1760 = vmatprep.subr.mxu0 0.0
    %1761 = vmatpush1.msra.mxu0 0.0
    %1762 = vmatprep.subr.mxu0 0.0
    %1763 = vmatpush1.msra.mxu0 0.0
    %1764 = vmatprep.subr.mxu0 0.0
    %1765 = vmatpush1.msra.mxu0 0.0
    %1766 = vmatprep.subr.mxu0 0.0
    %1767 = vmatpush1.msra.mxu0 0.0
    %1768 = vmatprep.subr.mxu0 0.0
    %1769 = vmatpush1.msra.mxu0 0.0
    %1770 = vmatprep.subr.mxu0 0.0
    %1771 = vmatpush1.msra.mxu0 0.0
    %1772 = vmatprep.subr.mxu0 0.0
    %1773 = vmatpush1.msra.mxu0 0.0
    %1774 = vmatprep.subr.mxu0 0.0
    %1775 = vmatpush1.msra.mxu0 0.0
    %1776 = vmatprep.subr.mxu0 0.0
    %1777 = vmatpush1.msra.mxu0 0.0
    %1778 = vmatprep.subr.mxu0 0.0
    %1779 = vmatpush1.msra.mxu0 0.0
    %1780 = vmatprep.subr.mxu0 0.0
    %1781 = vmatpush1.msra.mxu0 0.0
    %1782 = vmatprep.subr.mxu0 0.0
    %1783 = vmatpush1.msra.mxu0 0.0
    %1784 = vmatprep.subr.mxu0 0.0
    %1785 = vmatpush1.msra.mxu0 0.0
    %1786 = vmatprep.subr.mxu0 0.0
    %1787 = vmatpush1.msra.mxu0 0.0
    %1788 = vmatprep.mubr.f32.mxu0 0.0
    %1789 = vmatmul.mubr.f32.gmra.mrb[0].mxu0 %v1722
    %v1790 = vpop.f32.mrb[0].mxu0
    %v1791 = vadd.f32 0.0, %v1790
    %v1792 = vpop.f32.mrb[0].mxu0
    %1793 = vdwg.mxu0
    %v1794 = vadd.f32 %v1548, %v1791
    %1795 = vrot.lane.b32.xlu0 %v172, 64
    %v1796 = vpop.permute.xlu0 %1795
    %1797 = vrot.lane.b32.xlu0 %v249, 64
    %v1798 = vpop.permute.xlu0 %1797
    %v1799 = vsel %vm96, %v1796, 0
    %v1801 = vsel %vm96, %v1798, 0
    %1803 = vmatprep.subr.mxu0 0.0
    %1804 = vmatpush1.xpose.msra.mxu0 %v1801
    %1805 = vmatprep.subr.mxu0 0.0
    %1806 = vmatpush1.xpose.msra.mxu0 0.0
    %1807 = vmatprep.subr.mxu0 0.0
    %1808 = vmatpush1.xpose.msra.mxu0 0.0
    %1809 = vmatprep.subr.mxu0 0.0
    %1810 = vmatpush1.xpose.msra.mxu0 0.0
    %1811 = vmatprep.subr.mxu0 0.0
    %1812 = vmatpush1.xpose.msra.mxu0 0.0
    %1813 = vmatprep.subr.mxu0 0.0
    %1814 = vmatpush1.xpose.msra.mxu0 0.0
    %1815 = vmatprep.subr.mxu0 0.0
    %1816 = vmatpush1.xpose.msra.mxu0 0.0
    %1817 = vmatprep.subr.mxu0 0.0
    %1818 = vmatpush1.xpose.msra.mxu0 0.0
    %1819 = vmatprep.subr.mxu0 0.0
    %1820 = vmatpush1.xpose.msra.mxu0 0.0
    %1821 = vmatprep.subr.mxu0 0.0
    %1822 = vmatpush1.xpose.msra.mxu0 0.0
    %1823 = vmatprep.subr.mxu0 0.0
    %1824 = vmatpush1.xpose.msra.mxu0 0.0
    %1825 = vmatprep.subr.mxu0 0.0
    %1826 = vmatpush1.xpose.msra.mxu0 0.0
    %1827 = vmatprep.subr.mxu0 0.0
    %1828 = vmatpush1.xpose.msra.mxu0 0.0
    %1829 = vmatprep.subr.mxu0 0.0
    %1830 = vmatpush1.xpose.msra.mxu0 0.0
    %1831 = vmatprep.subr.mxu0 0.0
    %1832 = vmatpush1.xpose.msra.mxu0 0.0
    %1833 = vmatprep.subr.mxu0 0.0
    %1834 = vmatpush1.xpose.msra.mxu0 0.0
    %1835 = vmatprep.subr.mxu0 0.0
    %1836 = vmatpush1.xpose.msra.mxu0 0.0
    %1837 = vmatprep.subr.mxu0 0.0
    %1838 = vmatpush1.xpose.msra.mxu0 0.0
    %1839 = vmatprep.subr.mxu0 0.0
    %1840 = vmatpush1.xpose.msra.mxu0 0.0
    %1841 = vmatprep.subr.mxu0 0.0
    %1842 = vmatpush1.xpose.msra.mxu0 0.0
    %1843 = vmatprep.subr.mxu0 0.0
    %1844 = vmatpush1.xpose.msra.mxu0 0.0
    %1845 = vmatprep.subr.mxu0 0.0
    %1846 = vmatpush1.xpose.msra.mxu0 0.0
    %1847 = vmatprep.subr.mxu0 0.0
    %1848 = vmatpush1.xpose.msra.mxu0 0.0
    %1849 = vmatprep.subr.mxu0 0.0
    %1850 = vmatpush1.xpose.msra.mxu0 0.0
    %1851 = vmatprep.subr.mxu0 0.0
    %1852 = vmatpush1.xpose.msra.mxu0 0.0
    %1853 = vmatprep.subr.mxu0 0.0
    %1854 = vmatpush1.xpose.msra.mxu0 0.0
    %1855 = vmatprep.subr.mxu0 0.0
    %1856 = vmatpush1.xpose.msra.mxu0 0.0
    %1857 = vmatprep.subr.mxu0 0.0
    %1858 = vmatpush1.xpose.msra.mxu0 0.0
    %1859 = vmatprep.subr.mxu0 0.0
    %1860 = vmatpush1.xpose.msra.mxu0 0.0
    %1861 = vmatprep.subr.mxu0 0.0
    %1862 = vmatpush1.xpose.msra.mxu0 0.0
    %1863 = vmatprep.subr.mxu0 0.0
    %1864 = vmatpush1.xpose.msra.mxu0 0.0
    %1865 = vmatprep.subr.mxu0 0.0
    %1866 = vmatpush1.xpose.msra.mxu0 0.0
    %1867 = vmatprep.mubr.f32.mxu0 0.0
    %1868 = vmatmul.mubr.f32.gmra.mrb[0].mxu0 %v1799
    %v1869 = vpop.f32.mrb[0].mxu0
    %v1870 = vadd.f32 0.0, %v1869
    %v1871 = vpop.f32.mrb[0].mxu0
    %1872 = vdwg.mxu0
    %v1873 = vmul.f32 %v1870, 0.17677669
    %v1874 = vsel %vm412, %v1873, -inf
    %1875 = vmax.xlane.f32.xlu0 %v1874
    %v1876 = vpop.xlane.xlu0 %1875
    %v1877 = vsub.f32 %v1873, %v1876
    %v1878 = vmul.f32 %v1877, 1.442695
    %v1879 = vpow.pop %v1878
    %v1880 = vsel %vm412, %v1879, 0.0
    %1881 = vadd.xlane.f32.xlu0 %v1880
    %v1882 = vpop.xlane.xlu0 %1881
    %v1883 = vrcp.pop %v1882
    %v1884 = vmul.f32 %v1879, %v1883
    %1885 = vrot.lane.b32.xlu0 %v326, 64
    %v1886 = vpop.permute.xlu0 %1885
    %v1889 = vsel %vm412, %v1884, 0
    %1891 = vmatprep.subr.mxu0 0.0
    %1892 = vmatpush1.msra.mxu0 %v1886
    %1893 = vmatprep.subr.mxu0 0.0
    %1894 = vmatpush1.msra.mxu0 0.0
    %1895 = vmatprep.subr.mxu0 0.0
    %1896 = vmatpush1.msra.mxu0 0.0
    %1897 = vmatprep.subr.mxu0 0.0
    %1898 = vmatpush1.msra.mxu0 0.0
    %1899 = vmatprep.subr.mxu0 0.0
    %1900 = vmatpush1.msra.mxu0 0.0
    %1901 = vmatprep.subr.mxu0 0.0
    %1902 = vmatpush1.msra.mxu0 0.0
    %1903 = vmatprep.subr.mxu0 0.0
    %1904 = vmatpush1.msra.mxu0 0.0
    %1905 = vmatprep.subr.mxu0 0.0
    %1906 = vmatpush1.msra.mxu0 0.0
    %1907 = vmatprep.subr.mxu0 0.0
    %1908 = vmatpush1.msra.mxu0 0.0
    %1909 = vmatprep.subr.mxu0 0.0
    %1910 = vmatpush1.msra.mxu0 0.0
    %1911 = vmatprep.subr.mxu0 0.0
    %1912 = vmatpush1.msra.mxu0 0.0
    %1913 = vmatprep.subr.mxu0 0.0
    %1914 = vmatpush1.msra.mxu0 0.0
    %1915 = vmatprep.subr.mxu0 0.0
    %1916 = vmatpush1.msra.mxu0 0.0
    %1917 = vmatprep.subr.mxu0 0.0
    %1918 = vmatpush1.msra.mxu0 0.0
    %1919 = vmatprep.subr.mxu0 0.0
    %1920 = vmatpush1.msra.mxu0 0.0
    %1921 = vmatprep.subr.mxu0 0.0
    %1922 = vmatpush1.msra.mxu0 0.0
    %1923 = vmatprep.subr.mxu0 0.0
    %1924 = vmatpush1.msra.mxu0 0.0
    %1925 = vmatprep.subr.mxu0 0.0
    %1926 = vmatpush1.msra.mxu0 0.0
    %1927 = vmatprep.subr.mxu0 0.0
    %1928 = vmatpush1.msra.mxu0 0.0
    %1929 = vmatprep.subr.mxu0 0.0
    %1930 = vmatpush1.msra.mxu0 0.0
    %1931 = vmatprep.subr.mxu0 0.0
    %1932 = vmatpush1.msra.mxu0 0.0
    %1933 = vmatprep.subr.mxu0 0.0
    %1934 = vmatpush1.msra.mxu0 0.0
    %1935 = vmatprep.subr.mxu0 0.0
    %1936 = vmatpush1.msra.mxu0 0.0
    %1937 = vmatprep.subr.mxu0 0.0
    %1938 = vmatpush1.msra.mxu0 0.0
    %1939 = vmatprep.subr.mxu0 0.0
    %1940 = vmatpush1.msra.mxu0 0.0
    %1941 = vmatprep.subr.mxu0 0.0
    %1942 = vmatpush1.msra.mxu0 0.0
    %1943 = vmatprep.subr.mxu0 0.0
    %1944 = vmatpush1.msra.mxu0 0.0
    %1945 = vmatprep.subr.mxu0 0.0
    %1946 = vmatpush1.msra.mxu0 0.0
    %1947 = vmatprep.subr.mxu0 0.0
    %1948 = vmatpush1.msra.mxu0 0.0
    %1949 = vmatprep.subr.mxu0 0.0
    %1950 = vmatpush1.msra.mxu0 0.0
    %1951 = vmatprep.subr.mxu0 0.0
    %1952 = vmatpush1.msra.mxu0 0.0
    %1953 = vmatprep.subr.mxu0 0.0
    %1954 = vmatpush1.msra.mxu0 0.0
    %1955 = vmatprep.mubr.f32.mxu0 0.0
    %1956 = vmatmul.mubr.f32.gmra.mrb[0].mxu0 %v1889
    %v1957 = vpop.f32.mrb[0].mxu0
    %v1958 = vadd.f32 0.0, %v1957
    %v1959 = vpop.f32.mrb[0].mxu0
    %1960 = vdwg.mxu0
    %s1961 = scalar_lea.vmem [#allocation5], 192
    %v1962 = vld [vmem:[%s1961] sm:$0xff]
    %v1963 = vld [vmem:[%s1961 + $0x8] sm:$0xff]
    %v1964 = vld [vmem:[%s1961 + $0x10] sm:$0xff]
    %v1965 = vld [vmem:[%s1961 + $0x18] sm:$0xff]
    %v1967 = vsel %vm96, %v1958, 0
    %1969 = vmatprep.subr.mxu0 0.0
    %1970 = vmatpush1.msra.mxu0 %v1962
    %1971 = vmatprep.subr.mxu0 0.0
    %1972 = vmatpush1.msra.mxu0 %v1963
    %1973 = vmatprep.subr.mxu0 0.0
    %1974 = vmatpush1.msra.mxu0 %v1964
    %1975 = vmatprep.subr.mxu0 0.0
    %1976 = vmatpush1.msra.mxu0 %v1965
    %1977 = vmatprep.subr.mxu0 0.0
    %1978 = vmatpush1.msra.mxu0 0.0
    %1979 = vmatprep.subr.mxu0 0.0
    %1980 = vmatpush1.msra.mxu0 0.0
    %1981 = vmatprep.subr.mxu0 0.0
    %1982 = vmatpush1.msra.mxu0 0.0
    %1983 = vmatprep.subr.mxu0 0.0
    %1984 = vmatpush1.msra.mxu0 0.0
    %1985 = vmatprep.subr.mxu0 0.0
    %1986 = vmatpush1.msra.mxu0 0.0
    %1987 = vmatprep.subr.mxu0 0.0
    %1988 = vmatpush1.msra.mxu0 0.0
    %1989 = vmatprep.subr.mxu0 0.0
    %1990 = vmatpush1.msra.mxu0 0.0
    %1991 = vmatprep.subr.mxu0 0.0
    %1992 = vmatpush1.msra.mxu0 0.0
    %1993 = vmatprep.subr.mxu0 0.0
    %1994 = vmatpush1.msra.mxu0 0.0
    %1995 = vmatprep.subr.mxu0 0.0
    %1996 = vmatpush1.msra.mxu0 0.0
    %1997 = vmatprep.subr.mxu0 0.0
    %1998 = vmatpush1.msra.mxu0 0.0
    %1999 = vmatprep.subr.mxu0 0.0
    %2000 = vmatpush1.msra.mxu0 0.0
    %2001 = vmatprep.subr.mxu0 0.0
    %2002 = vmatpush1.msra.mxu0 0.0
    %2003 = vmatprep.subr.mxu0 0.0
    %2004 = vmatpush1.msra.mxu0 0.0
    %2005 = vmatprep.subr.mxu0 0.0
    %2006 = vmatpush1.msra.mxu0 0.0
    %2007 = vmatprep.subr.mxu0 0.0
    %2008 = vmatpush1.msra.mxu0 0.0
    %2009 = vmatprep.subr.mxu0 0.0
    %2010 = vmatpush1.msra.mxu0 0.0
    %2011 = vmatprep.subr.mxu0 0.0
    %2012 = vmatpush1.msra.mxu0 0.0
    %2013 = vmatprep.subr.mxu0 0.0
    %2014 = vmatpush1.msra.mxu0 0.0
    %2015 = vmatprep.subr.mxu0 0.0
    %2016 = vmatpush1.msra.mxu0 0.0
    %2017 = vmatprep.subr.mxu0 0.0
    %2018 = vmatpush1.msra.mxu0 0.0
    %2019 = vmatprep.subr.mxu0 0.0
    %2020 = vmatpush1.msra.mxu0 0.0
    %2021 = vmatprep.subr.mxu0 0.0
    %2022 = vmatpush1.msra.mxu0 0.0
    %2023 = vmatprep.subr.mxu0 0.0
    %2024 = vmatpush1.msra.mxu0 0.0
    %2025 = vmatprep.subr.mxu0 0.0
    %2026 = vmatpush1.msra.mxu0 0.0
    %2027 = vmatprep.subr.mxu0 0.0
    %2028 = vmatpush1.msra.mxu0 0.0
    %2029 = vmatprep.subr.mxu0 0.0
    %2030 = vmatpush1.msra.mxu0 0.0
    %2031 = vmatprep.subr.mxu0 0.0
    %2032 = vmatpush1.msra.mxu0 0.0
    %2033 = vmatprep.mubr.f32.mxu0 0.0
    %2034 = vmatmul.mubr.f32.gmra.mrb[0].mxu0 %v1967
    %v2035 = vpop.f32.mrb[0].mxu0
    %v2036 = vadd.f32 0.0, %v2035
    %v2037 = vpop.f32.mrb[0].mxu0
    %2038 = vdwg.mxu0
    %v2039 = vadd.f32 %v1794, %v2036
    %2040 = vrot.lane.b32.xlu0 %v172, 32
    %v2041 = vpop.permute.xlu0 %2040
    %2042 = vrot.lane.b32.xlu0 %v249, 32
    %v2043 = vpop.permute.xlu0 %2042
    %v2044 = vsel %vm96, %v2041, 0
    %v2046 = vsel %vm96, %v2043, 0
    %2048 = vmatprep.subr.mxu0 0.0
    %2049 = vmatpush1.xpose.msra.mxu0 %v2046
    %2050 = vmatprep.subr.mxu0 0.0
    %2051 = vmatpush1.xpose.msra.mxu0 0.0
    %2052 = vmatprep.subr.mxu0 0.0
    %2053 = vmatpush1.xpose.msra.mxu0 0.0
    %2054 = vmatprep.subr.mxu0 0.0
    %2055 = vmatpush1.xpose.msra.mxu0 0.0
    %2056 = vmatprep.subr.mxu0 0.0
    %2057 = vmatpush1.xpose.msra.mxu0 0.0
    %2058 = vmatprep.subr.mxu0 0.0
    %2059 = vmatpush1.xpose.msra.mxu0 0.0
    %2060 = vmatprep.subr.mxu0 0.0
    %2061 = vmatpush1.xpose.msra.mxu0 0.0
    %2062 = vmatprep.subr.mxu0 0.0
    %2063 = vmatpush1.xpose.msra.mxu0 0.0
    %2064 = vmatprep.subr.mxu0 0.0
    %2065 = vmatpush1.xpose.msra.mxu0 0.0
    %2066 = vmatprep.subr.mxu0 0.0
    %2067 = vmatpush1.xpose.msra.mxu0 0.0
    %2068 = vmatprep.subr.mxu0 0.0
    %2069 = vmatpush1.xpose.msra.mxu0 0.0
    %2070 = vmatprep.subr.mxu0 0.0
    %2071 = vmatpush1.xpose.msra.mxu0 0.0
    %2072 = vmatprep.subr.mxu0 0.0
    %2073 = vmatpush1.xpose.msra.mxu0 0.0
    %2074 = vmatprep.subr.mxu0 0.0
    %2075 = vmatpush1.xpose.msra.mxu0 0.0
    %2076 = vmatprep.subr.mxu0 0.0
    %2077 = vmatpush1.xpose.msra.mxu0 0.0
    %2078 = vmatprep.subr.mxu0 0.0
    %2079 = vmatpush1.xpose.msra.mxu0 0.0
    %2080 = vmatprep.subr.mxu0 0.0
    %2081 = vmatpush1.xpose.msra.mxu0 0.0
    %2082 = vmatprep.subr.mxu0 0.0
    %2083 = vmatpush1.xpose.msra.mxu0 0.0
    %2084 = vmatprep.subr.mxu0 0.0
    %2085 = vmatpush1.xpose.msra.mxu0 0.0
    %2086 = vmatprep.subr.mxu0 0.0
    %2087 = vmatpush1.xpose.msra.mxu0 0.0
    %2088 = vmatprep.subr.mxu0 0.0
    %2089 = vmatpush1.xpose.msra.mxu0 0.0
    %2090 = vmatprep.subr.mxu0 0.0
    %2091 = vmatpush1.xpose.msra.mxu0 0.0
    %2092 = vmatprep.subr.mxu0 0.0
    %2093 = vmatpush1.xpose.msra.mxu0 0.0
    %2094 = vmatprep.subr.mxu0 0.0
    %2095 = vmatpush1.xpose.msra.mxu0 0.0
    %2096 = vmatprep.subr.mxu0 0.0
    %2097 = vmatpush1.xpose.msra.mxu0 0.0
    %2098 = vmatprep.subr.mxu0 0.0
    %2099 = vmatpush1.xpose.msra.mxu0 0.0
    %2100 = vmatprep.subr.mxu0 0.0
    %2101 = vmatpush1.xpose.msra.mxu0 0.0
    %2102 = vmatprep.subr.mxu0 0.0
    %2103 = vmatpush1.xpose.msra.mxu0 0.0
    %2104 = vmatprep.subr.mxu0 0.0
    %2105 = vmatpush1.xpose.msra.mxu0 0.0
    %2106 = vmatprep.subr.mxu0 0.0
    %2107 = vmatpush1.xpose.msra.mxu0 0.0
    %2108 = vmatprep.subr.mxu0 0.0
    %2109 = vmatpush1.xpose.msra.mxu0 0.0
    %2110 = vmatprep.subr.mxu0 0.0
    %2111 = vmatpush1.xpose.msra.mxu0 0.0
    %2112 = vmatprep.mubr.f32.mxu0 0.0
    %2113 = vmatmul.mubr.f32.gmra.mrb[0].mxu0 %v2044
    %v2114 = vpop.f32.mrb[0].mxu0
    %v2115 = vadd.f32 0.0, %v2114
    %v2116 = vpop.f32.mrb[0].mxu0
    %2117 = vdwg.mxu0
    %v2118 = vmul.f32 %v2115, 0.17677669
    %v2119 = vsel %vm412, %v2118, -inf
    %2120 = vmax.xlane.f32.xlu0 %v2119
    %v2121 = vpop.xlane.xlu0 %2120
    %v2122 = vsub.f32 %v2118, %v2121
    %v2123 = vmul.f32 %v2122, 1.442695
    %v2124 = vpow.pop %v2123
    %v2125 = vsel %vm412, %v2124, 0.0
    %2126 = vadd.xlane.f32.xlu0 %v2125
    %v2127 = vpop.xlane.xlu0 %2126
    %v2128 = vrcp.pop %v2127
    %v2129 = vmul.f32 %v2124, %v2128
    %2130 = vrot.lane.b32.xlu0 %v326, 32
    %v2131 = vpop.permute.xlu0 %2130
    %v2134 = vsel %vm412, %v2129, 0
    %2136 = vmatprep.subr.mxu0 0.0
    %2137 = vmatpush1.msra.mxu0 %v2131
    %2138 = vmatprep.subr.mxu0 0.0
    %2139 = vmatpush1.msra.mxu0 0.0
    %2140 = vmatprep.subr.mxu0 0.0
    %2141 = vmatpush1.msra.mxu0 0.0
    %2142 = vmatprep.subr.mxu0 0.0
    %2143 = vmatpush1.msra.mxu0 0.0
    %2144 = vmatprep.subr.mxu0 0.0
    %2145 = vmatpush1.msra.mxu0 0.0
    %2146 = vmatprep.subr.mxu0 0.0
    %2147 = vmatpush1.msra.mxu0 0.0
    %2148 = vmatprep.subr.mxu0 0.0
    %2149 = vmatpush1.msra.mxu0 0.0
    %2150 = vmatprep.subr.mxu0 0.0
    %2151 = vmatpush1.msra.mxu0 0.0
    %2152 = vmatprep.subr.mxu0 0.0
    %2153 = vmatpush1.msra.mxu0 0.0
    %2154 = vmatprep.subr.mxu0 0.0
    %2155 = vmatpush1.msra.mxu0 0.0
    %2156 = vmatprep.subr.mxu0 0.0
    %2157 = vmatpush1.msra.mxu0 0.0
    %2158 = vmatprep.subr.mxu0 0.0
    %2159 = vmatpush1.msra.mxu0 0.0
    %2160 = vmatprep.subr.mxu0 0.0
    %2161 = vmatpush1.msra.mxu0 0.0
    %2162 = vmatprep.subr.mxu0 0.0
    %2163 = vmatpush1.msra.mxu0 0.0
    %2164 = vmatprep.subr.mxu0 0.0
    %2165 = vmatpush1.msra.mxu0 0.0
    %2166 = vmatprep.subr.mxu0 0.0
    %2167 = vmatpush1.msra.mxu0 0.0
    %2168 = vmatprep.subr.mxu0 0.0
    %2169 = vmatpush1.msra.mxu0 0.0
    %2170 = vmatprep.subr.mxu0 0.0
    %2171 = vmatpush1.msra.mxu0 0.0
    %2172 = vmatprep.subr.mxu0 0.0
    %2173 = vmatpush1.msra.mxu0 0.0
    %2174 = vmatprep.subr.mxu0 0.0
    %2175 = vmatpush1.msra.mxu0 0.0
    %2176 = vmatprep.subr.mxu0 0.0
    %2177 = vmatpush1.msra.mxu0 0.0
    %2178 = vmatprep.subr.mxu0 0.0
    %2179 = vmatpush1.msra.mxu0 0.0
    %2180 = vmatprep.subr.mxu0 0.0
    %2181 = vmatpush1.msra.mxu0 0.0
    %2182 = vmatprep.subr.mxu0 0.0
    %2183 = vmatpush1.msra.mxu0 0.0
    %2184 = vmatprep.subr.mxu0 0.0
    %2185 = vmatpush1.msra.mxu0 0.0
    %2186 = vmatprep.subr.mxu0 0.0
    %2187 = vmatpush1.msra.mxu0 0.0
    %2188 = vmatprep.subr.mxu0 0.0
    %2189 = vmatpush1.msra.mxu0 0.0
    %2190 = vmatprep.subr.mxu0 0.0
    %2191 = vmatpush1.msra.mxu0 0.0
    %2192 = vmatprep.subr.mxu0 0.0
    %2193 = vmatpush1.msra.mxu0 0.0
    %2194 = vmatprep.subr.mxu0 0.0
    %2195 = vmatpush1.msra.mxu0 0.0
    %2196 = vmatprep.subr.mxu0 0.0
    %2197 = vmatpush1.msra.mxu0 0.0
    %2198 = vmatprep.subr.mxu0 0.0
    %2199 = vmatpush1.msra.mxu0 0.0
    %2200 = vmatprep.mubr.f32.mxu0 0.0
    %2201 = vmatmul.mubr.f32.gmra.mrb[0].mxu0 %v2134
    %v2202 = vpop.f32.mrb[0].mxu0
    %v2203 = vadd.f32 0.0, %v2202
    %v2204 = vpop.f32.mrb[0].mxu0
    %2205 = vdwg.mxu0
    %s2206 = scalar_lea.vmem [#allocation5], 224
    %v2207 = vld [vmem:[%s2206] sm:$0xff]
    %v2208 = vld [vmem:[%s2206 + $0x8] sm:$0xff]
    %v2209 = vld [vmem:[%s2206 + $0x10] sm:$0xff]
    %v2210 = vld [vmem:[%s2206 + $0x18] sm:$0xff]
    %v2212 = vsel %vm96, %v2203, 0
    %2214 = vmatprep.subr.mxu0 0.0
    %2215 = vmatpush1.msra.mxu0 %v2207
    %2216 = vmatprep.subr.mxu0 0.0
    %2217 = vmatpush1.msra.mxu0 %v2208
    %2218 = vmatprep.subr.mxu0 0.0
    %2219 = vmatpush1.msra.mxu0 %v2209
    %2220 = vmatprep.subr.mxu0 0.0
    %2221 = vmatpush1.msra.mxu0 %v2210
    %2222 = vmatprep.subr.mxu0 0.0
    %2223 = vmatpush1.msra.mxu0 0.0
    %2224 = vmatprep.subr.mxu0 0.0
    %2225 = vmatpush1.msra.mxu0 0.0
    %2226 = vmatprep.subr.mxu0 0.0
    %2227 = vmatpush1.msra.mxu0 0.0
    %2228 = vmatprep.subr.mxu0 0.0
    %2229 = vmatpush1.msra.mxu0 0.0
    %2230 = vmatprep.subr.mxu0 0.0
    %2231 = vmatpush1.msra.mxu0 0.0
    %2232 = vmatprep.subr.mxu0 0.0
    %2233 = vmatpush1.msra.mxu0 0.0
    %2234 = vmatprep.subr.mxu0 0.0
    %2235 = vmatpush1.msra.mxu0 0.0
    %2236 = vmatprep.subr.mxu0 0.0
    %2237 = vmatpush1.msra.mxu0 0.0
    %2238 = vmatprep.subr.mxu0 0.0
    %2239 = vmatpush1.msra.mxu0 0.0
    %2240 = vmatprep.subr.mxu0 0.0
    %2241 = vmatpush1.msra.mxu0 0.0
    %2242 = vmatprep.subr.mxu0 0.0
    %2243 = vmatpush1.msra.mxu0 0.0
    %2244 = vmatprep.subr.mxu0 0.0
    %2245 = vmatpush1.msra.mxu0 0.0
    %2246 = vmatprep.subr.mxu0 0.0
    %2247 = vmatpush1.msra.mxu0 0.0
    %2248 = vmatprep.subr.mxu0 0.0
    %2249 = vmatpush1.msra.mxu0 0.0
    %2250 = vmatprep.subr.mxu0 0.0
    %2251 = vmatpush1.msra.mxu0 0.0
    %2252 = vmatprep.subr.mxu0 0.0
    %2253 = vmatpush1.msra.mxu0 0.0
    %2254 = vmatprep.subr.mxu0 0.0
    %2255 = vmatpush1.msra.mxu0 0.0
    %2256 = vmatprep.subr.mxu0 0.0
    %2257 = vmatpush1.msra.mxu0 0.0
    %2258 = vmatprep.subr.mxu0 0.0
    %2259 = vmatpush1.msra.mxu0 0.0
    %2260 = vmatprep.subr.mxu0 0.0
    %2261 = vmatpush1.msra.mxu0 0.0
    %2262 = vmatprep.subr.mxu0 0.0
    %2263 = vmatpush1.msra.mxu0 0.0
    %2264 = vmatprep.subr.mxu0 0.0
    %2265 = vmatpush1.msra.mxu0 0.0
    %2266 = vmatprep.subr.mxu0 0.0
    %2267 = vmatpush1.msra.mxu0 0.0
    %2268 = vmatprep.subr.mxu0 0.0
    %2269 = vmatpush1.msra.mxu0 0.0
    %2270 = vmatprep.subr.mxu0 0.0
    %2271 = vmatpush1.msra.mxu0 0.0
    %2272 = vmatprep.subr.mxu0 0.0
    %2273 = vmatpush1.msra.mxu0 0.0
    %2274 = vmatprep.subr.mxu0 0.0
    %2275 = vmatpush1.msra.mxu0 0.0
    %2276 = vmatprep.subr.mxu0 0.0
    %2277 = vmatpush1.msra.mxu0 0.0
    %2278 = vmatprep.mubr.f32.mxu0 0.0
    %2279 = vmatmul.mubr.f32.gmra.mrb[0].mxu0 %v2212
    %v2280 = vpop.f32.mrb[0].mxu0
    %v2281 = vadd.f32 0.0, %v2280
    %v2282 = vpop.f32.mrb[0].mxu0
    %2283 = vdwg.mxu0
    %v2284 = vadd.f32 %v2039, %v2281
    %v2286 = vlaneseq
    %v2287 = vshrl.u32 %v2286, 7
    %v2288 = vsub.s32 0, %v2287
    %v2289 = vrot.slane %v334, %v2288
    %v2291 = vadd.f32 %v2284, %v2289
    %v2293 = vsel %vm96, %v176, 0
    %v2296 = vsel %vm96, %v253, 0
    %2298 = vmatprep.subr.mxu0 0.0
    %2299 = vmatpush1.xpose.msra.mxu0 %v2296
    %2300 = vmatprep.subr.mxu0 0.0
    %2301 = vmatpush1.xpose.msra.mxu0 0.0
    %2302 = vmatprep.subr.mxu0 0.0
    %2303 = vmatpush1.xpose.msra.mxu0 0.0
    %2304 = vmatprep.subr.mxu0 0.0
    %2305 = vmatpush1.xpose.msra.mxu0 0.0
    %2306 = vmatprep.subr.mxu0 0.0
    %2307 = vmatpush1.xpose.msra.mxu0 0.0
    %2308 = vmatprep.subr.mxu0 0.0
    %2309 = vmatpush1.xpose.msra.mxu0 0.0
    %2310 = vmatprep.subr.mxu0 0.0
    %2311 = vmatpush1.xpose.msra.mxu0 0.0
    %2312 = vmatprep.subr.mxu0 0.0
    %2313 = vmatpush1.xpose.msra.mxu0 0.0
    %2314 = vmatprep.subr.mxu0 0.0
    %2315 = vmatpush1.xpose.msra.mxu0 0.0
    %2316 = vmatprep.subr.mxu0 0.0
    %2317 = vmatpush1.xpose.msra.mxu0 0.0
    %2318 = vmatprep.subr.mxu0 0.0
    %2319 = vmatpush1.xpose.msra.mxu0 0.0
    %2320 = vmatprep.subr.mxu0 0.0
    %2321 = vmatpush1.xpose.msra.mxu0 0.0
    %2322 = vmatprep.subr.mxu0 0.0
    %2323 = vmatpush1.xpose.msra.mxu0 0.0
    %2324 = vmatprep.subr.mxu0 0.0
    %2325 = vmatpush1.xpose.msra.mxu0 0.0
    %2326 = vmatprep.subr.mxu0 0.0
    %2327 = vmatpush1.xpose.msra.mxu0 0.0
    %2328 = vmatprep.subr.mxu0 0.0
    %2329 = vmatpush1.xpose.msra.mxu0 0.0
    %2330 = vmatprep.subr.mxu0 0.0
    %2331 = vmatpush1.xpose.msra.mxu0 0.0
    %2332 = vmatprep.subr.mxu0 0.0
    %2333 = vmatpush1.xpose.msra.mxu0 0.0
    %2334 = vmatprep.subr.mxu0 0.0
    %2335 = vmatpush1.xpose.msra.mxu0 0.0
    %2336 = vmatprep.subr.mxu0 0.0
    %2337 = vmatpush1.xpose.msra.mxu0 0.0
    %2338 = vmatprep.subr.mxu0 0.0
    %2339 = vmatpush1.xpose.msra.mxu0 0.0
    %2340 = vmatprep.subr.mxu0 0.0
    %2341 = vmatpush1.xpose.msra.mxu0 0.0
    %2342 = vmatprep.subr.mxu0 0.0
    %2343 = vmatpush1.xpose.msra.mxu0 0.0
    %2344 = vmatprep.subr.mxu0 0.0
    %2345 = vmatpush1.xpose.msra.mxu0 0.0
    %2346 = vmatprep.subr.mxu0 0.0
    %2347 = vmatpush1.xpose.msra.mxu0 0.0
    %2348 = vmatprep.subr.mxu0 0.0
    %2349 = vmatpush1.xpose.msra.mxu0 0.0
    %2350 = vmatprep.subr.mxu0 0.0
    %2351 = vmatpush1.xpose.msra.mxu0 0.0
    %2352 = vmatprep.subr.mxu0 0.0
    %2353 = vmatpush1.xpose.msra.mxu0 0.0
    %2354 = vmatprep.subr.mxu0 0.0
    %2355 = vmatpush1.xpose.msra.mxu0 0.0
    %2356 = vmatprep.subr.mxu0 0.0
    %2357 = vmatpush1.xpose.msra.mxu0 0.0
    %2358 = vmatprep.subr.mxu0 0.0
    %2359 = vmatpush1.xpose.msra.mxu0 0.0
    %2360 = vmatprep.subr.mxu0 0.0
    %2361 = vmatpush1.xpose.msra.mxu0 0.0
    %2362 = vmatprep.mubr.f32.mxu0 0.0
    %2363 = vmatmul.mubr.f32.gmra.mrb[0].mxu0 %v2293
    %v2364 = vpop.f32.mrb[0].mxu0
    %v2365 = vadd.f32 0.0, %v2364
    %v2366 = vpop.f32.mrb[0].mxu0
    %2367 = vdwg.mxu0
    %v2368 = vmul.f32 %v2365, 0.17677669
    %v2369 = vsel %vm412, %v2368, -inf
    %2370 = vmax.xlane.f32.xlu0 %v2369
    %v2371 = vpop.xlane.xlu0 %2370
    %v2372 = vsub.f32 %v2368, %v2371
    %v2373 = vmul.f32 %v2372, 1.442695
    %v2374 = vpow.pop %v2373
    %v2375 = vsel %vm412, %v2374, 0.0
    %2376 = vadd.xlane.f32.xlu0 %v2375
    %v2377 = vpop.xlane.xlu0 %2376
    %v2378 = vrcp.pop %v2377
    %v2379 = vmul.f32 %v2374, %v2378
    %v2381 = vsel %vm412, %v2379, 0
    %2383 = vmatprep.subr.mxu0 0.0
    %2384 = vmatpush1.msra.mxu0 %v330
    %2385 = vmatprep.subr.mxu0 0.0
    %2386 = vmatpush1.msra.mxu0 0.0
    %2387 = vmatprep.subr.mxu0 0.0
    %2388 = vmatpush1.msra.mxu0 0.0
    %2389 = vmatprep.subr.mxu0 0.0
    %2390 = vmatpush1.msra.mxu0 0.0
    %2391 = vmatprep.subr.mxu0 0.0
    %2392 = vmatpush1.msra.mxu0 0.0
    %2393 = vmatprep.subr.mxu0 0.0
    %2394 = vmatpush1.msra.mxu0 0.0
    %2395 = vmatprep.subr.mxu0 0.0
    %2396 = vmatpush1.msra.mxu0 0.0
    %2397 = vmatprep.subr.mxu0 0.0
    %2398 = vmatpush1.msra.mxu0 0.0
    %2399 = vmatprep.subr.mxu0 0.0
    %2400 = vmatpush1.msra.mxu0 0.0
    %2401 = vmatprep.subr.mxu0 0.0
    %2402 = vmatpush1.msra.mxu0 0.0
    %2403 = vmatprep.subr.mxu0 0.0
    %2404 = vmatpush1.msra.mxu0 0.0
    %2405 = vmatprep.subr.mxu0 0.0
    %2406 = vmatpush1.msra.mxu0 0.0
    %2407 = vmatprep.subr.mxu0 0.0
    %2408 = vmatpush1.msra.mxu0 0.0
    %2409 = vmatprep.subr.mxu0 0.0
    %2410 = vmatpush1.msra.mxu0 0.0
    %2411 = vmatprep.subr.mxu0 0.0
    %2412 = vmatpush1.msra.mxu0 0.0
    %2413 = vmatprep.subr.mxu0 0.0
    %2414 = vmatpush1.msra.mxu0 0.0
    %2415 = vmatprep.subr.mxu0 0.0
    %2416 = vmatpush1.msra.mxu0 0.0
    %2417 = vmatprep.subr.mxu0 0.0
    %2418 = vmatpush1.msra.mxu0 0.0
    %2419 = vmatprep.subr.mxu0 0.0
    %2420 = vmatpush1.msra.mxu0 0.0
    %2421 = vmatprep.subr.mxu0 0.0
    %2422 = vmatpush1.msra.mxu0 0.0
    %2423 = vmatprep.subr.mxu0 0.0
    %2424 = vmatpush1.msra.mxu0 0.0
    %2425 = vmatprep.subr.mxu0 0.0
    %2426 = vmatpush1.msra.mxu0 0.0
    %2427 = vmatprep.subr.mxu0 0.0
    %2428 = vmatpush1.msra.mxu0 0.0
    %2429 = vmatprep.subr.mxu0 0.0
    %2430 = vmatpush1.msra.mxu0 0.0
    %2431 = vmatprep.subr.mxu0 0.0
    %2432 = vmatpush1.msra.mxu0 0.0
    %2433 = vmatprep.subr.mxu0 0.0
    %2434 = vmatpush1.msra.mxu0 0.0
    %2435 = vmatprep.subr.mxu0 0.0
    %2436 = vmatpush1.msra.mxu0 0.0
    %2437 = vmatprep.subr.mxu0 0.0
    %2438 = vmatpush1.msra.mxu0 0.0
    %2439 = vmatprep.subr.mxu0 0.0
    %2440 = vmatpush1.msra.mxu0 0.0
    %2441 = vmatprep.subr.mxu0 0.0
    %2442 = vmatpush1.msra.mxu0 0.0
    %2443 = vmatprep.subr.mxu0 0.0
    %2444 = vmatpush1.msra.mxu0 0.0
    %2445 = vmatprep.subr.mxu0 0.0
    %2446 = vmatpush1.msra.mxu0 0.0
    %2447 = vmatprep.mubr.f32.mxu0 0.0
    %2448 = vmatmul.mubr.f32.gmra.mrb[0].mxu0 %v2381
    %v2449 = vpop.f32.mrb[0].mxu0
    %v2450 = vadd.f32 0.0, %v2449
    %v2451 = vpop.f32.mrb[0].mxu0
    %2452 = vdwg.mxu0
    %2453 = vrot.lane.b32.xlu0 %v176, 96
    %v2454 = vpop.permute.xlu0 %2453
    %2455 = vrot.lane.b32.xlu0 %v253, 96
    %v2456 = vpop.permute.xlu0 %2455
    %v2457 = vsel %vm96, %v2454, 0
    %v2459 = vsel %vm96, %v2456, 0
    %2461 = vmatprep.subr.mxu0 0.0
    %2462 = vmatpush1.xpose.msra.mxu0 %v2459
    %2463 = vmatprep.subr.mxu0 0.0
    %2464 = vmatpush1.xpose.msra.mxu0 0.0
    %2465 = vmatprep.subr.mxu0 0.0
    %2466 = vmatpush1.xpose.msra.mxu0 0.0
    %2467 = vmatprep.subr.mxu0 0.0
    %2468 = vmatpush1.xpose.msra.mxu0 0.0
    %2469 = vmatprep.subr.mxu0 0.0
    %2470 = vmatpush1.xpose.msra.mxu0 0.0
    %2471 = vmatprep.subr.mxu0 0.0
    %2472 = vmatpush1.xpose.msra.mxu0 0.0
    %2473 = vmatprep.subr.mxu0 0.0
    %2474 = vmatpush1.xpose.msra.mxu0 0.0
    %2475 = vmatprep.subr.mxu0 0.0
    %2476 = vmatpush1.xpose.msra.mxu0 0.0
    %2477 = vmatprep.subr.mxu0 0.0
    %2478 = vmatpush1.xpose.msra.mxu0 0.0
    %2479 = vmatprep.subr.mxu0 0.0
    %2480 = vmatpush1.xpose.msra.mxu0 0.0
    %2481 = vmatprep.subr.mxu0 0.0
    %2482 = vmatpush1.xpose.msra.mxu0 0.0
    %2483 = vmatprep.subr.mxu0 0.0
    %2484 = vmatpush1.xpose.msra.mxu0 0.0
    %2485 = vmatprep.subr.mxu0 0.0
    %2486 = vmatpush1.xpose.msra.mxu0 0.0
    %2487 = vmatprep.subr.mxu0 0.0
    %2488 = vmatpush1.xpose.msra.mxu0 0.0
    %2489 = vmatprep.subr.mxu0 0.0
    %2490 = vmatpush1.xpose.msra.mxu0 0.0
    %2491 = vmatprep.subr.mxu0 0.0
    %2492 = vmatpush1.xpose.msra.mxu0 0.0
    %2493 = vmatprep.subr.mxu0 0.0
    %2494 = vmatpush1.xpose.msra.mxu0 0.0
    %2495 = vmatprep.subr.mxu0 0.0
    %2496 = vmatpush1.xpose.msra.mxu0 0.0
    %2497 = vmatprep.subr.mxu0 0.0
    %2498 = vmatpush1.xpose.msra.mxu0 0.0
    %2499 = vmatprep.subr.mxu0 0.0
    %2500 = vmatpush1.xpose.msra.mxu0 0.0
    %2501 = vmatprep.subr.mxu0 0.0
    %2502 = vmatpush1.xpose.msra.mxu0 0.0
    %2503 = vmatprep.subr.mxu0 0.0
    %2504 = vmatpush1.xpose.msra.mxu0 0.0
    %2505 = vmatprep.subr.mxu0 0.0
    %2506 = vmatpush1.xpose.msra.mxu0 0.0
    %2507 = vmatprep.subr.mxu0 0.0
    %2508 = vmatpush1.xpose.msra.mxu0 0.0
    %2509 = vmatprep.subr.mxu0 0.0
    %2510 = vmatpush1.xpose.msra.mxu0 0.0
    %2511 = vmatprep.subr.mxu0 0.0
    %2512 = vmatpush1.xpose.msra.mxu0 0.0
    %2513 = vmatprep.subr.mxu0 0.0
    %2514 = vmatpush1.xpose.msra.mxu0 0.0
    %2515 = vmatprep.subr.mxu0 0.0
    %2516 = vmatpush1.xpose.msra.mxu0 0.0
    %2517 = vmatprep.subr.mxu0 0.0
    %2518 = vmatpush1.xpose.msra.mxu0 0.0
    %2519 = vmatprep.subr.mxu0 0.0
    %2520 = vmatpush1.xpose.msra.mxu0 0.0
    %2521 = vmatprep.subr.mxu0 0.0
    %2522 = vmatpush1.xpose.msra.mxu0 0.0
    %2523 = vmatprep.subr.mxu0 0.0
    %2524 = vmatpush1.xpose.msra.mxu0 0.0
    %2525 = vmatprep.mubr.f32.mxu0 0.0
    %2526 = vmatmul.mubr.f32.gmra.mrb[0].mxu0 %v2457
    %v2527 = vpop.f32.mrb[0].mxu0
    %v2528 = vadd.f32 0.0, %v2527
    %v2529 = vpop.f32.mrb[0].mxu0
    %2530 = vdwg.mxu0
    %v2531 = vmul.f32 %v2528, 0.17677669
    %v2532 = vsel %vm412, %v2531, -inf
    %2533 = vmax.xlane.f32.xlu0 %v2532
    %v2534 = vpop.xlane.xlu0 %2533
    %v2535 = vsub.f32 %v2531, %v2534
    %v2536 = vmul.f32 %v2535, 1.442695
    %v2537 = vpow.pop %v2536
    %v2538 = vsel %vm412, %v2537, 0.0
    %2539 = vadd.xlane.f32.xlu0 %v2538
    %v2540 = vpop.xlane.xlu0 %2539
    %v2541 = vrcp.pop %v2540
    %v2542 = vmul.f32 %v2537, %v2541
    %2544 = vrot.lane.b32.xlu0 %v330, 96
    %v2545 = vpop.permute.xlu0 %2544
    %v2548 = vsel %vm412, %v2542, 0
    %2550 = vmatprep.subr.mxu0 0.0
    %2551 = vmatpush1.msra.mxu0 %v2545
    %2552 = vmatprep.subr.mxu0 0.0
    %2553 = vmatpush1.msra.mxu0 0.0
    %2554 = vmatprep.subr.mxu0 0.0
    %2555 = vmatpush1.msra.mxu0 0.0
    %2556 = vmatprep.subr.mxu0 0.0
    %2557 = vmatpush1.msra.mxu0 0.0
    %2558 = vmatprep.subr.mxu0 0.0
    %2559 = vmatpush1.msra.mxu0 0.0
    %2560 = vmatprep.subr.mxu0 0.0
    %2561 = vmatpush1.msra.mxu0 0.0
    %2562 = vmatprep.subr.mxu0 0.0
    %2563 = vmatpush1.msra.mxu0 0.0
    %2564 = vmatprep.subr.mxu0 0.0
    %2565 = vmatpush1.msra.mxu0 0.0
    %2566 = vmatprep.subr.mxu0 0.0
    %2567 = vmatpush1.msra.mxu0 0.0
    %2568 = vmatprep.subr.mxu0 0.0
    %2569 = vmatpush1.msra.mxu0 0.0
    %2570 = vmatprep.subr.mxu0 0.0
    %2571 = vmatpush1.msra.mxu0 0.0
    %2572 = vmatprep.subr.mxu0 0.0
    %2573 = vmatpush1.msra.mxu0 0.0
    %2574 = vmatprep.subr.mxu0 0.0
    %2575 = vmatpush1.msra.mxu0 0.0
    %2576 = vmatprep.subr.mxu0 0.0
    %2577 = vmatpush1.msra.mxu0 0.0
    %2578 = vmatprep.subr.mxu0 0.0
    %2579 = vmatpush1.msra.mxu0 0.0
    %2580 = vmatprep.subr.mxu0 0.0
    %2581 = vmatpush1.msra.mxu0 0.0
    %2582 = vmatprep.subr.mxu0 0.0
    %2583 = vmatpush1.msra.mxu0 0.0
    %2584 = vmatprep.subr.mxu0 0.0
    %2585 = vmatpush1.msra.mxu0 0.0
    %2586 = vmatprep.subr.mxu0 0.0
    %2587 = vmatpush1.msra.mxu0 0.0
    %2588 = vmatprep.subr.mxu0 0.0
    %2589 = vmatpush1.msra.mxu0 0.0
    %2590 = vmatprep.subr.mxu0 0.0
    %2591 = vmatpush1.msra.mxu0 0.0
    %2592 = vmatprep.subr.mxu0 0.0
    %2593 = vmatpush1.msra.mxu0 0.0
    %2594 = vmatprep.subr.mxu0 0.0
    %2595 = vmatpush1.msra.mxu0 0.0
    %2596 = vmatprep.subr.mxu0 0.0
    %2597 = vmatpush1.msra.mxu0 0.0
    %2598 = vmatprep.subr.mxu0 0.0
    %2599 = vmatpush1.msra.mxu0 0.0
    %2600 = vmatprep.subr.mxu0 0.0
    %2601 = vmatpush1.msra.mxu0 0.0
    %2602 = vmatprep.subr.mxu0 0.0
    %2603 = vmatpush1.msra.mxu0 0.0
    %2604 = vmatprep.subr.mxu0 0.0
    %2605 = vmatpush1.msra.mxu0 0.0
    %2606 = vmatprep.subr.mxu0 0.0
    %2607 = vmatpush1.msra.mxu0 0.0
    %2608 = vmatprep.subr.mxu0 0.0
    %2609 = vmatpush1.msra.mxu0 0.0
    %2610 = vmatprep.subr.mxu0 0.0
    %2611 = vmatpush1.msra.mxu0 0.0
    %2612 = vmatprep.subr.mxu0 0.0
    %2613 = vmatpush1.msra.mxu0 0.0
    %2614 = vmatprep.mubr.f32.mxu0 0.0
    %2615 = vmatmul.mubr.f32.gmra.mrb[0].mxu0 %v2548
    %v2616 = vpop.f32.mrb[0].mxu0
    %v2617 = vadd.f32 0.0, %v2616
    %v2618 = vpop.f32.mrb[0].mxu0
    %2619 = vdwg.mxu0
    %v2621 = vsel %vm96, %v2617, 0
    %2623 = vmatprep.subr.mxu0 0.0
    %2624 = vmatpush1.msra.mxu0 %v669
    %2625 = vmatprep.subr.mxu0 0.0
    %2626 = vmatpush1.msra.mxu0 %v670
    %2627 = vmatprep.subr.mxu0 0.0
    %2628 = vmatpush1.msra.mxu0 %v671
    %2629 = vmatprep.subr.mxu0 0.0
    %2630 = vmatpush1.msra.mxu0 %v672
    %2631 = vmatprep.subr.mxu0 0.0
    %2632 = vmatpush1.msra.mxu0 0.0
    %2633 = vmatprep.subr.mxu0 0.0
    %2634 = vmatpush1.msra.mxu0 0.0
    %2635 = vmatprep.subr.mxu0 0.0
    %2636 = vmatpush1.msra.mxu0 0.0
    %2637 = vmatprep.subr.mxu0 0.0
    %2638 = vmatpush1.msra.mxu0 0.0
    %2639 = vmatprep.subr.mxu0 0.0
    %2640 = vmatpush1.msra.mxu0 0.0
    %2641 = vmatprep.subr.mxu0 0.0
    %2642 = vmatpush1.msra.mxu0 0.0
    %2643 = vmatprep.subr.mxu0 0.0
    %2644 = vmatpush1.msra.mxu0 0.0
    %2645 = vmatprep.subr.mxu0 0.0
    %2646 = vmatpush1.msra.mxu0 0.0
    %2647 = vmatprep.subr.mxu0 0.0
    %2648 = vmatpush1.msra.mxu0 0.0
    %2649 = vmatprep.subr.mxu0 0.0
    %2650 = vmatpush1.msra.mxu0 0.0
    %2651 = vmatprep.subr.mxu0 0.0
    %2652 = vmatpush1.msra.mxu0 0.0
    %2653 = vmatprep.subr.mxu0 0.0
    %2654 = vmatpush1.msra.mxu0 0.0
    %2655 = vmatprep.subr.mxu0 0.0
    %2656 = vmatpush1.msra.mxu0 0.0
    %2657 = vmatprep.subr.mxu0 0.0
    %2658 = vmatpush1.msra.mxu0 0.0
    %2659 = vmatprep.subr.mxu0 0.0
    %2660 = vmatpush1.msra.mxu0 0.0
    %2661 = vmatprep.subr.mxu0 0.0
    %2662 = vmatpush1.msra.mxu0 0.0
    %2663 = vmatprep.subr.mxu0 0.0
    %2664 = vmatpush1.msra.mxu0 0.0
    %2665 = vmatprep.subr.mxu0 0.0
    %2666 = vmatpush1.msra.mxu0 0.0
    %2667 = vmatprep.subr.mxu0 0.0
    %2668 = vmatpush1.msra.mxu0 0.0
    %2669 = vmatprep.subr.mxu0 0.0
    %2670 = vmatpush1.msra.mxu0 0.0
    %2671 = vmatprep.subr.mxu0 0.0
    %2672 = vmatpush1.msra.mxu0 0.0
    %2673 = vmatprep.subr.mxu0 0.0
    %2674 = vmatpush1.msra.mxu0 0.0
    %2675 = vmatprep.subr.mxu0 0.0
    %2676 = vmatpush1.msra.mxu0 0.0
    %2677 = vmatprep.subr.mxu0 0.0
    %2678 = vmatpush1.msra.mxu0 0.0
    %2679 = vmatprep.subr.mxu0 0.0
    %2680 = vmatpush1.msra.mxu0 0.0
    %2681 = vmatprep.subr.mxu0 0.0
    %2682 = vmatpush1.msra.mxu0 0.0
    %2683 = vmatprep.subr.mxu0 0.0
    %2684 = vmatpush1.msra.mxu0 0.0
    %2685 = vmatprep.subr.mxu0 0.0
    %2686 = vmatpush1.msra.mxu0 0.0
    %2687 = vmatprep.mubr.f32.mxu0 0.0
    %2688 = vmatmul.mubr.f32.gmra.mrb[0].mxu0 %v2621
    %v2689 = vpop.f32.mrb[0].mxu0
    %v2690 = vadd.f32 0.0, %v2689
    %v2691 = vpop.f32.mrb[0].mxu0
    %2692 = vdwg.mxu0
    %v2694 = vsel %vm96, %v2450, 0
    %2696 = vmatprep.subr.mxu0 0.0
    %2697 = vmatpush1.msra.mxu0 %v497
    %2698 = vmatprep.subr.mxu0 0.0
    %2699 = vmatpush1.msra.mxu0 %v498
    %2700 = vmatprep.subr.mxu0 0.0
    %2701 = vmatpush1.msra.mxu0 %v499
    %2702 = vmatprep.subr.mxu0 0.0
    %2703 = vmatpush1.msra.mxu0 %v500
    %2704 = vmatprep.subr.mxu0 0.0
    %2705 = vmatpush1.msra.mxu0 0.0
    %2706 = vmatprep.subr.mxu0 0.0
    %2707 = vmatpush1.msra.mxu0 0.0
    %2708 = vmatprep.subr.mxu0 0.0
    %2709 = vmatpush1.msra.mxu0 0.0
    %2710 = vmatprep.subr.mxu0 0.0
    %2711 = vmatpush1.msra.mxu0 0.0
    %2712 = vmatprep.subr.mxu0 0.0
    %2713 = vmatpush1.msra.mxu0 0.0
    %2714 = vmatprep.subr.mxu0 0.0
    %2715 = vmatpush1.msra.mxu0 0.0
    %2716 = vmatprep.subr.mxu0 0.0
    %2717 = vmatpush1.msra.mxu0 0.0
    %2718 = vmatprep.subr.mxu0 0.0
    %2719 = vmatpush1.msra.mxu0 0.0
    %2720 = vmatprep.subr.mxu0 0.0
    %2721 = vmatpush1.msra.mxu0 0.0
    %2722 = vmatprep.subr.mxu0 0.0
    %2723 = vmatpush1.msra.mxu0 0.0
    %2724 = vmatprep.subr.mxu0 0.0
    %2725 = vmatpush1.msra.mxu0 0.0
    %2726 = vmatprep.subr.mxu0 0.0
    %2727 = vmatpush1.msra.mxu0 0.0
    %2728 = vmatprep.subr.mxu0 0.0
    %2729 = vmatpush1.msra.mxu0 0.0
    %2730 = vmatprep.subr.mxu0 0.0
    %2731 = vmatpush1.msra.mxu0 0.0
    %2732 = vmatprep.subr.mxu0 0.0
    %2733 = vmatpush1.msra.mxu0 0.0
    %2734 = vmatprep.subr.mxu0 0.0
    %2735 = vmatpush1.msra.mxu0 0.0
    %2736 = vmatprep.subr.mxu0 0.0
    %2737 = vmatpush1.msra.mxu0 0.0
    %2738 = vmatprep.subr.mxu0 0.0
    %2739 = vmatpush1.msra.mxu0 0.0
    %2740 = vmatprep.subr.mxu0 0.0
    %2741 = vmatpush1.msra.mxu0 0.0
    %2742 = vmatprep.subr.mxu0 0.0
    %2743 = vmatpush1.msra.mxu0 0.0
    %2744 = vmatprep.subr.mxu0 0.0
    %2745 = vmatpush1.msra.mxu0 0.0
    %2746 = vmatprep.subr.mxu0 0.0
    %2747 = vmatpush1.msra.mxu0 0.0
    %2748 = vmatprep.subr.mxu0 0.0
    %2749 = vmatpush1.msra.mxu0 0.0
    %2750 = vmatprep.subr.mxu0 0.0
    %2751 = vmatpush1.msra.mxu0 0.0
    %2752 = vmatprep.subr.mxu0 0.0
    %2753 = vmatpush1.msra.mxu0 0.0
    %2754 = vmatprep.subr.mxu0 0.0
    %2755 = vmatpush1.msra.mxu0 0.0
    %2756 = vmatprep.subr.mxu0 0.0
    %2757 = vmatpush1.msra.mxu0 0.0
    %2758 = vmatprep.subr.mxu0 0.0
    %2759 = vmatpush1.msra.mxu0 0.0
    %2760 = vmatprep.mubr.f32.mxu0 0.0
    %2761 = vmatmul.mubr.f32.gmra.mrb[0].mxu0 %v2694
    %v2762 = vpop.f32.mrb[0].mxu0
    %v2763 = vadd.f32 %v2690, %v2762
    %v2764 = vpop.f32.mrb[0].mxu0
    %2765 = vdwg.mxu0
    %2766 = vrot.lane.b32.xlu0 %v176, 64
    %v2767 = vpop.permute.xlu0 %2766
    %2768 = vrot.lane.b32.xlu0 %v253, 64
    %v2769 = vpop.permute.xlu0 %2768
    %v2770 = vsel %vm96, %v2767, 0
    %v2772 = vsel %vm96, %v2769, 0
    %2774 = vmatprep.subr.mxu0 0.0
    %2775 = vmatpush1.xpose.msra.mxu0 %v2772
    %2776 = vmatprep.subr.mxu0 0.0
    %2777 = vmatpush1.xpose.msra.mxu0 0.0
    %2778 = vmatprep.subr.mxu0 0.0
    %2779 = vmatpush1.xpose.msra.mxu0 0.0
    %2780 = vmatprep.subr.mxu0 0.0
    %2781 = vmatpush1.xpose.msra.mxu0 0.0
    %2782 = vmatprep.subr.mxu0 0.0
    %2783 = vmatpush1.xpose.msra.mxu0 0.0
    %2784 = vmatprep.subr.mxu0 0.0
    %2785 = vmatpush1.xpose.msra.mxu0 0.0
    %2786 = vmatprep.subr.mxu0 0.0
    %2787 = vmatpush1.xpose.msra.mxu0 0.0
    %2788 = vmatprep.subr.mxu0 0.0
    %2789 = vmatpush1.xpose.msra.mxu0 0.0
    %2790 = vmatprep.subr.mxu0 0.0
    %2791 = vmatpush1.xpose.msra.mxu0 0.0
    %2792 = vmatprep.subr.mxu0 0.0
    %2793 = vmatpush1.xpose.msra.mxu0 0.0
    %2794 = vmatprep.subr.mxu0 0.0
    %2795 = vmatpush1.xpose.msra.mxu0 0.0
    %2796 = vmatprep.subr.mxu0 0.0
    %2797 = vmatpush1.xpose.msra.mxu0 0.0
    %2798 = vmatprep.subr.mxu0 0.0
    %2799 = vmatpush1.xpose.msra.mxu0 0.0
    %2800 = vmatprep.subr.mxu0 0.0
    %2801 = vmatpush1.xpose.msra.mxu0 0.0
    %2802 = vmatprep.subr.mxu0 0.0
    %2803 = vmatpush1.xpose.msra.mxu0 0.0
    %2804 = vmatprep.subr.mxu0 0.0
    %2805 = vmatpush1.xpose.msra.mxu0 0.0
    %2806 = vmatprep.subr.mxu0 0.0
    %2807 = vmatpush1.xpose.msra.mxu0 0.0
    %2808 = vmatprep.subr.mxu0 0.0
    %2809 = vmatpush1.xpose.msra.mxu0 0.0
    %2810 = vmatprep.subr.mxu0 0.0
    %2811 = vmatpush1.xpose.msra.mxu0 0.0
    %2812 = vmatprep.subr.mxu0 0.0
    %2813 = vmatpush1.xpose.msra.mxu0 0.0
    %2814 = vmatprep.subr.mxu0 0.0
    %2815 = vmatpush1.xpose.msra.mxu0 0.0
    %2816 = vmatprep.subr.mxu0 0.0
    %2817 = vmatpush1.xpose.msra.mxu0 0.0
    %2818 = vmatprep.subr.mxu0 0.0
    %2819 = vmatpush1.xpose.msra.mxu0 0.0
    %2820 = vmatprep.subr.mxu0 0.0
    %2821 = vmatpush1.xpose.msra.mxu0 0.0
    %2822 = vmatprep.subr.mxu0 0.0
    %2823 = vmatpush1.xpose.msra.mxu0 0.0
    %2824 = vmatprep.subr.mxu0 0.0
    %2825 = vmatpush1.xpose.msra.mxu0 0.0
    %2826 = vmatprep.subr.mxu0 0.0
    %2827 = vmatpush1.xpose.msra.mxu0 0.0
    %2828 = vmatprep.subr.mxu0 0.0
    %2829 = vmatpush1.xpose.msra.mxu0 0.0
    %2830 = vmatprep.subr.mxu0 0.0
    %2831 = vmatpush1.xpose.msra.mxu0 0.0
    %2832 = vmatprep.subr.mxu0 0.0
    %2833 = vmatpush1.xpose.msra.mxu0 0.0
    %2834 = vmatprep.subr.mxu0 0.0
    %2835 = vmatpush1.xpose.msra.mxu0 0.0
    %2836 = vmatprep.subr.mxu0 0.0
    %2837 = vmatpush1.xpose.msra.mxu0 0.0
    %2838 = vmatprep.mubr.f32.mxu0 0.0
    %2839 = vmatmul.mubr.f32.gmra.mrb[0].mxu0 %v2770
    %v2840 = vpop.f32.mrb[0].mxu0
    %v2841 = vadd.f32 0.0, %v2840
    %v2842 = vpop.f32.mrb[0].mxu0
    %2843 = vdwg.mxu0
    %v2844 = vmul.f32 %v2841, 0.17677669
    %v2845 = vsel %vm412, %v2844, -inf
    %2846 = vmax.xlane.f32.xlu0 %v2845
    %v2847 = vpop.xlane.xlu0 %2846
    %v2848 = vsub.f32 %v2844, %v2847
    %v2849 = vmul.f32 %v2848, 1.442695
    %v2850 = vpow.pop %v2849
    %v2851 = vsel %vm412, %v2850, 0.0
    %2852 = vadd.xlane.f32.xlu0 %v2851
    %v2853 = vpop.xlane.xlu0 %2852
    %v2854 = vrcp.pop %v2853
    %v2855 = vmul.f32 %v2850, %v2854
    %2856 = vrot.lane.b32.xlu0 %v330, 64
    %v2857 = vpop.permute.xlu0 %2856
    %v2860 = vsel %vm412, %v2855, 0
    %2862 = vmatprep.subr.mxu0 0.0
    %2863 = vmatpush1.msra.mxu0 %v2857
    %2864 = vmatprep.subr.mxu0 0.0
    %2865 = vmatpush1.msra.mxu0 0.0
    %2866 = vmatprep.subr.mxu0 0.0
    %2867 = vmatpush1.msra.mxu0 0.0
    %2868 = vmatprep.subr.mxu0 0.0
    %2869 = vmatpush1.msra.mxu0 0.0
    %2870 = vmatprep.subr.mxu0 0.0
    %2871 = vmatpush1.msra.mxu0 0.0
    %2872 = vmatprep.subr.mxu0 0.0
    %2873 = vmatpush1.msra.mxu0 0.0
    %2874 = vmatprep.subr.mxu0 0.0
    %2875 = vmatpush1.msra.mxu0 0.0
    %2876 = vmatprep.subr.mxu0 0.0
    %2877 = vmatpush1.msra.mxu0 0.0
    %2878 = vmatprep.subr.mxu0 0.0
    %2879 = vmatpush1.msra.mxu0 0.0
    %2880 = vmatprep.subr.mxu0 0.0
    %2881 = vmatpush1.msra.mxu0 0.0
    %2882 = vmatprep.subr.mxu0 0.0
    %2883 = vmatpush1.msra.mxu0 0.0
    %2884 = vmatprep.subr.mxu0 0.0
    %2885 = vmatpush1.msra.mxu0 0.0
    %2886 = vmatprep.subr.mxu0 0.0
    %2887 = vmatpush1.msra.mxu0 0.0
    %2888 = vmatprep.subr.mxu0 0.0
    %2889 = vmatpush1.msra.mxu0 0.0
    %2890 = vmatprep.subr.mxu0 0.0
    %2891 = vmatpush1.msra.mxu0 0.0
    %2892 = vmatprep.subr.mxu0 0.0
    %2893 = vmatpush1.msra.mxu0 0.0
    %2894 = vmatprep.subr.mxu0 0.0
    %2895 = vmatpush1.msra.mxu0 0.0
    %2896 = vmatprep.subr.mxu0 0.0
    %2897 = vmatpush1.msra.mxu0 0.0
    %2898 = vmatprep.subr.mxu0 0.0
    %2899 = vmatpush1.msra.mxu0 0.0
    %2900 = vmatprep.subr.mxu0 0.0
    %2901 = vmatpush1.msra.mxu0 0.0
    %2902 = vmatprep.subr.mxu0 0.0
    %2903 = vmatpush1.msra.mxu0 0.0
    %2904 = vmatprep.subr.mxu0 0.0
    %2905 = vmatpush1.msra.mxu0 0.0
    %2906 = vmatprep.subr.mxu0 0.0
    %2907 = vmatpush1.msra.mxu0 0.0
    %2908 = vmatprep.subr.mxu0 0.0
    %2909 = vmatpush1.msra.mxu0 0.0
    %2910 = vmatprep.subr.mxu0 0.0
    %2911 = vmatpush1.msra.mxu0 0.0
    %2912 = vmatprep.subr.mxu0 0.0
    %2913 = vmatpush1.msra.mxu0 0.0
    %2914 = vmatprep.subr.mxu0 0.0
    %2915 = vmatpush1.msra.mxu0 0.0
    %2916 = vmatprep.subr.mxu0 0.0
    %2917 = vmatpush1.msra.mxu0 0.0
    %2918 = vmatprep.subr.mxu0 0.0
    %2919 = vmatpush1.msra.mxu0 0.0
    %2920 = vmatprep.subr.mxu0 0.0
    %2921 = vmatpush1.msra.mxu0 0.0
    %2922 = vmatprep.subr.mxu0 0.0
    %2923 = vmatpush1.msra.mxu0 0.0
    %2924 = vmatprep.subr.mxu0 0.0
    %2925 = vmatpush1.msra.mxu0 0.0
    %2926 = vmatprep.mubr.f32.mxu0 0.0
    %2927 = vmatmul.mubr.f32.gmra.mrb[0].mxu0 %v2860
    %v2928 = vpop.f32.mrb[0].mxu0
    %v2929 = vadd.f32 0.0, %v2928
    %v2930 = vpop.f32.mrb[0].mxu0
    %2931 = vdwg.mxu0
    %v2933 = vsel %vm96, %v2929, 0
    %2935 = vmatprep.subr.mxu0 0.0
    %2936 = vmatpush1.msra.mxu0 %v986
    %2937 = vmatprep.subr.mxu0 0.0
    %2938 = vmatpush1.msra.mxu0 %v987
    %2939 = vmatprep.subr.mxu0 0.0
    %2940 = vmatpush1.msra.mxu0 %v988
    %2941 = vmatprep.subr.mxu0 0.0
    %2942 = vmatpush1.msra.mxu0 %v989
    %2943 = vmatprep.subr.mxu0 0.0
    %2944 = vmatpush1.msra.mxu0 0.0
    %2945 = vmatprep.subr.mxu0 0.0
    %2946 = vmatpush1.msra.mxu0 0.0
    %2947 = vmatprep.subr.mxu0 0.0
    %2948 = vmatpush1.msra.mxu0 0.0
    %2949 = vmatprep.subr.mxu0 0.0
    %2950 = vmatpush1.msra.mxu0 0.0
    %2951 = vmatprep.subr.mxu0 0.0
    %2952 = vmatpush1.msra.mxu0 0.0
    %2953 = vmatprep.subr.mxu0 0.0
    %2954 = vmatpush1.msra.mxu0 0.0
    %2955 = vmatprep.subr.mxu0 0.0
    %2956 = vmatpush1.msra.mxu0 0.0
    %2957 = vmatprep.subr.mxu0 0.0
    %2958 = vmatpush1.msra.mxu0 0.0
    %2959 = vmatprep.subr.mxu0 0.0
    %2960 = vmatpush1.msra.mxu0 0.0
    %2961 = vmatprep.subr.mxu0 0.0
    %2962 = vmatpush1.msra.mxu0 0.0
    %2963 = vmatprep.subr.mxu0 0.0
    %2964 = vmatpush1.msra.mxu0 0.0
    %2965 = vmatprep.subr.mxu0 0.0
    %2966 = vmatpush1.msra.mxu0 0.0
    %2967 = vmatprep.subr.mxu0 0.0
    %2968 = vmatpush1.msra.mxu0 0.0
    %2969 = vmatprep.subr.mxu0 0.0
    %2970 = vmatpush1.msra.mxu0 0.0
    %2971 = vmatprep.subr.mxu0 0.0
    %2972 = vmatpush1.msra.mxu0 0.0
    %2973 = vmatprep.subr.mxu0 0.0
    %2974 = vmatpush1.msra.mxu0 0.0
    %2975 = vmatprep.subr.mxu0 0.0
    %2976 = vmatpush1.msra.mxu0 0.0
    %2977 = vmatprep.subr.mxu0 0.0
    %2978 = vmatpush1.msra.mxu0 0.0
    %2979 = vmatprep.subr.mxu0 0.0
    %2980 = vmatpush1.msra.mxu0 0.0
    %2981 = vmatprep.subr.mxu0 0.0
    %2982 = vmatpush1.msra.mxu0 0.0
    %2983 = vmatprep.subr.mxu0 0.0
    %2984 = vmatpush1.msra.mxu0 0.0
    %2985 = vmatprep.subr.mxu0 0.0
    %2986 = vmatpush1.msra.mxu0 0.0
    %2987 = vmatprep.subr.mxu0 0.0
    %2988 = vmatpush1.msra.mxu0 0.0
    %2989 = vmatprep.subr.mxu0 0.0
    %2990 = vmatpush1.msra.mxu0 0.0
    %2991 = vmatprep.subr.mxu0 0.0
    %2992 = vmatpush1.msra.mxu0 0.0
    %2993 = vmatprep.subr.mxu0 0.0
    %2994 = vmatpush1.msra.mxu0 0.0
    %2995 = vmatprep.subr.mxu0 0.0
    %2996 = vmatpush1.msra.mxu0 0.0
    %2997 = vmatprep.subr.mxu0 0.0
    %2998 = vmatpush1.msra.mxu0 0.0
    %2999 = vmatprep.mubr.f32.mxu0 0.0
    %3000 = vmatmul.mubr.f32.gmra.mrb[0].mxu0 %v2933
    %v3001 = vpop.f32.mrb[0].mxu0
    %v3002 = vadd.f32 0.0, %v3001
    %v3003 = vpop.f32.mrb[0].mxu0
    %3004 = vdwg.mxu0
    %v3005 = vadd.f32 %v2763, %v3002
    %3006 = vrot.lane.b32.xlu0 %v176, 32
    %v3007 = vpop.permute.xlu0 %3006
    %3008 = vrot.lane.b32.xlu0 %v253, 32
    %v3009 = vpop.permute.xlu0 %3008
    %v3010 = vsel %vm96, %v3007, 0
    %v3012 = vsel %vm96, %v3009, 0
    %3014 = vmatprep.subr.mxu0 0.0
    %3015 = vmatpush1.xpose.msra.mxu0 %v3012
    %3016 = vmatprep.subr.mxu0 0.0
    %3017 = vmatpush1.xpose.msra.mxu0 0.0
    %3018 = vmatprep.subr.mxu0 0.0
    %3019 = vmatpush1.xpose.msra.mxu0 0.0
    %3020 = vmatprep.subr.mxu0 0.0
    %3021 = vmatpush1.xpose.msra.mxu0 0.0
    %3022 = vmatprep.subr.mxu0 0.0
    %3023 = vmatpush1.xpose.msra.mxu0 0.0
    %3024 = vmatprep.subr.mxu0 0.0
    %3025 = vmatpush1.xpose.msra.mxu0 0.0
    %3026 = vmatprep.subr.mxu0 0.0
    %3027 = vmatpush1.xpose.msra.mxu0 0.0
    %3028 = vmatprep.subr.mxu0 0.0
    %3029 = vmatpush1.xpose.msra.mxu0 0.0
    %3030 = vmatprep.subr.mxu0 0.0
    %3031 = vmatpush1.xpose.msra.mxu0 0.0
    %3032 = vmatprep.subr.mxu0 0.0
    %3033 = vmatpush1.xpose.msra.mxu0 0.0
    %3034 = vmatprep.subr.mxu0 0.0
    %3035 = vmatpush1.xpose.msra.mxu0 0.0
    %3036 = vmatprep.subr.mxu0 0.0
    %3037 = vmatpush1.xpose.msra.mxu0 0.0
    %3038 = vmatprep.subr.mxu0 0.0
    %3039 = vmatpush1.xpose.msra.mxu0 0.0
    %3040 = vmatprep.subr.mxu0 0.0
    %3041 = vmatpush1.xpose.msra.mxu0 0.0
    %3042 = vmatprep.subr.mxu0 0.0
    %3043 = vmatpush1.xpose.msra.mxu0 0.0
    %3044 = vmatprep.subr.mxu0 0.0
    %3045 = vmatpush1.xpose.msra.mxu0 0.0
    %3046 = vmatprep.subr.mxu0 0.0
    %3047 = vmatpush1.xpose.msra.mxu0 0.0
    %3048 = vmatprep.subr.mxu0 0.0
    %3049 = vmatpush1.xpose.msra.mxu0 0.0
    %3050 = vmatprep.subr.mxu0 0.0
    %3051 = vmatpush1.xpose.msra.mxu0 0.0
    %3052 = vmatprep.subr.mxu0 0.0
    %3053 = vmatpush1.xpose.msra.mxu0 0.0
    %3054 = vmatprep.subr.mxu0 0.0
    %3055 = vmatpush1.xpose.msra.mxu0 0.0
    %3056 = vmatprep.subr.mxu0 0.0
    %3057 = vmatpush1.xpose.msra.mxu0 0.0
    %3058 = vmatprep.subr.mxu0 0.0
    %3059 = vmatpush1.xpose.msra.mxu0 0.0
    %3060 = vmatprep.subr.mxu0 0.0
    %3061 = vmatpush1.xpose.msra.mxu0 0.0
    %3062 = vmatprep.subr.mxu0 0.0
    %3063 = vmatpush1.xpose.msra.mxu0 0.0
    %3064 = vmatprep.subr.mxu0 0.0
    %3065 = vmatpush1.xpose.msra.mxu0 0.0
    %3066 = vmatprep.subr.mxu0 0.0
    %3067 = vmatpush1.xpose.msra.mxu0 0.0
    %3068 = vmatprep.subr.mxu0 0.0
    %3069 = vmatpush1.xpose.msra.mxu0 0.0
    %3070 = vmatprep.subr.mxu0 0.0
    %3071 = vmatpush1.xpose.msra.mxu0 0.0
    %3072 = vmatprep.subr.mxu0 0.0
    %3073 = vmatpush1.xpose.msra.mxu0 0.0
    %3074 = vmatprep.subr.mxu0 0.0
    %3075 = vmatpush1.xpose.msra.mxu0 0.0
    %3076 = vmatprep.subr.mxu0 0.0
    %3077 = vmatpush1.xpose.msra.mxu0 0.0
    %3078 = vmatprep.mubr.f32.mxu0 0.0
    %3079 = vmatmul.mubr.f32.gmra.mrb[0].mxu0 %v3010
    %v3080 = vpop.f32.mrb[0].mxu0
    %v3081 = vadd.f32 0.0, %v3080
    %v3082 = vpop.f32.mrb[0].mxu0
    %3083 = vdwg.mxu0
    %v3084 = vmul.f32 %v3081, 0.17677669
    %v3085 = vsel %vm412, %v3084, -inf
    %3086 = vmax.xlane.f32.xlu0 %v3085
    %v3087 = vpop.xlane.xlu0 %3086
    %v3088 = vsub.f32 %v3084, %v3087
    %v3089 = vmul.f32 %v3088, 1.442695
    %v3090 = vpow.pop %v3089
    %v3091 = vsel %vm412, %v3090, 0.0
    %3092 = vadd.xlane.f32.xlu0 %v3091
    %v3093 = vpop.xlane.xlu0 %3092
    %v3094 = vrcp.pop %v3093
    %v3095 = vmul.f32 %v3090, %v3094
    %3096 = vrot.lane.b32.xlu0 %v330, 32
    %v3097 = vpop.permute.xlu0 %3096
    %v3100 = vsel %vm412, %v3095, 0
    %3102 = vmatprep.subr.mxu0 0.0
    %3103 = vmatpush1.msra.mxu0 %v3097
    %3104 = vmatprep.subr.mxu0 0.0
    %3105 = vmatpush1.msra.mxu0 0.0
    %3106 = vmatprep.subr.mxu0 0.0
    %3107 = vmatpush1.msra.mxu0 0.0
    %3108 = vmatprep.subr.mxu0 0.0
    %3109 = vmatpush1.msra.mxu0 0.0
    %3110 = vmatprep.subr.mxu0 0.0
    %3111 = vmatpush1.msra.mxu0 0.0
    %3112 = vmatprep.subr.mxu0 0.0
    %3113 = vmatpush1.msra.mxu0 0.0
    %3114 = vmatprep.subr.mxu0 0.0
    %3115 = vmatpush1.msra.mxu0 0.0
    %3116 = vmatprep.subr.mxu0 0.0
    %3117 = vmatpush1.msra.mxu0 0.0
    %3118 = vmatprep.subr.mxu0 0.0
    %3119 = vmatpush1.msra.mxu0 0.0
    %3120 = vmatprep.subr.mxu0 0.0
    %3121 = vmatpush1.msra.mxu0 0.0
    %3122 = vmatprep.subr.mxu0 0.0
    %3123 = vmatpush1.msra.mxu0 0.0
    %3124 = vmatprep.subr.mxu0 0.0
    %3125 = vmatpush1.msra.mxu0 0.0
    %3126 = vmatprep.subr.mxu0 0.0
    %3127 = vmatpush1.msra.mxu0 0.0
    %3128 = vmatprep.subr.mxu0 0.0
    %3129 = vmatpush1.msra.mxu0 0.0
    %3130 = vmatprep.subr.mxu0 0.0
    %3131 = vmatpush1.msra.mxu0 0.0
    %3132 = vmatprep.subr.mxu0 0.0
    %3133 = vmatpush1.msra.mxu0 0.0
    %3134 = vmatprep.subr.mxu0 0.0
    %3135 = vmatpush1.msra.mxu0 0.0
    %3136 = vmatprep.subr.mxu0 0.0
    %3137 = vmatpush1.msra.mxu0 0.0
    %3138 = vmatprep.subr.mxu0 0.0
    %3139 = vmatpush1.msra.mxu0 0.0
    %3140 = vmatprep.subr.mxu0 0.0
    %3141 = vmatpush1.msra.mxu0 0.0
    %3142 = vmatprep.subr.mxu0 0.0
    %3143 = vmatpush1.msra.mxu0 0.0
    %3144 = vmatprep.subr.mxu0 0.0
    %3145 = vmatpush1.msra.mxu0 0.0
    %3146 = vmatprep.subr.mxu0 0.0
    %3147 = vmatpush1.msra.mxu0 0.0
    %3148 = vmatprep.subr.mxu0 0.0
    %3149 = vmatpush1.msra.mxu0 0.0
    %3150 = vmatprep.subr.mxu0 0.0
    %3151 = vmatpush1.msra.mxu0 0.0
    %3152 = vmatprep.subr.mxu0 0.0
    %3153 = vmatpush1.msra.mxu0 0.0
    %3154 = vmatprep.subr.mxu0 0.0
    %3155 = vmatpush1.msra.mxu0 0.0
    %3156 = vmatprep.subr.mxu0 0.0
    %3157 = vmatpush1.msra.mxu0 0.0
    %3158 = vmatprep.subr.mxu0 0.0
    %3159 = vmatpush1.msra.mxu0 0.0
    %3160 = vmatprep.subr.mxu0 0.0
    %3161 = vmatpush1.msra.mxu0 0.0
    %3162 = vmatprep.subr.mxu0 0.0
    %3163 = vmatpush1.msra.mxu0 0.0
    %3164 = vmatprep.subr.mxu0 0.0
    %3165 = vmatpush1.msra.mxu0 0.0
    %3166 = vmatprep.mubr.f32.mxu0 0.0
    %3167 = vmatmul.mubr.f32.gmra.mrb[0].mxu0 %v3100
    %v3168 = vpop.f32.mrb[0].mxu0
    %v3169 = vadd.f32 0.0, %v3168
    %v3170 = vpop.f32.mrb[0].mxu0
    %3171 = vdwg.mxu0
    %v3173 = vsel %vm96, %v3169, 0
    %3175 = vmatprep.subr.mxu0 0.0
    %3176 = vmatpush1.msra.mxu0 %v1231
    %3177 = vmatprep.subr.mxu0 0.0
    %3178 = vmatpush1.msra.mxu0 %v1232
    %3179 = vmatprep.subr.mxu0 0.0
    %3180 = vmatpush1.msra.mxu0 %v1233
    %3181 = vmatprep.subr.mxu0 0.0
    %3182 = vmatpush1.msra.mxu0 %v1234
    %3183 = vmatprep.subr.mxu0 0.0
    %3184 = vmatpush1.msra.mxu0 0.0
    %3185 = vmatprep.subr.mxu0 0.0
    %3186 = vmatpush1.msra.mxu0 0.0
    %3187 = vmatprep.subr.mxu0 0.0
    %3188 = vmatpush1.msra.mxu0 0.0
    %3189 = vmatprep.subr.mxu0 0.0
    %3190 = vmatpush1.msra.mxu0 0.0
    %3191 = vmatprep.subr.mxu0 0.0
    %3192 = vmatpush1.msra.mxu0 0.0
    %3193 = vmatprep.subr.mxu0 0.0
    %3194 = vmatpush1.msra.mxu0 0.0
    %3195 = vmatprep.subr.mxu0 0.0
    %3196 = vmatpush1.msra.mxu0 0.0
    %3197 = vmatprep.subr.mxu0 0.0
    %3198 = vmatpush1.msra.mxu0 0.0
    %3199 = vmatprep.subr.mxu0 0.0
    %3200 = vmatpush1.msra.mxu0 0.0
    %3201 = vmatprep.subr.mxu0 0.0
    %3202 = vmatpush1.msra.mxu0 0.0
    %3203 = vmatprep.subr.mxu0 0.0
    %3204 = vmatpush1.msra.mxu0 0.0
    %3205 = vmatprep.subr.mxu0 0.0
    %3206 = vmatpush1.msra.mxu0 0.0
    %3207 = vmatprep.subr.mxu0 0.0
    %3208 = vmatpush1.msra.mxu0 0.0
    %3209 = vmatprep.subr.mxu0 0.0
    %3210 = vmatpush1.msra.mxu0 0.0
    %3211 = vmatprep.subr.mxu0 0.0
    %3212 = vmatpush1.msra.mxu0 0.0
    %3213 = vmatprep.subr.mxu0 0.0
    %3214 = vmatpush1.msra.mxu0 0.0
    %3215 = vmatprep.subr.mxu0 0.0
    %3216 = vmatpush1.msra.mxu0 0.0
    %3217 = vmatprep.subr.mxu0 0.0
    %3218 = vmatpush1.msra.mxu0 0.0
    %3219 = vmatprep.subr.mxu0 0.0
    %3220 = vmatpush1.msra.mxu0 0.0
    %3221 = vmatprep.subr.mxu0 0.0
    %3222 = vmatpush1.msra.mxu0 0.0
    %3223 = vmatprep.subr.mxu0 0.0
    %3224 = vmatpush1.msra.mxu0 0.0
    %3225 = vmatprep.subr.mxu0 0.0
    %3226 = vmatpush1.msra.mxu0 0.0
    %3227 = vmatprep.subr.mxu0 0.0
    %3228 = vmatpush1.msra.mxu0 0.0
    %3229 = vmatprep.subr.mxu0 0.0
    %3230 = vmatpush1.msra.mxu0 0.0
    %3231 = vmatprep.subr.mxu0 0.0
    %3232 = vmatpush1.msra.mxu0 0.0
    %3233 = vmatprep.subr.mxu0 0.0
    %3234 = vmatpush1.msra.mxu0 0.0
    %3235 = vmatprep.subr.mxu0 0.0
    %3236 = vmatpush1.msra.mxu0 0.0
    %3237 = vmatprep.subr.mxu0 0.0
    %3238 = vmatpush1.msra.mxu0 0.0
    %3239 = vmatprep.mubr.f32.mxu0 0.0
    %3240 = vmatmul.mubr.f32.gmra.mrb[0].mxu0 %v3173
    %v3241 = vpop.f32.mrb[0].mxu0
    %v3242 = vadd.f32 0.0, %v3241
    %v3243 = vpop.f32.mrb[0].mxu0
    %3244 = vdwg.mxu0
    %v3245 = vadd.f32 %v3005, %v3242
    %v3247 = vsel %vm96, %v178, 0
    %v3250 = vsel %vm96, %v255, 0
    %3252 = vmatprep.subr.mxu0 0.0
    %3253 = vmatpush1.xpose.msra.mxu0 %v3250
    %3254 = vmatprep.subr.mxu0 0.0
    %3255 = vmatpush1.xpose.msra.mxu0 0.0
    %3256 = vmatprep.subr.mxu0 0.0
    %3257 = vmatpush1.xpose.msra.mxu0 0.0
    %3258 = vmatprep.subr.mxu0 0.0
    %3259 = vmatpush1.xpose.msra.mxu0 0.0
    %3260 = vmatprep.subr.mxu0 0.0
    %3261 = vmatpush1.xpose.msra.mxu0 0.0
    %3262 = vmatprep.subr.mxu0 0.0
    %3263 = vmatpush1.xpose.msra.mxu0 0.0
    %3264 = vmatprep.subr.mxu0 0.0
    %3265 = vmatpush1.xpose.msra.mxu0 0.0
    %3266 = vmatprep.subr.mxu0 0.0
    %3267 = vmatpush1.xpose.msra.mxu0 0.0
    %3268 = vmatprep.subr.mxu0 0.0
    %3269 = vmatpush1.xpose.msra.mxu0 0.0
    %3270 = vmatprep.subr.mxu0 0.0
    %3271 = vmatpush1.xpose.msra.mxu0 0.0
    %3272 = vmatprep.subr.mxu0 0.0
    %3273 = vmatpush1.xpose.msra.mxu0 0.0
    %3274 = vmatprep.subr.mxu0 0.0
    %3275 = vmatpush1.xpose.msra.mxu0 0.0
    %3276 = vmatprep.subr.mxu0 0.0
    %3277 = vmatpush1.xpose.msra.mxu0 0.0
    %3278 = vmatprep.subr.mxu0 0.0
    %3279 = vmatpush1.xpose.msra.mxu0 0.0
    %3280 = vmatprep.subr.mxu0 0.0
    %3281 = vmatpush1.xpose.msra.mxu0 0.0
    %3282 = vmatprep.subr.mxu0 0.0
    %3283 = vmatpush1.xpose.msra.mxu0 0.0
    %3284 = vmatprep.subr.mxu0 0.0
    %3285 = vmatpush1.xpose.msra.mxu0 0.0
    %3286 = vmatprep.subr.mxu0 0.0
    %3287 = vmatpush1.xpose.msra.mxu0 0.0
    %3288 = vmatprep.subr.mxu0 0.0
    %3289 = vmatpush1.xpose.msra.mxu0 0.0
    %3290 = vmatprep.subr.mxu0 0.0
    %3291 = vmatpush1.xpose.msra.mxu0 0.0
    %3292 = vmatprep.subr.mxu0 0.0
    %3293 = vmatpush1.xpose.msra.mxu0 0.0
    %3294 = vmatprep.subr.mxu0 0.0
    %3295 = vmatpush1.xpose.msra.mxu0 0.0
    %3296 = vmatprep.subr.mxu0 0.0
    %3297 = vmatpush1.xpose.msra.mxu0 0.0
    %3298 = vmatprep.subr.mxu0 0.0
    %3299 = vmatpush1.xpose.msra.mxu0 0.0
    %3300 = vmatprep.subr.mxu0 0.0
    %3301 = vmatpush1.xpose.msra.mxu0 0.0
    %3302 = vmatprep.subr.mxu0 0.0
    %3303 = vmatpush1.xpose.msra.mxu0 0.0
    %3304 = vmatprep.subr.mxu0 0.0
    %3305 = vmatpush1.xpose.msra.mxu0 0.0
    %3306 = vmatprep.subr.mxu0 0.0
    %3307 = vmatpush1.xpose.msra.mxu0 0.0
    %3308 = vmatprep.subr.mxu0 0.0
    %3309 = vmatpush1.xpose.msra.mxu0 0.0
    %3310 = vmatprep.subr.mxu0 0.0
    %3311 = vmatpush1.xpose.msra.mxu0 0.0
    %3312 = vmatprep.subr.mxu0 0.0
    %3313 = vmatpush1.xpose.msra.mxu0 0.0
    %3314 = vmatprep.subr.mxu0 0.0
    %3315 = vmatpush1.xpose.msra.mxu0 0.0
    %3316 = vmatprep.mubr.f32.mxu0 0.0
    %3317 = vmatmul.mubr.f32.gmra.mrb[0].mxu0 %v3247
    %v3318 = vpop.f32.mrb[0].mxu0
    %v3319 = vadd.f32 0.0, %v3318
    %v3320 = vpop.f32.mrb[0].mxu0
    %3321 = vdwg.mxu0
    %v3322 = vmul.f32 %v3319, 0.17677669
    %v3323 = vsel %vm412, %v3322, -inf
    %3324 = vmax.xlane.f32.xlu0 %v3323
    %v3325 = vpop.xlane.xlu0 %3324
    %v3326 = vsub.f32 %v3322, %v3325
    %v3327 = vmul.f32 %v3326, 1.442695
    %v3328 = vpow.pop %v3327
    %v3329 = vsel %vm412, %v3328, 0.0
    %3330 = vadd.xlane.f32.xlu0 %v3329
    %v3331 = vpop.xlane.xlu0 %3330
    %v3332 = vrcp.pop %v3331
    %v3333 = vmul.f32 %v3328, %v3332
    %v3335 = vsel %vm412, %v3333, 0
    %3337 = vmatprep.subr.mxu0 0.0
    %3338 = vmatpush1.msra.mxu0 %v332
    %3339 = vmatprep.subr.mxu0 0.0
    %3340 = vmatpush1.msra.mxu0 0.0
    %3341 = vmatprep.subr.mxu0 0.0
    %3342 = vmatpush1.msra.mxu0 0.0
    %3343 = vmatprep.subr.mxu0 0.0
    %3344 = vmatpush1.msra.mxu0 0.0
    %3345 = vmatprep.subr.mxu0 0.0
    %3346 = vmatpush1.msra.mxu0 0.0
    %3347 = vmatprep.subr.mxu0 0.0
    %3348 = vmatpush1.msra.mxu0 0.0
    %3349 = vmatprep.subr.mxu0 0.0
    %3350 = vmatpush1.msra.mxu0 0.0
    %3351 = vmatprep.subr.mxu0 0.0
    %3352 = vmatpush1.msra.mxu0 0.0
    %3353 = vmatprep.subr.mxu0 0.0
    %3354 = vmatpush1.msra.mxu0 0.0
    %3355 = vmatprep.subr.mxu0 0.0
    %3356 = vmatpush1.msra.mxu0 0.0
    %3357 = vmatprep.subr.mxu0 0.0
    %3358 = vmatpush1.msra.mxu0 0.0
    %3359 = vmatprep.subr.mxu0 0.0
    %3360 = vmatpush1.msra.mxu0 0.0
    %3361 = vmatprep.subr.mxu0 0.0
    %3362 = vmatpush1.msra.mxu0 0.0
    %3363 = vmatprep.subr.mxu0 0.0
    %3364 = vmatpush1.msra.mxu0 0.0
    %3365 = vmatprep.subr.mxu0 0.0
    %3366 = vmatpush1.msra.mxu0 0.0
    %3367 = vmatprep.subr.mxu0 0.0
    %3368 = vmatpush1.msra.mxu0 0.0
    %3369 = vmatprep.subr.mxu0 0.0
    %3370 = vmatpush1.msra.mxu0 0.0
    %3371 = vmatprep.subr.mxu0 0.0
    %3372 = vmatpush1.msra.mxu0 0.0
    %3373 = vmatprep.subr.mxu0 0.0
    %3374 = vmatpush1.msra.mxu0 0.0
    %3375 = vmatprep.subr.mxu0 0.0
    %3376 = vmatpush1.msra.mxu0 0.0
    %3377 = vmatprep.subr.mxu0 0.0
    %3378 = vmatpush1.msra.mxu0 0.0
    %3379 = vmatprep.subr.mxu0 0.0
    %3380 = vmatpush1.msra.mxu0 0.0
    %3381 = vmatprep.subr.mxu0 0.0
    %3382 = vmatpush1.msra.mxu0 0.0
    %3383 = vmatprep.subr.mxu0 0.0
    %3384 = vmatpush1.msra.mxu0 0.0
    %3385 = vmatprep.subr.mxu0 0.0
    %3386 = vmatpush1.msra.mxu0 0.0
    %3387 = vmatprep.subr.mxu0 0.0
    %3388 = vmatpush1.msra.mxu0 0.0
    %3389 = vmatprep.subr.mxu0 0.0
    %3390 = vmatpush1.msra.mxu0 0.0
    %3391 = vmatprep.subr.mxu0 0.0
    %3392 = vmatpush1.msra.mxu0 0.0
    %3393 = vmatprep.subr.mxu0 0.0
    %3394 = vmatpush1.msra.mxu0 0.0
    %3395 = vmatprep.subr.mxu0 0.0
    %3396 = vmatpush1.msra.mxu0 0.0
    %3397 = vmatprep.subr.mxu0 0.0
    %3398 = vmatpush1.msra.mxu0 0.0
    %3399 = vmatprep.subr.mxu0 0.0
    %3400 = vmatpush1.msra.mxu0 0.0
    %3401 = vmatprep.mubr.f32.mxu0 0.0
    %3402 = vmatmul.mubr.f32.gmra.mrb[0].mxu0 %v3335
    %v3403 = vpop.f32.mrb[0].mxu0
    %v3404 = vadd.f32 0.0, %v3403
    %v3405 = vpop.f32.mrb[0].mxu0
    %3406 = vdwg.mxu0
    %v3408 = vsel %vm96, %v3404, 0
    %3410 = vmatprep.subr.mxu0 0.0
    %3411 = vmatpush1.msra.mxu0 %v1471
    %3412 = vmatprep.subr.mxu0 0.0
    %3413 = vmatpush1.msra.mxu0 %v1472
    %3414 = vmatprep.subr.mxu0 0.0
    %3415 = vmatpush1.msra.mxu0 %v1473
    %3416 = vmatprep.subr.mxu0 0.0
    %3417 = vmatpush1.msra.mxu0 %v1474
    %3418 = vmatprep.subr.mxu0 0.0
    %3419 = vmatpush1.msra.mxu0 0.0
    %3420 = vmatprep.subr.mxu0 0.0
    %3421 = vmatpush1.msra.mxu0 0.0
    %3422 = vmatprep.subr.mxu0 0.0
    %3423 = vmatpush1.msra.mxu0 0.0
    %3424 = vmatprep.subr.mxu0 0.0
    %3425 = vmatpush1.msra.mxu0 0.0
    %3426 = vmatprep.subr.mxu0 0.0
    %3427 = vmatpush1.msra.mxu0 0.0
    %3428 = vmatprep.subr.mxu0 0.0
    %3429 = vmatpush1.msra.mxu0 0.0
    %3430 = vmatprep.subr.mxu0 0.0
    %3431 = vmatpush1.msra.mxu0 0.0
    %3432 = vmatprep.subr.mxu0 0.0
    %3433 = vmatpush1.msra.mxu0 0.0
    %3434 = vmatprep.subr.mxu0 0.0
    %3435 = vmatpush1.msra.mxu0 0.0
    %3436 = vmatprep.subr.mxu0 0.0
    %3437 = vmatpush1.msra.mxu0 0.0
    %3438 = vmatprep.subr.mxu0 0.0
    %3439 = vmatpush1.msra.mxu0 0.0
    %3440 = vmatprep.subr.mxu0 0.0
    %3441 = vmatpush1.msra.mxu0 0.0
    %3442 = vmatprep.subr.mxu0 0.0
    %3443 = vmatpush1.msra.mxu0 0.0
    %3444 = vmatprep.subr.mxu0 0.0
    %3445 = vmatpush1.msra.mxu0 0.0
    %3446 = vmatprep.subr.mxu0 0.0
    %3447 = vmatpush1.msra.mxu0 0.0
    %3448 = vmatprep.subr.mxu0 0.0
    %3449 = vmatpush1.msra.mxu0 0.0
    %3450 = vmatprep.subr.mxu0 0.0
    %3451 = vmatpush1.msra.mxu0 0.0
    %3452 = vmatprep.subr.mxu0 0.0
    %3453 = vmatpush1.msra.mxu0 0.0
    %3454 = vmatprep.subr.mxu0 0.0
    %3455 = vmatpush1.msra.mxu0 0.0
    %3456 = vmatprep.subr.mxu0 0.0
    %3457 = vmatpush1.msra.mxu0 0.0
    %3458 = vmatprep.subr.mxu0 0.0
    %3459 = vmatpush1.msra.mxu0 0.0
    %3460 = vmatprep.subr.mxu0 0.0
    %3461 = vmatpush1.msra.mxu0 0.0
    %3462 = vmatprep.subr.mxu0 0.0
    %3463 = vmatpush1.msra.mxu0 0.0
    %3464 = vmatprep.subr.mxu0 0.0
    %3465 = vmatpush1.msra.mxu0 0.0
    %3466 = vmatprep.subr.mxu0 0.0
    %3467 = vmatpush1.msra.mxu0 0.0
    %3468 = vmatprep.subr.mxu0 0.0
    %3469 = vmatpush1.msra.mxu0 0.0
    %3470 = vmatprep.subr.mxu0 0.0
    %3471 = vmatpush1.msra.mxu0 0.0
    %3472 = vmatprep.subr.mxu0 0.0
    %3473 = vmatpush1.msra.mxu0 0.0
    %3474 = vmatprep.mubr.f32.mxu0 0.0
    %3475 = vmatmul.mubr.f32.gmra.mrb[0].mxu0 %v3408
    %v3476 = vpop.f32.mrb[0].mxu0
    %v3477 = vadd.f32 0.0, %v3476
    %v3478 = vpop.f32.mrb[0].mxu0
    %3479 = vdwg.mxu0
    %v3480 = vadd.f32 %v3245, %v3477
    %3481 = vrot.lane.b32.xlu0 %v178, 96
    %v3482 = vpop.permute.xlu0 %3481
    %3483 = vrot.lane.b32.xlu0 %v255, 96
    %v3484 = vpop.permute.xlu0 %3483
    %v3485 = vsel %vm96, %v3482, 0
    %v3487 = vsel %vm96, %v3484, 0
    %3489 = vmatprep.subr.mxu0 0.0
    %3490 = vmatpush1.xpose.msra.mxu0 %v3487
    %3491 = vmatprep.subr.mxu0 0.0
    %3492 = vmatpush1.xpose.msra.mxu0 0.0
    %3493 = vmatprep.subr.mxu0 0.0
    %3494 = vmatpush1.xpose.msra.mxu0 0.0
    %3495 = vmatprep.subr.mxu0 0.0
    %3496 = vmatpush1.xpose.msra.mxu0 0.0
    %3497 = vmatprep.subr.mxu0 0.0
    %3498 = vmatpush1.xpose.msra.mxu0 0.0
    %3499 = vmatprep.subr.mxu0 0.0
    %3500 = vmatpush1.xpose.msra.mxu0 0.0
    %3501 = vmatprep.subr.mxu0 0.0
    %3502 = vmatpush1.xpose.msra.mxu0 0.0
    %3503 = vmatprep.subr.mxu0 0.0
    %3504 = vmatpush1.xpose.msra.mxu0 0.0
    %3505 = vmatprep.subr.mxu0 0.0
    %3506 = vmatpush1.xpose.msra.mxu0 0.0
    %3507 = vmatprep.subr.mxu0 0.0
    %3508 = vmatpush1.xpose.msra.mxu0 0.0
    %3509 = vmatprep.subr.mxu0 0.0
    %3510 = vmatpush1.xpose.msra.mxu0 0.0
    %3511 = vmatprep.subr.mxu0 0.0
    %3512 = vmatpush1.xpose.msra.mxu0 0.0
    %3513 = vmatprep.subr.mxu0 0.0
    %3514 = vmatpush1.xpose.msra.mxu0 0.0
    %3515 = vmatprep.subr.mxu0 0.0
    %3516 = vmatpush1.xpose.msra.mxu0 0.0
    %3517 = vmatprep.subr.mxu0 0.0
    %3518 = vmatpush1.xpose.msra.mxu0 0.0
    %3519 = vmatprep.subr.mxu0 0.0
    %3520 = vmatpush1.xpose.msra.mxu0 0.0
    %3521 = vmatprep.subr.mxu0 0.0
    %3522 = vmatpush1.xpose.msra.mxu0 0.0
    %3523 = vmatprep.subr.mxu0 0.0
    %3524 = vmatpush1.xpose.msra.mxu0 0.0
    %3525 = vmatprep.subr.mxu0 0.0
    %3526 = vmatpush1.xpose.msra.mxu0 0.0
    %3527 = vmatprep.subr.mxu0 0.0
    %3528 = vmatpush1.xpose.msra.mxu0 0.0
    %3529 = vmatprep.subr.mxu0 0.0
    %3530 = vmatpush1.xpose.msra.mxu0 0.0
    %3531 = vmatprep.subr.mxu0 0.0
    %3532 = vmatpush1.xpose.msra.mxu0 0.0
    %3533 = vmatprep.subr.mxu0 0.0
    %3534 = vmatpush1.xpose.msra.mxu0 0.0
    %3535 = vmatprep.subr.mxu0 0.0
    %3536 = vmatpush1.xpose.msra.mxu0 0.0
    %3537 = vmatprep.subr.mxu0 0.0
    %3538 = vmatpush1.xpose.msra.mxu0 0.0
    %3539 = vmatprep.subr.mxu0 0.0
    %3540 = vmatpush1.xpose.msra.mxu0 0.0
    %3541 = vmatprep.subr.mxu0 0.0
    %3542 = vmatpush1.xpose.msra.mxu0 0.0
    %3543 = vmatprep.subr.mxu0 0.0
    %3544 = vmatpush1.xpose.msra.mxu0 0.0
    %3545 = vmatprep.subr.mxu0 0.0
    %3546 = vmatpush1.xpose.msra.mxu0 0.0
    %3547 = vmatprep.subr.mxu0 0.0
    %3548 = vmatpush1.xpose.msra.mxu0 0.0
    %3549 = vmatprep.subr.mxu0 0.0
    %3550 = vmatpush1.xpose.msra.mxu0 0.0
    %3551 = vmatprep.subr.mxu0 0.0
    %3552 = vmatpush1.xpose.msra.mxu0 0.0
    %3553 = vmatprep.mubr.f32.mxu0 0.0
    %3554 = vmatmul.mubr.f32.gmra.mrb[0].mxu0 %v3485
    %v3555 = vpop.f32.mrb[0].mxu0
    %v3556 = vadd.f32 0.0, %v3555
    %v3557 = vpop.f32.mrb[0].mxu0
    %3558 = vdwg.mxu0
    %v3559 = vmul.f32 %v3556, 0.17677669
    %v3560 = vsel %vm412, %v3559, -inf
    %3561 = vmax.xlane.f32.xlu0 %v3560
    %v3562 = vpop.xlane.xlu0 %3561
    %v3563 = vsub.f32 %v3559, %v3562
    %v3564 = vmul.f32 %v3563, 1.442695
    %v3565 = vpow.pop %v3564
    %v3566 = vsel %vm412, %v3565, 0.0
    %3567 = vadd.xlane.f32.xlu0 %v3566
    %v3568 = vpop.xlane.xlu0 %3567
    %v3569 = vrcp.pop %v3568
    %v3570 = vmul.f32 %v3565, %v3569
    %3572 = vrot.lane.b32.xlu0 %v332, 96
    %v3573 = vpop.permute.xlu0 %3572
    %v3576 = vsel %vm412, %v3570, 0
    %3578 = vmatprep.subr.mxu0 0.0
    %3579 = vmatpush1.msra.mxu0 %v3573
    %3580 = vmatprep.subr.mxu0 0.0
    %3581 = vmatpush1.msra.mxu0 0.0
    %3582 = vmatprep.subr.mxu0 0.0
    %3583 = vmatpush1.msra.mxu0 0.0
    %3584 = vmatprep.subr.mxu0 0.0
    %3585 = vmatpush1.msra.mxu0 0.0
    %3586 = vmatprep.subr.mxu0 0.0
    %3587 = vmatpush1.msra.mxu0 0.0
    %3588 = vmatprep.subr.mxu0 0.0
    %3589 = vmatpush1.msra.mxu0 0.0
    %3590 = vmatprep.subr.mxu0 0.0
    %3591 = vmatpush1.msra.mxu0 0.0
    %3592 = vmatprep.subr.mxu0 0.0
    %3593 = vmatpush1.msra.mxu0 0.0
    %3594 = vmatprep.subr.mxu0 0.0
    %3595 = vmatpush1.msra.mxu0 0.0
    %3596 = vmatprep.subr.mxu0 0.0
    %3597 = vmatpush1.msra.mxu0 0.0
    %3598 = vmatprep.subr.mxu0 0.0
    %3599 = vmatpush1.msra.mxu0 0.0
    %3600 = vmatprep.subr.mxu0 0.0
    %3601 = vmatpush1.msra.mxu0 0.0
    %3602 = vmatprep.subr.mxu0 0.0
    %3603 = vmatpush1.msra.mxu0 0.0
    %3604 = vmatprep.subr.mxu0 0.0
    %3605 = vmatpush1.msra.mxu0 0.0
    %3606 = vmatprep.subr.mxu0 0.0
    %3607 = vmatpush1.msra.mxu0 0.0
    %3608 = vmatprep.subr.mxu0 0.0
    %3609 = vmatpush1.msra.mxu0 0.0
    %3610 = vmatprep.subr.mxu0 0.0
    %3611 = vmatpush1.msra.mxu0 0.0
    %3612 = vmatprep.subr.mxu0 0.0
    %3613 = vmatpush1.msra.mxu0 0.0
    %3614 = vmatprep.subr.mxu0 0.0
    %3615 = vmatpush1.msra.mxu0 0.0
    %3616 = vmatprep.subr.mxu0 0.0
    %3617 = vmatpush1.msra.mxu0 0.0
    %3618 = vmatprep.subr.mxu0 0.0
    %3619 = vmatpush1.msra.mxu0 0.0
    %3620 = vmatprep.subr.mxu0 0.0
    %3621 = vmatpush1.msra.mxu0 0.0
    %3622 = vmatprep.subr.mxu0 0.0
    %3623 = vmatpush1.msra.mxu0 0.0
    %3624 = vmatprep.subr.mxu0 0.0
    %3625 = vmatpush1.msra.mxu0 0.0
    %3626 = vmatprep.subr.mxu0 0.0
    %3627 = vmatpush1.msra.mxu0 0.0
    %3628 = vmatprep.subr.mxu0 0.0
    %3629 = vmatpush1.msra.mxu0 0.0
    %3630 = vmatprep.subr.mxu0 0.0
    %3631 = vmatpush1.msra.mxu0 0.0
    %3632 = vmatprep.subr.mxu0 0.0
    %3633 = vmatpush1.msra.mxu0 0.0
    %3634 = vmatprep.subr.mxu0 0.0
    %3635 = vmatpush1.msra.mxu0 0.0
    %3636 = vmatprep.subr.mxu0 0.0
    %3637 = vmatpush1.msra.mxu0 0.0
    %3638 = vmatprep.subr.mxu0 0.0
    %3639 = vmatpush1.msra.mxu0 0.0
    %3640 = vmatprep.subr.mxu0 0.0
    %3641 = vmatpush1.msra.mxu0 0.0
    %3642 = vmatprep.mubr.f32.mxu0 0.0
    %3643 = vmatmul.mubr.f32.gmra.mrb[0].mxu0 %v3576
    %v3644 = vpop.f32.mrb[0].mxu0
    %v3645 = vadd.f32 0.0, %v3644
    %v3646 = vpop.f32.mrb[0].mxu0
    %3647 = vdwg.mxu0
    %v3649 = vsel %vm96, %v3645, 0
    %3651 = vmatprep.subr.mxu0 0.0
    %3652 = vmatpush1.msra.mxu0 %v1717
    %3653 = vmatprep.subr.mxu0 0.0
    %3654 = vmatpush1.msra.mxu0 %v1718
    %3655 = vmatprep.subr.mxu0 0.0
    %3656 = vmatpush1.msra.mxu0 %v1719
    %3657 = vmatprep.subr.mxu0 0.0
    %3658 = vmatpush1.msra.mxu0 %v1720
    %3659 = vmatprep.subr.mxu0 0.0
    %3660 = vmatpush1.msra.mxu0 0.0
    %3661 = vmatprep.subr.mxu0 0.0
    %3662 = vmatpush1.msra.mxu0 0.0
    %3663 = vmatprep.subr.mxu0 0.0
    %3664 = vmatpush1.msra.mxu0 0.0
    %3665 = vmatprep.subr.mxu0 0.0
    %3666 = vmatpush1.msra.mxu0 0.0
    %3667 = vmatprep.subr.mxu0 0.0
    %3668 = vmatpush1.msra.mxu0 0.0
    %3669 = vmatprep.subr.mxu0 0.0
    %3670 = vmatpush1.msra.mxu0 0.0
    %3671 = vmatprep.subr.mxu0 0.0
    %3672 = vmatpush1.msra.mxu0 0.0
    %3673 = vmatprep.subr.mxu0 0.0
    %3674 = vmatpush1.msra.mxu0 0.0
    %3675 = vmatprep.subr.mxu0 0.0
    %3676 = vmatpush1.msra.mxu0 0.0
    %3677 = vmatprep.subr.mxu0 0.0
    %3678 = vmatpush1.msra.mxu0 0.0
    %3679 = vmatprep.subr.mxu0 0.0
    %3680 = vmatpush1.msra.mxu0 0.0
    %3681 = vmatprep.subr.mxu0 0.0
    %3682 = vmatpush1.msra.mxu0 0.0
    %3683 = vmatprep.subr.mxu0 0.0
    %3684 = vmatpush1.msra.mxu0 0.0
    %3685 = vmatprep.subr.mxu0 0.0
    %3686 = vmatpush1.msra.mxu0 0.0
    %3687 = vmatprep.subr.mxu0 0.0
    %3688 = vmatpush1.msra.mxu0 0.0
    %3689 = vmatprep.subr.mxu0 0.0
    %3690 = vmatpush1.msra.mxu0 0.0
    %3691 = vmatprep.subr.mxu0 0.0
    %3692 = vmatpush1.msra.mxu0 0.0
    %3693 = vmatprep.subr.mxu0 0.0
    %3694 = vmatpush1.msra.mxu0 0.0
    %3695 = vmatprep.subr.mxu0 0.0
    %3696 = vmatpush1.msra.mxu0 0.0
    %3697 = vmatprep.subr.mxu0 0.0
    %3698 = vmatpush1.msra.mxu0 0.0
    %3699 = vmatprep.subr.mxu0 0.0
    %3700 = vmatpush1.msra.mxu0 0.0
    %3701 = vmatprep.subr.mxu0 0.0
    %3702 = vmatpush1.msra.mxu0 0.0
    %3703 = vmatprep.subr.mxu0 0.0
    %3704 = vmatpush1.msra.mxu0 0.0
    %3705 = vmatprep.subr.mxu0 0.0
    %3706 = vmatpush1.msra.mxu0 0.0
    %3707 = vmatprep.subr.mxu0 0.0
    %3708 = vmatpush1.msra.mxu0 0.0
    %3709 = vmatprep.subr.mxu0 0.0
    %3710 = vmatpush1.msra.mxu0 0.0
    %3711 = vmatprep.subr.mxu0 0.0
    %3712 = vmatpush1.msra.mxu0 0.0
    %3713 = vmatprep.subr.mxu0 0.0
    %3714 = vmatpush1.msra.mxu0 0.0
    %3715 = vmatprep.mubr.f32.mxu0 0.0
    %3716 = vmatmul.mubr.f32.gmra.mrb[0].mxu0 %v3649
    %v3717 = vpop.f32.mrb[0].mxu0
    %v3718 = vadd.f32 0.0, %v3717
    %v3719 = vpop.f32.mrb[0].mxu0
    %3720 = vdwg.mxu0
    %v3721 = vadd.f32 %v3480, %v3718
    %3722 = vrot.lane.b32.xlu0 %v178, 64
    %v3723 = vpop.permute.xlu0 %3722
    %3724 = vrot.lane.b32.xlu0 %v255, 64
    %v3725 = vpop.permute.xlu0 %3724
    %v3726 = vsel %vm96, %v3723, 0
    %v3728 = vsel %vm96, %v3725, 0
    %3730 = vmatprep.subr.mxu0 0.0
    %3731 = vmatpush1.xpose.msra.mxu0 %v3728
    %3732 = vmatprep.subr.mxu0 0.0
    %3733 = vmatpush1.xpose.msra.mxu0 0.0
    %3734 = vmatprep.subr.mxu0 0.0
    %3735 = vmatpush1.xpose.msra.mxu0 0.0
    %3736 = vmatprep.subr.mxu0 0.0
    %3737 = vmatpush1.xpose.msra.mxu0 0.0
    %3738 = vmatprep.subr.mxu0 0.0
    %3739 = vmatpush1.xpose.msra.mxu0 0.0
    %3740 = vmatprep.subr.mxu0 0.0
    %3741 = vmatpush1.xpose.msra.mxu0 0.0
    %3742 = vmatprep.subr.mxu0 0.0
    %3743 = vmatpush1.xpose.msra.mxu0 0.0
    %3744 = vmatprep.subr.mxu0 0.0
    %3745 = vmatpush1.xpose.msra.mxu0 0.0
    %3746 = vmatprep.subr.mxu0 0.0
    %3747 = vmatpush1.xpose.msra.mxu0 0.0
    %3748 = vmatprep.subr.mxu0 0.0
    %3749 = vmatpush1.xpose.msra.mxu0 0.0
    %3750 = vmatprep.subr.mxu0 0.0
    %3751 = vmatpush1.xpose.msra.mxu0 0.0
    %3752 = vmatprep.subr.mxu0 0.0
    %3753 = vmatpush1.xpose.msra.mxu0 0.0
    %3754 = vmatprep.subr.mxu0 0.0
    %3755 = vmatpush1.xpose.msra.mxu0 0.0
    %3756 = vmatprep.subr.mxu0 0.0
    %3757 = vmatpush1.xpose.msra.mxu0 0.0
    %3758 = vmatprep.subr.mxu0 0.0
    %3759 = vmatpush1.xpose.msra.mxu0 0.0
    %3760 = vmatprep.subr.mxu0 0.0
    %3761 = vmatpush1.xpose.msra.mxu0 0.0
    %3762 = vmatprep.subr.mxu0 0.0
    %3763 = vmatpush1.xpose.msra.mxu0 0.0
    %3764 = vmatprep.subr.mxu0 0.0
    %3765 = vmatpush1.xpose.msra.mxu0 0.0
    %3766 = vmatprep.subr.mxu0 0.0
    %3767 = vmatpush1.xpose.msra.mxu0 0.0
    %3768 = vmatprep.subr.mxu0 0.0
    %3769 = vmatpush1.xpose.msra.mxu0 0.0
    %3770 = vmatprep.subr.mxu0 0.0
    %3771 = vmatpush1.xpose.msra.mxu0 0.0
    %3772 = vmatprep.subr.mxu0 0.0
    %3773 = vmatpush1.xpose.msra.mxu0 0.0
    %3774 = vmatprep.subr.mxu0 0.0
    %3775 = vmatpush1.xpose.msra.mxu0 0.0
    %3776 = vmatprep.subr.mxu0 0.0
    %3777 = vmatpush1.xpose.msra.mxu0 0.0
    %3778 = vmatprep.subr.mxu0 0.0
    %3779 = vmatpush1.xpose.msra.mxu0 0.0
    %3780 = vmatprep.subr.mxu0 0.0
    %3781 = vmatpush1.xpose.msra.mxu0 0.0
    %3782 = vmatprep.subr.mxu0 0.0
    %3783 = vmatpush1.xpose.msra.mxu0 0.0
    %3784 = vmatprep.subr.mxu0 0.0
    %3785 = vmatpush1.xpose.msra.mxu0 0.0
    %3786 = vmatprep.subr.mxu0 0.0
    %3787 = vmatpush1.xpose.msra.mxu0 0.0
    %3788 = vmatprep.subr.mxu0 0.0
    %3789 = vmatpush1.xpose.msra.mxu0 0.0
    %3790 = vmatprep.subr.mxu0 0.0
    %3791 = vmatpush1.xpose.msra.mxu0 0.0
    %3792 = vmatprep.subr.mxu0 0.0
    %3793 = vmatpush1.xpose.msra.mxu0 0.0
    %3794 = vmatprep.mubr.f32.mxu0 0.0
    %3795 = vmatmul.mubr.f32.gmra.mrb[0].mxu0 %v3726
    %v3796 = vpop.f32.mrb[0].mxu0
    %v3797 = vadd.f32 0.0, %v3796
    %v3798 = vpop.f32.mrb[0].mxu0
    %3799 = vdwg.mxu0
    %v3800 = vmul.f32 %v3797, 0.17677669
    %v3801 = vsel %vm412, %v3800, -inf
    %3802 = vmax.xlane.f32.xlu0 %v3801
    %v3803 = vpop.xlane.xlu0 %3802
    %v3804 = vsub.f32 %v3800, %v3803
    %v3805 = vmul.f32 %v3804, 1.442695
    %v3806 = vpow.pop %v3805
    %v3807 = vsel %vm412, %v3806, 0.0
    %3808 = vadd.xlane.f32.xlu0 %v3807
    %v3809 = vpop.xlane.xlu0 %3808
    %v3810 = vrcp.pop %v3809
    %v3811 = vmul.f32 %v3806, %v3810
    %3812 = vrot.lane.b32.xlu0 %v332, 64
    %v3813 = vpop.permute.xlu0 %3812
    %v3816 = vsel %vm412, %v3811, 0
    %3818 = vmatprep.subr.mxu0 0.0
    %3819 = vmatpush1.msra.mxu0 %v3813
    %3820 = vmatprep.subr.mxu0 0.0
    %3821 = vmatpush1.msra.mxu0 0.0
    %3822 = vmatprep.subr.mxu0 0.0
    %3823 = vmatpush1.msra.mxu0 0.0
    %3824 = vmatprep.subr.mxu0 0.0
    %3825 = vmatpush1.msra.mxu0 0.0
    %3826 = vmatprep.subr.mxu0 0.0
    %3827 = vmatpush1.msra.mxu0 0.0
    %3828 = vmatprep.subr.mxu0 0.0
    %3829 = vmatpush1.msra.mxu0 0.0
    %3830 = vmatprep.subr.mxu0 0.0
    %3831 = vmatpush1.msra.mxu0 0.0
    %3832 = vmatprep.subr.mxu0 0.0
    %3833 = vmatpush1.msra.mxu0 0.0
    %3834 = vmatprep.subr.mxu0 0.0
    %3835 = vmatpush1.msra.mxu0 0.0
    %3836 = vmatprep.subr.mxu0 0.0
    %3837 = vmatpush1.msra.mxu0 0.0
    %3838 = vmatprep.subr.mxu0 0.0
    %3839 = vmatpush1.msra.mxu0 0.0
    %3840 = vmatprep.subr.mxu0 0.0
    %3841 = vmatpush1.msra.mxu0 0.0
    %3842 = vmatprep.subr.mxu0 0.0
    %3843 = vmatpush1.msra.mxu0 0.0
    %3844 = vmatprep.subr.mxu0 0.0
    %3845 = vmatpush1.msra.mxu0 0.0
    %3846 = vmatprep.subr.mxu0 0.0
    %3847 = vmatpush1.msra.mxu0 0.0
    %3848 = vmatprep.subr.mxu0 0.0
    %3849 = vmatpush1.msra.mxu0 0.0
    %3850 = vmatprep.subr.mxu0 0.0
    %3851 = vmatpush1.msra.mxu0 0.0
    %3852 = vmatprep.subr.mxu0 0.0
    %3853 = vmatpush1.msra.mxu0 0.0
    %3854 = vmatprep.subr.mxu0 0.0
    %3855 = vmatpush1.msra.mxu0 0.0
    %3856 = vmatprep.subr.mxu0 0.0
    %3857 = vmatpush1.msra.mxu0 0.0
    %3858 = vmatprep.subr.mxu0 0.0
    %3859 = vmatpush1.msra.mxu0 0.0
    %3860 = vmatprep.subr.mxu0 0.0
    %3861 = vmatpush1.msra.mxu0 0.0
    %3862 = vmatprep.subr.mxu0 0.0
    %3863 = vmatpush1.msra.mxu0 0.0
    %3864 = vmatprep.subr.mxu0 0.0
    %3865 = vmatpush1.msra.mxu0 0.0
    %3866 = vmatprep.subr.mxu0 0.0
    %3867 = vmatpush1.msra.mxu0 0.0
    %3868 = vmatprep.subr.mxu0 0.0
    %3869 = vmatpush1.msra.mxu0 0.0
    %3870 = vmatprep.subr.mxu0 0.0
    %3871 = vmatpush1.msra.mxu0 0.0
    %3872 = vmatprep.subr.mxu0 0.0
    %3873 = vmatpush1.msra.mxu0 0.0
    %3874 = vmatprep.subr.mxu0 0.0
    %3875 = vmatpush1.msra.mxu0 0.0
    %3876 = vmatprep.subr.mxu0 0.0
    %3877 = vmatpush1.msra.mxu0 0.0
    %3878 = vmatprep.subr.mxu0 0.0
    %3879 = vmatpush1.msra.mxu0 0.0
    %3880 = vmatprep.subr.mxu0 0.0
    %3881 = vmatpush1.msra.mxu0 0.0
    %3882 = vmatprep.mubr.f32.mxu0 0.0
    %3883 = vmatmul.mubr.f32.gmra.mrb[0].mxu0 %v3816
    %v3884 = vpop.f32.mrb[0].mxu0
    %v3885 = vadd.f32 0.0, %v3884
    %v3886 = vpop.f32.mrb[0].mxu0
    %3887 = vdwg.mxu0
    %v3889 = vsel %vm96, %v3885, 0
    %3891 = vmatprep.subr.mxu0 0.0
    %3892 = vmatpush1.msra.mxu0 %v1962
    %3893 = vmatprep.subr.mxu0 0.0
    %3894 = vmatpush1.msra.mxu0 %v1963
    %3895 = vmatprep.subr.mxu0 0.0
    %3896 = vmatpush1.msra.mxu0 %v1964
    %3897 = vmatprep.subr.mxu0 0.0
    %3898 = vmatpush1.msra.mxu0 %v1965
    %3899 = vmatprep.subr.mxu0 0.0
    %3900 = vmatpush1.msra.mxu0 0.0
    %3901 = vmatprep.subr.mxu0 0.0
    %3902 = vmatpush1.msra.mxu0 0.0
    %3903 = vmatprep.subr.mxu0 0.0
    %3904 = vmatpush1.msra.mxu0 0.0
    %3905 = vmatprep.subr.mxu0 0.0
    %3906 = vmatpush1.msra.mxu0 0.0
    %3907 = vmatprep.subr.mxu0 0.0
    %3908 = vmatpush1.msra.mxu0 0.0
    %3909 = vmatprep.subr.mxu0 0.0
    %3910 = vmatpush1.msra.mxu0 0.0
    %3911 = vmatprep.subr.mxu0 0.0
    %3912 = vmatpush1.msra.mxu0 0.0
    %3913 = vmatprep.subr.mxu0 0.0
    %3914 = vmatpush1.msra.mxu0 0.0
    %3915 = vmatprep.subr.mxu0 0.0
    %3916 = vmatpush1.msra.mxu0 0.0
    %3917 = vmatprep.subr.mxu0 0.0
    %3918 = vmatpush1.msra.mxu0 0.0
    %3919 = vmatprep.subr.mxu0 0.0
    %3920 = vmatpush1.msra.mxu0 0.0
    %3921 = vmatprep.subr.mxu0 0.0
    %3922 = vmatpush1.msra.mxu0 0.0
    %3923 = vmatprep.subr.mxu0 0.0
    %3924 = vmatpush1.msra.mxu0 0.0
    %3925 = vmatprep.subr.mxu0 0.0
    %3926 = vmatpush1.msra.mxu0 0.0
    %3927 = vmatprep.subr.mxu0 0.0
    %3928 = vmatpush1.msra.mxu0 0.0
    %3929 = vmatprep.subr.mxu0 0.0
    %3930 = vmatpush1.msra.mxu0 0.0
    %3931 = vmatprep.subr.mxu0 0.0
    %3932 = vmatpush1.msra.mxu0 0.0
    %3933 = vmatprep.subr.mxu0 0.0
    %3934 = vmatpush1.msra.mxu0 0.0
    %3935 = vmatprep.subr.mxu0 0.0
    %3936 = vmatpush1.msra.mxu0 0.0
    %3937 = vmatprep.subr.mxu0 0.0
    %3938 = vmatpush1.msra.mxu0 0.0
    %3939 = vmatprep.subr.mxu0 0.0
    %3940 = vmatpush1.msra.mxu0 0.0
    %3941 = vmatprep.subr.mxu0 0.0
    %3942 = vmatpush1.msra.mxu0 0.0
    %3943 = vmatprep.subr.mxu0 0.0
    %3944 = vmatpush1.msra.mxu0 0.0
    %3945 = vmatprep.subr.mxu0 0.0
    %3946 = vmatpush1.msra.mxu0 0.0
    %3947 = vmatprep.subr.mxu0 0.0
    %3948 = vmatpush1.msra.mxu0 0.0
    %3949 = vmatprep.subr.mxu0 0.0
    %3950 = vmatpush1.msra.mxu0 0.0
    %3951 = vmatprep.subr.mxu0 0.0
    %3952 = vmatpush1.msra.mxu0 0.0
    %3953 = vmatprep.subr.mxu0 0.0
    %3954 = vmatpush1.msra.mxu0 0.0
    %3955 = vmatprep.mubr.f32.mxu0 0.0
    %3956 = vmatmul.mubr.f32.gmra.mrb[0].mxu0 %v3889
    %v3957 = vpop.f32.mrb[0].mxu0
    %v3958 = vadd.f32 0.0, %v3957
    %v3959 = vpop.f32.mrb[0].mxu0
    %3960 = vdwg.mxu0
    %v3961 = vadd.f32 %v3721, %v3958
    %3962 = vrot.lane.b32.xlu0 %v178, 32
    %v3963 = vpop.permute.xlu0 %3962
    %3964 = vrot.lane.b32.xlu0 %v255, 32
    %v3965 = vpop.permute.xlu0 %3964
    %v3966 = vsel %vm96, %v3963, 0
    %v3968 = vsel %vm96, %v3965, 0
    %3970 = vmatprep.subr.mxu0 0.0
    %3971 = vmatpush1.xpose.msra.mxu0 %v3968
    %3972 = vmatprep.subr.mxu0 0.0
    %3973 = vmatpush1.xpose.msra.mxu0 0.0
    %3974 = vmatprep.subr.mxu0 0.0
    %3975 = vmatpush1.xpose.msra.mxu0 0.0
    %3976 = vmatprep.subr.mxu0 0.0
    %3977 = vmatpush1.xpose.msra.mxu0 0.0
    %3978 = vmatprep.subr.mxu0 0.0
    %3979 = vmatpush1.xpose.msra.mxu0 0.0
    %3980 = vmatprep.subr.mxu0 0.0
    %3981 = vmatpush1.xpose.msra.mxu0 0.0
    %3982 = vmatprep.subr.mxu0 0.0
    %3983 = vmatpush1.xpose.msra.mxu0 0.0
    %3984 = vmatprep.subr.mxu0 0.0
    %3985 = vmatpush1.xpose.msra.mxu0 0.0
    %3986 = vmatprep.subr.mxu0 0.0
    %3987 = vmatpush1.xpose.msra.mxu0 0.0
    %3988 = vmatprep.subr.mxu0 0.0
    %3989 = vmatpush1.xpose.msra.mxu0 0.0
    %3990 = vmatprep.subr.mxu0 0.0
    %3991 = vmatpush1.xpose.msra.mxu0 0.0
    %3992 = vmatprep.subr.mxu0 0.0
    %3993 = vmatpush1.xpose.msra.mxu0 0.0
    %3994 = vmatprep.subr.mxu0 0.0
    %3995 = vmatpush1.xpose.msra.mxu0 0.0
    %3996 = vmatprep.subr.mxu0 0.0
    %3997 = vmatpush1.xpose.msra.mxu0 0.0
    %3998 = vmatprep.subr.mxu0 0.0
    %3999 = vmatpush1.xpose.msra.mxu0 0.0
    %4000 = vmatprep.subr.mxu0 0.0
    %4001 = vmatpush1.xpose.msra.mxu0 0.0
    %4002 = vmatprep.subr.mxu0 0.0
    %4003 = vmatpush1.xpose.msra.mxu0 0.0
    %4004 = vmatprep.subr.mxu0 0.0
    %4005 = vmatpush1.xpose.msra.mxu0 0.0
    %4006 = vmatprep.subr.mxu0 0.0
    %4007 = vmatpush1.xpose.msra.mxu0 0.0
    %4008 = vmatprep.subr.mxu0 0.0
    %4009 = vmatpush1.xpose.msra.mxu0 0.0
    %4010 = vmatprep.subr.mxu0 0.0
    %4011 = vmatpush1.xpose.msra.mxu0 0.0
    %4012 = vmatprep.subr.mxu0 0.0
    %4013 = vmatpush1.xpose.msra.mxu0 0.0
    %4014 = vmatprep.subr.mxu0 0.0
    %4015 = vmatpush1.xpose.msra.mxu0 0.0
    %4016 = vmatprep.subr.mxu0 0.0
    %4017 = vmatpush1.xpose.msra.mxu0 0.0
    %4018 = vmatprep.subr.mxu0 0.0
    %4019 = vmatpush1.xpose.msra.mxu0 0.0
    %4020 = vmatprep.subr.mxu0 0.0
    %4021 = vmatpush1.xpose.msra.mxu0 0.0
    %4022 = vmatprep.subr.mxu0 0.0
    %4023 = vmatpush1.xpose.msra.mxu0 0.0
    %4024 = vmatprep.subr.mxu0 0.0
    %4025 = vmatpush1.xpose.msra.mxu0 0.0
    %4026 = vmatprep.subr.mxu0 0.0
    %4027 = vmatpush1.xpose.msra.mxu0 0.0
    %4028 = vmatprep.subr.mxu0 0.0
    %4029 = vmatpush1.xpose.msra.mxu0 0.0
    %4030 = vmatprep.subr.mxu0 0.0
    %4031 = vmatpush1.xpose.msra.mxu0 0.0
    %4032 = vmatprep.subr.mxu0 0.0
    %4033 = vmatpush1.xpose.msra.mxu0 0.0
    %4034 = vmatprep.mubr.f32.mxu0 0.0
    %4035 = vmatmul.mubr.f32.gmra.mrb[0].mxu0 %v3966
    %v4036 = vpop.f32.mrb[0].mxu0
    %v4037 = vadd.f32 0.0, %v4036
    %v4038 = vpop.f32.mrb[0].mxu0
    %4039 = vdwg.mxu0
    %v4040 = vmul.f32 %v4037, 0.17677669
    %v4041 = vsel %vm412, %v4040, -inf
    %4042 = vmax.xlane.f32.xlu0 %v4041
    %v4043 = vpop.xlane.xlu0 %4042
    %v4044 = vsub.f32 %v4040, %v4043
    %v4045 = vmul.f32 %v4044, 1.442695
    %v4046 = vpow.pop %v4045
    %v4047 = vsel %vm412, %v4046, 0.0
    %4048 = vadd.xlane.f32.xlu0 %v4047
    %v4049 = vpop.xlane.xlu0 %4048
    %v4050 = vrcp.pop %v4049
    %v4051 = vmul.f32 %v4046, %v4050
    %4052 = vrot.lane.b32.xlu0 %v332, 32
    %v4053 = vpop.permute.xlu0 %4052
    %v4056 = vsel %vm412, %v4051, 0
    %4058 = vmatprep.subr.mxu0 0.0
    %4059 = vmatpush1.msra.mxu0 %v4053
    %4060 = vmatprep.subr.mxu0 0.0
    %4061 = vmatpush1.msra.mxu0 0.0
    %4062 = vmatprep.subr.mxu0 0.0
    %4063 = vmatpush1.msra.mxu0 0.0
    %4064 = vmatprep.subr.mxu0 0.0
    %4065 = vmatpush1.msra.mxu0 0.0
    %4066 = vmatprep.subr.mxu0 0.0
    %4067 = vmatpush1.msra.mxu0 0.0
    %4068 = vmatprep.subr.mxu0 0.0
    %4069 = vmatpush1.msra.mxu0 0.0
    %4070 = vmatprep.subr.mxu0 0.0
    %4071 = vmatpush1.msra.mxu0 0.0
    %4072 = vmatprep.subr.mxu0 0.0
    %4073 = vmatpush1.msra.mxu0 0.0
    %4074 = vmatprep.subr.mxu0 0.0
    %4075 = vmatpush1.msra.mxu0 0.0
    %4076 = vmatprep.subr.mxu0 0.0
    %4077 = vmatpush1.msra.mxu0 0.0
    %4078 = vmatprep.subr.mxu0 0.0
    %4079 = vmatpush1.msra.mxu0 0.0
    %4080 = vmatprep.subr.mxu0 0.0
    %4081 = vmatpush1.msra.mxu0 0.0
    %4082 = vmatprep.subr.mxu0 0.0
    %4083 = vmatpush1.msra.mxu0 0.0
    %4084 = vmatprep.subr.mxu0 0.0
    %4085 = vmatpush1.msra.mxu0 0.0
    %4086 = vmatprep.subr.mxu0 0.0
    %4087 = vmatpush1.msra.mxu0 0.0
    %4088 = vmatprep.subr.mxu0 0.0
    %4089 = vmatpush1.msra.mxu0 0.0
    %4090 = vmatprep.subr.mxu0 0.0
    %4091 = vmatpush1.msra.mxu0 0.0
    %4092 = vmatprep.subr.mxu0 0.0
    %4093 = vmatpush1.msra.mxu0 0.0
    %4094 = vmatprep.subr.mxu0 0.0
    %4095 = vmatpush1.msra.mxu0 0.0
    %4096 = vmatprep.subr.mxu0 0.0
    %4097 = vmatpush1.msra.mxu0 0.0
    %4098 = vmatprep.subr.mxu0 0.0
    %4099 = vmatpush1.msra.mxu0 0.0
    %4100 = vmatprep.subr.mxu0 0.0
    %4101 = vmatpush1.msra.mxu0 0.0
    %4102 = vmatprep.subr.mxu0 0.0
    %4103 = vmatpush1.msra.mxu0 0.0
    %4104 = vmatprep.subr.mxu0 0.0
    %4105 = vmatpush1.msra.mxu0 0.0
    %4106 = vmatprep.subr.mxu0 0.0
    %4107 = vmatpush1.msra.mxu0 0.0
    %4108 = vmatprep.subr.mxu0 0.0
    %4109 = vmatpush1.msra.mxu0 0.0
    %4110 = vmatprep.subr.mxu0 0.0
    %4111 = vmatpush1.msra.mxu0 0.0
    %4112 = vmatprep.subr.mxu0 0.0
    %4113 = vmatpush1.msra.mxu0 0.0
    %4114 = vmatprep.subr.mxu0 0.0
    %4115 = vmatpush1.msra.mxu0 0.0
    %4116 = vmatprep.subr.mxu0 0.0
    %4117 = vmatpush1.msra.mxu0 0.0
    %4118 = vmatprep.subr.mxu0 0.0
    %4119 = vmatpush1.msra.mxu0 0.0
    %4120 = vmatprep.subr.mxu0 0.0
    %4121 = vmatpush1.msra.mxu0 0.0
    %4122 = vmatprep.mubr.f32.mxu0 0.0
    %4123 = vmatmul.mubr.f32.gmra.mrb[0].mxu0 %v4056
    %v4124 = vpop.f32.mrb[0].mxu0
    %v4125 = vadd.f32 0.0, %v4124
    %v4126 = vpop.f32.mrb[0].mxu0
    %4127 = vdwg.mxu0
    %v4129 = vsel %vm96, %v4125, 0
    %4131 = vmatprep.subr.mxu0 0.0
    %4132 = vmatpush1.msra.mxu0 %v2207
    %4133 = vmatprep.subr.mxu0 0.0
    %4134 = vmatpush1.msra.mxu0 %v2208
    %4135 = vmatprep.subr.mxu0 0.0
    %4136 = vmatpush1.msra.mxu0 %v2209
    %4137 = vmatprep.subr.mxu0 0.0
    %4138 = vmatpush1.msra.mxu0 %v2210
    %4139 = vmatprep.subr.mxu0 0.0
    %4140 = vmatpush1.msra.mxu0 0.0
    %4141 = vmatprep.subr.mxu0 0.0
    %4142 = vmatpush1.msra.mxu0 0.0
    %4143 = vmatprep.subr.mxu0 0.0
    %4144 = vmatpush1.msra.mxu0 0.0
    %4145 = vmatprep.subr.mxu0 0.0
    %4146 = vmatpush1.msra.mxu0 0.0
    %4147 = vmatprep.subr.mxu0 0.0
    %4148 = vmatpush1.msra.mxu0 0.0
    %4149 = vmatprep.subr.mxu0 0.0
    %4150 = vmatpush1.msra.mxu0 0.0
    %4151 = vmatprep.subr.mxu0 0.0
    %4152 = vmatpush1.msra.mxu0 0.0
    %4153 = vmatprep.subr.mxu0 0.0
    %4154 = vmatpush1.msra.mxu0 0.0
    %4155 = vmatprep.subr.mxu0 0.0
    %4156 = vmatpush1.msra.mxu0 0.0
    %4157 = vmatprep.subr.mxu0 0.0
    %4158 = vmatpush1.msra.mxu0 0.0
    %4159 = vmatprep.subr.mxu0 0.0
    %4160 = vmatpush1.msra.mxu0 0.0
    %4161 = vmatprep.subr.mxu0 0.0
    %4162 = vmatpush1.msra.mxu0 0.0
    %4163 = vmatprep.subr.mxu0 0.0
    %4164 = vmatpush1.msra.mxu0 0.0
    %4165 = vmatprep.subr.mxu0 0.0
    %4166 = vmatpush1.msra.mxu0 0.0
    %4167 = vmatprep.subr.mxu0 0.0
    %4168 = vmatpush1.msra.mxu0 0.0
    %4169 = vmatprep.subr.mxu0 0.0
    %4170 = vmatpush1.msra.mxu0 0.0
    %4171 = vmatprep.subr.mxu0 0.0
    %4172 = vmatpush1.msra.mxu0 0.0
    %4173 = vmatprep.subr.mxu0 0.0
    %4174 = vmatpush1.msra.mxu0 0.0
    %4175 = vmatprep.subr.mxu0 0.0
    %4176 = vmatpush1.msra.mxu0 0.0
    %4177 = vmatprep.subr.mxu0 0.0
    %4178 = vmatpush1.msra.mxu0 0.0
    %4179 = vmatprep.subr.mxu0 0.0
    %4180 = vmatpush1.msra.mxu0 0.0
    %4181 = vmatprep.subr.mxu0 0.0
    %4182 = vmatpush1.msra.mxu0 0.0
    %4183 = vmatprep.subr.mxu0 0.0
    %4184 = vmatpush1.msra.mxu0 0.0
    %4185 = vmatprep.subr.mxu0 0.0
    %4186 = vmatpush1.msra.mxu0 0.0
    %4187 = vmatprep.subr.mxu0 0.0
    %4188 = vmatpush1.msra.mxu0 0.0
    %4189 = vmatprep.subr.mxu0 0.0
    %4190 = vmatpush1.msra.mxu0 0.0
    %4191 = vmatprep.subr.mxu0 0.0
    %4192 = vmatpush1.msra.mxu0 0.0
    %4193 = vmatprep.subr.mxu0 0.0
    %4194 = vmatpush1.msra.mxu0 0.0
    %4195 = vmatprep.mubr.f32.mxu0 0.0
    %4196 = vmatmul.mubr.f32.gmra.mrb[0].mxu0 %v4129
    %v4197 = vpop.f32.mrb[0].mxu0
    %v4198 = vadd.f32 0.0, %v4197
    %v4199 = vpop.f32.mrb[0].mxu0
    %4200 = vdwg.mxu0
    %v4201 = vadd.f32 %v3961, %v4198
    %v4202 = vadd.f32 %v4201, %v2289
    %v4203 = vadd.f32 %v70, %v2291
    %v4204 = vadd.f32 %v71, %v4202
    %v4205 = vld [vmem:[%s4] sm:$0x1]
    %v4206 = vld [vmem:[%s5] sm:$0x1]
    %v4207 = vsel %vm96, %v4203, 0.0
    %4208 = vadd.xlane.f32.xlu0 %v4207
    %v4209 = vpop.xlane.xlu0 %4208
    %v4210 = vsel %vm96, %v4204, 0.0
    %4211 = vadd.xlane.f32.xlu0 %v4210
    %v4212 = vpop.xlane.xlu0 %4211
    %v4213 = vrcp.pop 32.0
    %v4214 = vmul.f32 %v4209, %v4213
    %v4215 = vmul.f32 %v4212, %v4213
    %v4216 = vsub.f32 %v4203, %v4214
    %v4217 = vsub.f32 %v4204, %v4215
    %v4218 = vmul.f32 %v4216, %v4216
    %v4219 = vmul.f32 %v4217, %v4217
    %v4220 = vsel %vm96, %v4218, 0.0
    %4221 = vadd.xlane.f32.xlu0 %v4220
    %v4222 = vpop.xlane.xlu0 %4221
    %v4223 = vsel %vm96, %v4219, 0.0
    %4224 = vadd.xlane.f32.xlu0 %v4223
    %v4225 = vpop.xlane.xlu0 %4224
    %v4226 = vmul.f32 %v4222, %v4213
    %v4227 = vmul.f32 %v4225, %v4213
    %v4228 = vadd.f32 %v4226, 1e-05
    %v4229 = vadd.f32 %v4227, 1e-05
    %v4230 = vrsqrt.pop %v4228
    %v4231 = vrsqrt.pop %v4229
    %v4232 = vmul.f32 %v4216, %v4230
    %v4233 = vmul.f32 %v4217, %v4231
    %v4235 = vlaneseq
    %v4236 = vshrl.u32 %v4235, 7
    %v4237 = vsub.s32 0, %v4236
    %v4238 = vrot.slane %v4205, %v4237
    %v4240 = vmul.f32 %v4232, %v4238
    %v4241 = vmul.f32 %v4233, %v4238
    %v4243 = vlaneseq
    %v4244 = vshrl.u32 %v4243, 7
    %v4245 = vsub.s32 0, %v4244
    %v4246 = vrot.slane %v4206, %v4245
    %v4248 = vadd.f32 %v4240, %v4246
    %v4249 = vadd.f32 %v4241, %v4246
    %v4250 = vld [vmem:[%s6] sm:$0xff]
    %v4251 = vld [vmem:[%s6 + $0x8] sm:$0xff]
    %v4252 = vld [vmem:[%s6 + $0x10] sm:$0xff]
    %v4253 = vld [vmem:[%s6 + $0x18] sm:$0xff]
    %v4254 = vld [vmem:[%s7] sm:$0x1]
    %v4256 = vlaneseq
    %v4257 = vshrl.u32 %v4256, 7
    %v4258 = vsub.s32 0, %v4257
    %v4259 = vrot.slane %v4254, %v4258
    %v4262 = vsel %vm96, %v4248, 0
    %v4265 = vsel %vm96, %v4249, 0
    %4267 = vmatprep.subr.mxu0 0.0
    %4268 = vmatpush1.msra.mxu0 %v4250
    %4269 = vmatprep.subr.mxu0 0.0
    %4270 = vmatpush1.msra.mxu0 %v4251
    %4271 = vmatprep.subr.mxu0 0.0
    %4272 = vmatpush1.msra.mxu0 %v4252
    %4273 = vmatprep.subr.mxu0 0.0
    %4274 = vmatpush1.msra.mxu0 %v4253
    %4275 = vmatprep.subr.mxu0 0.0
    %4276 = vmatpush1.msra.mxu0 0.0
    %4277 = vmatprep.subr.mxu0 0.0
    %4278 = vmatpush1.msra.mxu0 0.0
    %4279 = vmatprep.subr.mxu0 0.0
    %4280 = vmatpush1.msra.mxu0 0.0
    %4281 = vmatprep.subr.mxu0 0.0
    %4282 = vmatpush1.msra.mxu0 0.0
    %4283 = vmatprep.subr.mxu0 0.0
    %4284 = vmatpush1.msra.mxu0 0.0
    %4285 = vmatprep.subr.mxu0 0.0
    %4286 = vmatpush1.msra.mxu0 0.0
    %4287 = vmatprep.subr.mxu0 0.0
    %4288 = vmatpush1.msra.mxu0 0.0
    %4289 = vmatprep.subr.mxu0 0.0
    %4290 = vmatpush1.msra.mxu0 0.0
    %4291 = vmatprep.subr.mxu0 0.0
    %4292 = vmatpush1.msra.mxu0 0.0
    %4293 = vmatprep.subr.mxu0 0.0
    %4294 = vmatpush1.msra.mxu0 0.0
    %4295 = vmatprep.subr.mxu0 0.0
    %4296 = vmatpush1.msra.mxu0 0.0
    %4297 = vmatprep.subr.mxu0 0.0
    %4298 = vmatpush1.msra.mxu0 0.0
    %4299 = vmatprep.subr.mxu0 0.0
    %4300 = vmatpush1.msra.mxu0 0.0
    %4301 = vmatprep.subr.mxu0 0.0
    %4302 = vmatpush1.msra.mxu0 0.0
    %4303 = vmatprep.subr.mxu0 0.0
    %4304 = vmatpush1.msra.mxu0 0.0
    %4305 = vmatprep.subr.mxu0 0.0
    %4306 = vmatpush1.msra.mxu0 0.0
    %4307 = vmatprep.subr.mxu0 0.0
    %4308 = vmatpush1.msra.mxu0 0.0
    %4309 = vmatprep.subr.mxu0 0.0
    %4310 = vmatpush1.msra.mxu0 0.0
    %4311 = vmatprep.subr.mxu0 0.0
    %4312 = vmatpush1.msra.mxu0 0.0
    %4313 = vmatprep.subr.mxu0 0.0
    %4314 = vmatpush1.msra.mxu0 0.0
    %4315 = vmatprep.subr.mxu0 0.0
    %4316 = vmatpush1.msra.mxu0 0.0
    %4317 = vmatprep.subr.mxu0 0.0
    %4318 = vmatpush1.msra.mxu0 0.0
    %4319 = vmatprep.subr.mxu0 0.0
    %4320 = vmatpush1.msra.mxu0 0.0
    %4321 = vmatprep.subr.mxu0 0.0
    %4322 = vmatpush1.msra.mxu0 0.0
    %4323 = vmatprep.subr.mxu0 0.0
    %4324 = vmatpush1.msra.mxu0 0.0
    %4325 = vmatprep.subr.mxu0 0.0
    %4326 = vmatpush1.msra.mxu0 0.0
    %4327 = vmatprep.subr.mxu0 0.0
    %4328 = vmatpush1.msra.mxu0 0.0
    %4329 = vmatprep.subr.mxu0 0.0
    %4330 = vmatpush1.msra.mxu0 0.0
    %4331 = vmatprep.mubr.f32.mxu0 0.0
    %4332 = vmatmul.mubr.f32.gmra.mrb[0].mxu0 %v4262
    %v4333 = vpop.f32.mrb[0].mxu0
    %v4334 = vadd.f32 %v4259, %v4333
    %v4335 = vpop.f32.mrb[0].mxu0
    %4336 = vmatprep.mubr.f32.mxu0 0.0
    %4337 = vmatmul.mubr.f32.gmra.mrb[0].mxu0 %v4265
    %v4338 = vpop.f32.mrb[0].mxu0
    %v4339 = vadd.f32 %v4259, %v4338
    %v4340 = vpop.f32.mrb[0].mxu0
    %4341 = vdwg.mxu0
    %v4342 = vmax.f32 %v4334, 0.0
    %v4343 = vmax.f32 %v4339, 0.0
    %v4344 = vld [vmem:[%s8] sm:$0xff]
    %v4345 = vld [vmem:[%s8 + $0x8] sm:$0xff]
    %v4346 = vld [vmem:[%s8 + $0x10] sm:$0xff]
    %v4347 = vld [vmem:[%s8 + $0x18] sm:$0xff]
    %v4348 = vld [vmem:[%s8 + $0x20] sm:$0xff]
    %v4349 = vld [vmem:[%s8 + $0x28] sm:$0xff]
    %v4350 = vld [vmem:[%s8 + $0x30] sm:$0xff]
    %v4351 = vld [vmem:[%s8 + $0x38] sm:$0xff]
    %v4352 = vld [vmem:[%s8 + $0x40] sm:$0xff]
    %v4353 = vld [vmem:[%s8 + $0x48] sm:$0xff]
    %v4354 = vld [vmem:[%s8 + $0x50] sm:$0xff]
    %v4355 = vld [vmem:[%s8 + $0x58] sm:$0xff]
    %v4356 = vld [vmem:[%s8 + $0x60] sm:$0xff]
    %v4357 = vld [vmem:[%s8 + $0x68] sm:$0xff]
    %v4358 = vld [vmem:[%s8 + $0x70] sm:$0xff]
    %v4359 = vld [vmem:[%s8 + $0x78] sm:$0xff]
    %v4360 = vld [vmem:[%s9] sm:$0x1]
    %v4362 = vlaneseq
    %v4363 = vshrl.u32 %v4362, 7
    %v4364 = vsub.s32 0, %v4363
    %v4365 = vrot.slane %v4360, %v4364
    %4367 = vmatprep.subr.mxu0 0.0
    %4368 = vmatpush1.msra.mxu0 %v4344
    %4369 = vmatprep.subr.mxu0 0.0
    %4370 = vmatpush1.msra.mxu0 %v4345
    %4371 = vmatprep.subr.mxu0 0.0
    %4372 = vmatpush1.msra.mxu0 %v4346
    %4373 = vmatprep.subr.mxu0 0.0
    %4374 = vmatpush1.msra.mxu0 %v4347
    %4375 = vmatprep.subr.mxu0 0.0
    %4376 = vmatpush1.msra.mxu0 %v4348
    %4377 = vmatprep.subr.mxu0 0.0
    %4378 = vmatpush1.msra.mxu0 %v4349
    %4379 = vmatprep.subr.mxu0 0.0
    %4380 = vmatpush1.msra.mxu0 %v4350
    %4381 = vmatprep.subr.mxu0 0.0
    %4382 = vmatpush1.msra.mxu0 %v4351
    %4383 = vmatprep.subr.mxu0 0.0
    %4384 = vmatpush1.msra.mxu0 %v4352
    %4385 = vmatprep.subr.mxu0 0.0
    %4386 = vmatpush1.msra.mxu0 %v4353
    %4387 = vmatprep.subr.mxu0 0.0
    %4388 = vmatpush1.msra.mxu0 %v4354
    %4389 = vmatprep.subr.mxu0 0.0
    %4390 = vmatpush1.msra.mxu0 %v4355
    %4391 = vmatprep.subr.mxu0 0.0
    %4392 = vmatpush1.msra.mxu0 %v4356
    %4393 = vmatprep.subr.mxu0 0.0
    %4394 = vmatpush1.msra.mxu0 %v4357
    %4395 = vmatprep.subr.mxu0 0.0
    %4396 = vmatpush1.msra.mxu0 %v4358
    %4397 = vmatprep.subr.mxu0 0.0
    %4398 = vmatpush1.msra.mxu0 %v4359
    %4399 = vmatprep.subr.mxu0 0.0
    %4400 = vmatpush1.msra.mxu0 0.0
    %4401 = vmatprep.subr.mxu0 0.0
    %4402 = vmatpush1.msra.mxu0 0.0
    %4403 = vmatprep.subr.mxu0 0.0
    %4404 = vmatpush1.msra.mxu0 0.0
    %4405 = vmatprep.subr.mxu0 0.0
    %4406 = vmatpush1.msra.mxu0 0.0
    %4407 = vmatprep.subr.mxu0 0.0
    %4408 = vmatpush1.msra.mxu0 0.0
    %4409 = vmatprep.subr.mxu0 0.0
    %4410 = vmatpush1.msra.mxu0 0.0
    %4411 = vmatprep.subr.mxu0 0.0
    %4412 = vmatpush1.msra.mxu0 0.0
    %4413 = vmatprep.subr.mxu0 0.0
    %4414 = vmatpush1.msra.mxu0 0.0
    %4415 = vmatprep.subr.mxu0 0.0
    %4416 = vmatpush1.msra.mxu0 0.0
    %4417 = vmatprep.subr.mxu0 0.0
    %4418 = vmatpush1.msra.mxu0 0.0
    %4419 = vmatprep.subr.mxu0 0.0
    %4420 = vmatpush1.msra.mxu0 0.0
    %4421 = vmatprep.subr.mxu0 0.0
    %4422 = vmatpush1.msra.mxu0 0.0
    %4423 = vmatprep.subr.mxu0 0.0
    %4424 = vmatpush1.msra.mxu0 0.0
    %4425 = vmatprep.subr.mxu0 0.0
    %4426 = vmatpush1.msra.mxu0 0.0
    %4427 = vmatprep.subr.mxu0 0.0
    %4428 = vmatpush1.msra.mxu0 0.0
    %4429 = vmatprep.subr.mxu0 0.0
    %4430 = vmatpush1.msra.mxu0 0.0
    %4431 = vmatprep.mubr.f32.mxu0 0.0
    %4432 = vmatmul.mubr.f32.gmra.mrb[0].mxu0 %v4342
    %v4433 = vpop.f32.mrb[0].mxu0
    %v4434 = vadd.f32 %v4365, %v4433
    %v4435 = vpop.f32.mrb[0].mxu0
    %4436 = vmatprep.mubr.f32.mxu0 0.0
    %4437 = vmatmul.mubr.f32.gmra.mrb[0].mxu0 %v4343
    %v4438 = vpop.f32.mrb[0].mxu0
    %v4439 = vadd.f32 %v4365, %v4438
    %v4440 = vpop.f32.mrb[0].mxu0
    %4441 = vdwg.mxu0
    %v4442 = vadd.f32 %v4248, %v4434
    %v4443 = vadd.f32 %v4249, %v4439
    %v4444 = vld [vmem:[%s10] sm:$0x1]
    %v4445 = vld [vmem:[%s11] sm:$0x1]
    %v4446 = vsel %vm96, %v4442, 0.0
    %4447 = vadd.xlane.f32.xlu0 %v4446
    %v4448 = vpop.xlane.xlu0 %4447
    %v4449 = vsel %vm96, %v4443, 0.0
    %4450 = vadd.xlane.f32.xlu0 %v4449
    %v4451 = vpop.xlane.xlu0 %4450
    %v4452 = vmul.f32 %v4448, %v4213
    %v4453 = vmul.f32 %v4451, %v4213
    %v4454 = vsub.f32 %v4442, %v4452
    %v4455 = vsub.f32 %v4443, %v4453
    %v4456 = vmul.f32 %v4454, %v4454
    %v4457 = vmul.f32 %v4455, %v4455
    %v4458 = vsel %vm96, %v4456, 0.0
    %4459 = vadd.xlane.f32.xlu0 %v4458
    %v4460 = vpop.xlane.xlu0 %4459
    %v4461 = vsel %vm96, %v4457, 0.0
    %4462 = vadd.xlane.f32.xlu0 %v4461
    %v4463 = vpop.xlane.xlu0 %4462
    %v4464 = vmul.f32 %v4460, %v4213
    %v4465 = vmul.f32 %v4463, %v4213
    %v4466 = vadd.f32 %v4464, 1e-05
    %v4467 = vadd.f32 %v4465, 1e-05
    %v4468 = vrsqrt.pop %v4466
    %v4469 = vrsqrt.pop %v4467
    %v4470 = vmul.f32 %v4454, %v4468
    %v4471 = vmul.f32 %v4455, %v4469
    %v4473 = vlaneseq
    %v4474 = vshrl.u32 %v4473, 7
    %v4475 = vsub.s32 0, %v4474
    %v4476 = vrot.slane %v4444, %v4475
    %v4478 = vmul.f32 %v4470, %v4476
    %v4479 = vmul.f32 %v4471, %v4476
    %v4481 = vlaneseq
    %v4482 = vshrl.u32 %v4481, 7
    %v4483 = vsub.s32 0, %v4482
    %v4484 = vrot.slane %v4445, %v4483
    %v4486 = vadd.f32 %v4478, %v4484
    %v4487 = vadd.f32 %v4479, %v4484
    %4488 = vst.msk [vmem:[#allocation7] sm:$0xff] %vm96, %v4486
    %4489 = vst.msk [vmem:[#allocation7 + $0x8] sm:$0xff] %vm96, %v4487
    // Predicated region
    $region58: #{tpu_custom_call.1} parent=1 // pred_check
      _
    $region59: #{tpu_custom_call.1} parent=1 // pred_check_branch
      %4491 = sbr.rel (0) target = $region61
    $region60: #{tpu_custom_call.1} parent=1 // pred_region
      %s4493 = ssub.s32 256, 256
      %4494 = vsyncadd [#allocation4], %s4493
      %s4495 = sshll.u32 [#allocation7], 4
      %s4496 = int_to_ptr.vmem [resolvable:$true] %s4495
      %4501 = dma.vmem_to_hbm [thread:$0]  %s4496, 256, %s12, [#allocation4], 128, 128, 8
    $region61: #{tpu_custom_call.1} parent=1 // pred_fallthru
      _
    // Predicated region
    $region62: #{tpu_custom_call.1} parent=1 // pred_check
      _
    $region63: #{tpu_custom_call.1} parent=1 // pred_check_branch
      %4503 = sbr.rel (0) target = $region65
    $region64: #{tpu_custom_call.1} parent=1 // pred_region
      %4504 = dma.done [#allocation4], 256
    $region65: #{tpu_custom_call.1} parent=1 // pred_fallthru
      _
    %4505 = vsyncpa [#allocation3], 1
    %4506 = vsyncpa [#allocation6], 1
    %4507 = vsyncpa [#allocation4], 1

</llo_original>
